<compile_context>
chip_gen: v7x
topology: tpu7x:2x2x1
jax: 0.10.0
libtpu: 0.0.40
codegen_flags: <defaults>
</compile_context>

<pallas_src>
import functools

import jax
import jax.numpy as jnp
from jax.experimental import pallas as pl
from jax.experimental.pallas import tpu as pltpu

VMEM_SPEC = pl.BlockSpec(memory_space=pltpu.MemorySpace.VMEM)
LANES = 128


# ------------------------------ fused kernel ------------------------------- #

def _fused_kernel(a_ref, x_ref, slab_ref, out_ref, *, meta):
    f32 = jnp.float32
    bf16 = jnp.bfloat16
    hidden = meta["hidden"]
    n_nodes = meta["n_nodes"]
    n_lstm = meta["n_lstm"]
    h4 = 4 * hidden

    def blk(off, rows, cols):
        # Full-lane-width ref read (static, sublane-aligned), narrow on the value.
        return slab_ref[off:off + rows, :][:, 0:cols]

    a = a_ref[...]
    x = x_ref[...]

    # ---- GCN stack: ReLU between layers, none after the last ----
    n_gcn = len(meta["gcn"])
    for li, (w_off, in_dim, b_off) in enumerate(meta["gcn"]):
        w = blk(w_off, in_dim, hidden)
        b = blk(b_off, 1, hidden)
        xw = jnp.dot(x, w, preferred_element_type=f32)
        x = jnp.dot(a, xw, preferred_element_type=f32) + b
        if li < n_gcn - 1:
            x = jnp.maximum(x, 0.0)

    # ---- LSTM stack (rows of x are the time steps) ----
    # Gate lane layout (i, f, o, g): sigmoid on lanes [0:3H), tanh on [3H:4H).
    # Sigmoid-lane weights/bias arrive pre-scaled by 0.5, so a single tanh over
    # the whole gate vreg + one FMA gives all activations
    # (sigmoid(z) = 0.5 * (tanh(z/2) + 1)).
    lane = jax.lax.broadcasted_iota(jnp.int32, (1, h4), 1)
    tanh_lanes = lane >= 3 * hidden
    act_scale = jnp.where(tanh_lanes, 1.0, 0.5)        # hoisted [1, 4H]
    act_shift = jnp.where(tanh_lanes, 0.0, 0.5)

    # Layer 0: hoisted input projection + folded bias (one [T,H]@[H,4H] matmul).
    m0 = meta["lstm0"]
    wih0 = blk(m0["wih_off"], hidden, h4)
    whh0 = blk(m0["whh_off"], hidden, h4).astype(bf16)             # resident
    b0 = blk(m0["b_off"], 1, h4)
    gates0 = jnp.dot(x, wih0, preferred_element_type=f32) + b0     # [T, 4H]

    # Layers >= 1: combined [W_ih; W_hh] so step t needs only h_{l-1, t}.
    wcats = []
    for ml in meta["lstm_rest"]:
        wcats.append((blk(ml["wcat_off"], 2 * hidden, h4).astype(bf16),
                      blk(ml["b_off"], 1, h4)))

    hs = [jnp.zeros((1, hidden), f32) for _ in range(n_lstm)]
    cs = [jnp.zeros((1, hidden), f32) for _ in range(n_lstm)]
    outs = [[None] * n_nodes for _ in range(n_lstm)]

    def lstm_step(l, t):
        if l == 0:
            g = gates0[t:t + 1, :] + jnp.dot(
                hs[0].astype(bf16), whh0, preferred_element_type=f32)
        else:
            wcat, b = wcats[l - 1]
            lhs = jnp.concatenate([outs[l - 1][t], hs[l]], axis=1).astype(bf16)
            g = jnp.dot(lhs, wcat, preferred_element_type=f32) + b
        t_all = jnp.tanh(g)                          # single EUP push for gates
        act = t_all * act_scale + act_shift          # sigmoid / tanh lanes
        i_g = act[:, 0:hidden]
        f_g = act[:, hidden:2 * hidden]
        o_g = act[:, 2 * hidden:3 * hidden]
        g_g = act[:, 3 * hidden:4 * hidden]
        c_new = f_g * cs[l] + i_g * g_g
        h_new = o_g * jnp.tanh(c_new)                # second EUP push
        cs[l] = c_new
        hs[l] = h_new
        outs[l][t] = h_new

    # Fully unrolled wavefront: layer l runs step t = s - l, so stacked layers'
    # recurrence chains become independent work the LLO scheduler interleaves.
    for s in range(n_nodes + n_lstm - 1):
        for l in range(n_lstm):
            t = s - l
            if 0 <= t < n_nodes:
                lstm_step(l, t)

    y = jnp.concatenate(outs[n_lstm - 1], axis=0)    # [T, H], vreg-resident

    # ---- Final Linear, single HBM write ----
    lw = blk(meta["lin_w_off"], hidden, meta["out_dim"])
    lb = blk(meta["lin_b_off"], 1, meta["out_dim"])
    out_ref[...] = (jnp.dot(y, lw, preferred_element_type=f32)
                    + lb).astype(out_ref.dtype)


# ------------------------------ prepare step -------------------------------- #

def normalized_adjacency(edge_index, num_nodes):
    # Dense D^-1/2 (A + I) D^-1/2; scatter-ADD so duplicate edges sum (PyG parity).
    # TODO(synk): edge_index scatter-add has no in-kernel Pallas equivalent at
    # this size; it is precomputed once here, outside the per-call path.
    src, dst = edge_index[0], edge_index[1]
    adj = jnp.zeros((num_nodes, num_nodes), jnp.float32)
    adj = adj.at[dst, src].add(1.0)                    # message j -> i at [i, j]
    adj = adj + jnp.eye(num_nodes, dtype=jnp.float32)  # self-loops
    deg = adj.sum(axis=1)
    d_inv_sqrt = jnp.where(deg > 0, 1.0 / jnp.sqrt(deg), 0.0)
    return d_inv_sqrt[:, None] * adj * d_inv_sqrt[None, :]


def _ifgo_to_ifog(m):
    # PyTorch gate order (i, f, g, o) -> kernel order (i, f, o, g) on last axis.
    i, f, g, o = jnp.split(m, 4, axis=-1)
    return jnp.concatenate([i, f, o, g], axis=-1)


def _prescale_sigmoid(m, hidden):
    # Halve sigmoid-lane columns (i, f, o) so the kernel uses a single tanh.
    scale = jnp.concatenate([jnp.full((3 * hidden,), 0.5, jnp.float32),
                             jnp.ones((hidden,), jnp.float32)])
    return m * scale


def _pad_block(arr):
    rows, cols = arr.shape
    pr = -(-rows // 8) * 8                             # sublane-align
    out = jnp.zeros((pr, LANES), jnp.float32)
    return out.at[:rows, :cols].set(arr.astype(jnp.float32))


def prepare_gcn_lstm(params, edge_index, num_nodes):
    """One-time prep: normalized adjacency, gate reorder + sigmoid prescale,
    bias folding, and packing of every parameter into one [rows,128] f32 slab
    with static, sublane-aligned offsets."""
    hidden = params["gcn"][0][0].shape[1]
    out_dim = params["linear"][0].shape[1]
    n_lstm = len(params["lstm"])

    blocks = []
    row = 0

    def add(arr):
        nonlocal row
        blocks.append(_pad_block(arr))
        off = row
        row += blocks[-1].shape[0]
        return off

    meta = {"hidden": hidden, "n_nodes": int(num_nodes), "out_dim": out_dim,
            "n_lstm": n_lstm, "gcn": [], "lstm_rest": []}

    for (w, b) in params["gcn"]:
        w_off = add(w)
        b_off = add(b)
        meta["gcn"].append((w_off, w.shape[0], b_off))

    for li, (w_ih_t, w_hh_t, b) in enumerate(params["lstm"]):
        wih = _prescale_sigmoid(_ifgo_to_ifog(w_ih_t), hidden)
        whh = _prescale_sigmoid(_ifgo_to_ifog(w_hh_t), hidden)
        bb = _prescale_sigmoid(_ifgo_to_ifog(b), hidden)
        if li == 0:
            meta["lstm0"] = {"wih_off": add(wih), "whh_off": add(whh),
                             "b_off": add(bb)}
        else:
            wcat = jnp.concatenate([wih, whh], axis=0)          # [2H, 4H]
            meta["lstm_rest"].append({"wcat_off": add(wcat), "b_off": add(bb)})

    meta["lin_w_off"] = add(params["linear"][0])
    meta["lin_b_off"] = add(params["linear"][1])

    slab = jnp.concatenate(blocks, axis=0)
    a_hat = normalized_adjacency(edge_index, num_nodes)
    return {"slab": slab, "a_hat": a_hat, "meta": meta}


# ------------------------------ forward glue -------------------------------- #

def gcn_lstm_forward(prepared, x_list):
    # torch: x = torch.from_numpy(np.concatenate(x)).float()
    x = jnp.concatenate(x_list, axis=0).astype(jnp.float32)     # [N, input_size]
    meta = prepared["meta"]
    kernel = functools.partial(_fused_kernel, meta=meta)
    return pl.pallas_call(
        kernel,
        out_shape=jax.ShapeDtypeStruct((meta["n_nodes"], meta["out_dim"]),
                                       jnp.float32),
        in_specs=[VMEM_SPEC, VMEM_SPEC, VMEM_SPEC],
        out_specs=VMEM_SPEC,
    )(prepared["a_hat"], x, prepared["slab"])


def make_params(key, input_size, hidden_size, gcn_layers, lstm_layers, output_size):
    params = {"gcn": [], "lstm": [], "linear": None}
    k_idx = 0
    keys = jax.random.split(key, 2 * gcn_layers + 4 * lstm_layers + 2)

    def nxt():
        nonlocal k_idx
        k = keys[k_idx]
        k_idx += 1
        return k

    # GCN layers: first in->hidden, rest hidden->hidden (out_channels=None).
    in_dim = input_size
    for _ in range(gcn_layers):
        w = 0.1 * jax.random.normal(nxt(), (in_dim, hidden_size), jnp.float32)
        b = 0.1 * jax.random.normal(nxt(), (1, hidden_size), jnp.float32)
        params["gcn"].append((w, b))
        in_dim = hidden_size

    # LSTM layers (PyTorch gate order i,f,g,o): W_ih^T [Din,4H], W_hh^T [H,4H],
    # combined bias b_ih + b_hh as [1,4H].
    lstm_in = hidden_size
    for _ in range(lstm_layers):
        w_ih_t = 0.1 * jax.random.normal(nxt(), (lstm_in, 4 * hidden_size), jnp.float32)
        w_hh_t = 0.1 * jax.random.normal(nxt(), (hidden_size, 4 * hidden_size), jnp.float32)
        b_ih = 0.1 * jax.random.normal(nxt(), (1, 4 * hidden_size), jnp.float32)
        b_hh = 0.1 * jax.random.normal(nxt(), (1, 4 * hidden_size), jnp.float32)
        params["lstm"].append((w_ih_t, w_hh_t, b_ih + b_hh))
        lstm_in = hidden_size

    # Final Linear: W^T [H, out], bias [1, out].
    w_t = 0.1 * jax.random.normal(nxt(), (hidden_size, output_size), jnp.float32)
    b = 0.1 * jax.random.normal(nxt(), (1, output_size), jnp.float32)
    params["linear"] = (w_t, b)
    return params


# ---------------------------------- main ------------------------------------ #

if __name__ == "__main__":
    input_size, hidden_size = 4, 32
    gcn_layers, lstm_layers = 2, 2
    output_size = 3

    key = jax.random.PRNGKey(0)
    k_params, k_x0, k_x1 = jax.random.split(key, 3)

    params = make_params(k_params, input_size, hidden_size,
                         gcn_layers, lstm_layers, output_size)

    # x is a list of per-graph node-feature arrays (concatenated in forward).
    x_list = [jax.random.normal(k_x0, (8, input_size), jnp.float32),
              jax.random.normal(k_x1, (8, input_size), jnp.float32)]
    num_nodes = 16

    # Deterministic ring graph over the 16 nodes (both directions).
    idx = jnp.arange(num_nodes, dtype=jnp.int32)
    src = jnp.concatenate([idx, (idx + 1) % num_nodes])
    dst = jnp.concatenate([(idx + 1) % num_nodes, idx])
    edge_index = jnp.stack([src, dst], axis=0)                    # [2, 32]

    # One-time prep (adjacency, gate reorder/prescale, packed weight slab).
    prepared = prepare_gcn_lstm(params, edge_index, num_nodes)

    out = gcn_lstm_forward(prepared, x_list)
    out = jax.block_until_ready(out)
    assert out.shape == (num_nodes, output_size)
    print("KERNEL_OK")
</pallas_src>

<mosaic_0001>
module attributes {stable_mosaic.version = 11 : i64} {
  func.func @_fused_kernel(%arg0: memref<16x16xf32, #tpu.memory_space<vmem>>, %arg1: memref<16x4xf32, #tpu.memory_space<vmem>>, %arg2: memref<240x128xf32, #tpu.memory_space<vmem>>, %arg3: memref<16x3xf32, #tpu.memory_space<vmem>>) attributes {dimension_semantics = [], scalar_prefetch = 0 : i64, scratch_operands = 0 : i64, tpu.core_type = #tpu.core_type<tc>} {
    %c0 = arith.constant 0 : index
    %c0_0 = arith.constant 0 : index
    %0 = vector.load %arg0[%c0, %c0_0] : memref<16x16xf32, #tpu.memory_space<vmem>>, vector<16x16xf32>
    %c0_1 = arith.constant 0 : index
    %c0_2 = arith.constant 0 : index
    %1 = vector.load %arg1[%c0_1, %c0_2] : memref<16x4xf32, #tpu.memory_space<vmem>>, vector<16x4xf32>
    %c0_3 = arith.constant 0 : index
    %c0_4 = arith.constant 0 : index
    %2 = vector.load %arg2[%c0_3, %c0_4] : memref<240x128xf32, #tpu.memory_space<vmem>>, vector<4x128xf32>
    %3 = vector.extract_strided_slice %2 {offsets = [0, 0], sizes = [4, 32], strides = [1, 1]} : vector<4x128xf32> to vector<4x32xf32>
    %c8 = arith.constant 8 : index
    %c0_5 = arith.constant 0 : index
    %4 = vector.load %arg2[%c8, %c0_5] : memref<240x128xf32, #tpu.memory_space<vmem>>, vector<1x128xf32>
    %5 = vector.extract_strided_slice %4 {offsets = [0, 0], sizes = [1, 32], strides = [1, 1]} : vector<1x128xf32> to vector<1x32xf32>
    %cst = arith.constant dense<0.000000e+00> : vector<16x32xf32>
    %6 = tpu.matmul %1, %3, %cst {dimension_numbers = #tpu.dot_dimension_numbers<[1], [0], [0], [1], [0, 0, 1, 1], [], []>} : vector<16x4xf32>, vector<4x32xf32>, vector<16x32xf32> -> vector<16x32xf32>
    %cst_6 = arith.constant dense<0.000000e+00> : vector<16x32xf32>
    %7 = tpu.matmul %0, %6, %cst_6 {dimension_numbers = #tpu.dot_dimension_numbers<[1], [0], [0], [1], [0, 0, 1, 1], [], []>} : vector<16x16xf32>, vector<16x32xf32>, vector<16x32xf32> -> vector<16x32xf32>
    %8 = vector.broadcast %5 : vector<1x32xf32> to vector<16x32xf32>
    %9 = arith.addf %7, %8 : vector<16x32xf32>
    %cst_7 = arith.constant 0.000000e+00 : f32
    %10 = vector.broadcast %cst_7 : f32 to vector<16x32xf32>
    %11 = arith.maximumf %9, %10 : vector<16x32xf32>
    %c16 = arith.constant 16 : index
    %c0_8 = arith.constant 0 : index
    %12 = vector.load %arg2[%c16, %c0_8] : memref<240x128xf32, #tpu.memory_space<vmem>>, vector<32x128xf32>
    %13 = vector.extract_strided_slice %12 {offsets = [0, 0], sizes = [32, 32], strides = [1, 1]} : vector<32x128xf32> to vector<32x32xf32>
    %c48 = arith.constant 48 : index
    %c0_9 = arith.constant 0 : index
    %14 = vector.load %arg2[%c48, %c0_9] : memref<240x128xf32, #tpu.memory_space<vmem>>, vector<1x128xf32>
    %15 = vector.extract_strided_slice %14 {offsets = [0, 0], sizes = [1, 32], strides = [1, 1]} : vector<1x128xf32> to vector<1x32xf32>
    %cst_10 = arith.constant dense<0.000000e+00> : vector<16x32xf32>
    %16 = tpu.matmul %11, %13, %cst_10 {dimension_numbers = #tpu.dot_dimension_numbers<[1], [0], [0], [1], [0, 0, 1, 1], [], []>} : vector<16x32xf32>, vector<32x32xf32>, vector<16x32xf32> -> vector<16x32xf32>
    %cst_11 = arith.constant dense<0.000000e+00> : vector<16x32xf32>
    %17 = tpu.matmul %0, %16, %cst_11 {dimension_numbers = #tpu.dot_dimension_numbers<[1], [0], [0], [1], [0, 0, 1, 1], [], []>} : vector<16x16xf32>, vector<16x32xf32>, vector<16x32xf32> -> vector<16x32xf32>
    %18 = vector.broadcast %15 : vector<1x32xf32> to vector<16x32xf32>
    %19 = arith.addf %17, %18 : vector<16x32xf32>
    %20 = tpu.iota {dimensions = array<i32: 1>} : vector<1x128xi32>
    %c96_i32 = arith.constant 96 : i32
    %21 = vector.broadcast %c96_i32 : i32 to vector<1x128xi32>
    %22 = arith.cmpi sge, %20, %21 : vector<1x128xi32>
    %cst_12 = arith.constant 1.000000e+00 : f32
    %cst_13 = arith.constant 5.000000e-01 : f32
    %23 = vector.broadcast %cst_12 : f32 to vector<1x128xf32>
    %24 = vector.broadcast %cst_13 : f32 to vector<1x128xf32>
    %25 = arith.select %22, %23, %24 : vector<1x128xi1>, vector<1x128xf32>
    %cst_14 = arith.constant 0.000000e+00 : f32
    %cst_15 = arith.constant 5.000000e-01 : f32
    %26 = vector.broadcast %cst_14 : f32 to vector<1x128xf32>
    %27 = vector.broadcast %cst_15 : f32 to vector<1x128xf32>
    %28 = arith.select %22, %26, %27 : vector<1x128xi1>, vector<1x128xf32>
    %c56 = arith.constant 56 : index
    %c0_16 = arith.constant 0 : index
    %29 = vector.load %arg2[%c56, %c0_16] : memref<240x128xf32, #tpu.memory_space<vmem>>, vector<32x128xf32>
    %c88 = arith.constant 88 : index
    %c0_17 = arith.constant 0 : index
    %30 = vector.load %arg2[%c88, %c0_17] : memref<240x128xf32, #tpu.memory_space<vmem>>, vector<32x128xf32>
    %31 = arith.truncf %30 : vector<32x128xf32> to vector<32x128xbf16>
    %c120 = arith.constant 120 : index
    %c0_18 = arith.constant 0 : index
    %32 = vector.load %arg2[%c120, %c0_18] : memref<240x128xf32, #tpu.memory_space<vmem>>, vector<1x128xf32>
    %cst_19 = arith.constant dense<0.000000e+00> : vector<16x128xf32>
    %33 = tpu.matmul %19, %29, %cst_19 {dimension_numbers = #tpu.dot_dimension_numbers<[1], [0], [0], [1], [0, 0, 1, 1], [], []>} : vector<16x32xf32>, vector<32x128xf32>, vector<16x128xf32> -> vector<16x128xf32>
    %34 = vector.broadcast %32 : vector<1x128xf32> to vector<16x128xf32>
    %35 = arith.addf %33, %34 : vector<16x128xf32>
    %c128 = arith.constant 128 : index
    %c0_20 = arith.constant 0 : index
    %36 = vector.load %arg2[%c128, %c0_20] : memref<240x128xf32, #tpu.memory_space<vmem>>, vector<64x128xf32>
    %37 = arith.truncf %36 : vector<64x128xf32> to vector<64x128xbf16>
    %c192 = arith.constant 192 : index
    %c0_21 = arith.constant 0 : index
    %38 = vector.load %arg2[%c192, %c0_21] : memref<240x128xf32, #tpu.memory_space<vmem>>, vector<1x128xf32>
    %cst_22 = arith.constant 0.000000e+00 : f32
    %39 = vector.broadcast %cst_22 : f32 to vector<1x32xf32>
    %cst_23 = arith.constant 0.000000e+00 : f32
    %40 = vector.broadcast %cst_23 : f32 to vector<1x32xf32>
    %cst_24 = arith.constant 0.000000e+00 : f32
    %41 = vector.broadcast %cst_24 : f32 to vector<1x32xf32>
    %cst_25 = arith.constant 0.000000e+00 : f32
    %42 = vector.broadcast %cst_25 : f32 to vector<1x32xf32>
    %43 = vector.extract_strided_slice %35 {offsets = [0, 0], sizes = [1, 128], strides = [1, 1]} : vector<16x128xf32> to vector<1x128xf32>
    %44 = arith.truncf %39 : vector<1x32xf32> to vector<1x32xbf16>
    %cst_26 = arith.constant dense<0.000000e+00> : vector<1x128xf32>
    %45 = tpu.matmul %44, %31, %cst_26 {dimension_numbers = #tpu.dot_dimension_numbers<[1], [0], [0], [1], [0, 0, 1, 1], [], []>} : vector<1x32xbf16>, vector<32x128xbf16>, vector<1x128xf32> -> vector<1x128xf32>
    %46 = arith.addf %43, %45 : vector<1x128xf32>
    %47 = math.tanh %46 : vector<1x128xf32>
    %48 = arith.mulf %47, %25 : vector<1x128xf32>
    %49 = arith.addf %48, %28 : vector<1x128xf32>
    %50 = vector.extract_strided_slice %49 {offsets = [0, 0], sizes = [1, 32], strides = [1, 1]} : vector<1x128xf32> to vector<1x32xf32>
    %51 = vector.extract_strided_slice %49 {offsets = [0, 32], sizes = [1, 32], strides = [1, 1]} : vector<1x128xf32> to vector<1x32xf32>
    %52 = vector.extract_strided_slice %49 {offsets = [0, 64], sizes = [1, 32], strides = [1, 1]} : vector<1x128xf32> to vector<1x32xf32>
    %53 = vector.extract_strided_slice %49 {offsets = [0, 96], sizes = [1, 32], strides = [1, 1]} : vector<1x128xf32> to vector<1x32xf32>
    %54 = arith.mulf %51, %41 : vector<1x32xf32>
    %55 = arith.mulf %50, %53 : vector<1x32xf32>
    %56 = arith.addf %54, %55 : vector<1x32xf32>
    %57 = math.tanh %56 : vector<1x32xf32>
    %58 = arith.mulf %52, %57 : vector<1x32xf32>
    %59 = vector.extract_strided_slice %35 {offsets = [1, 0], sizes = [1, 128], strides = [1, 1]} : vector<16x128xf32> to vector<1x128xf32>
    %60 = arith.truncf %58 : vector<1x32xf32> to vector<1x32xbf16>
    %cst_27 = arith.constant dense<0.000000e+00> : vector<1x128xf32>
    %61 = tpu.matmul %60, %31, %cst_27 {dimension_numbers = #tpu.dot_dimension_numbers<[1], [0], [0], [1], [0, 0, 1, 1], [], []>} : vector<1x32xbf16>, vector<32x128xbf16>, vector<1x128xf32> -> vector<1x128xf32>
    %62 = arith.addf %59, %61 : vector<1x128xf32>
    %63 = math.tanh %62 : vector<1x128xf32>
    %64 = arith.mulf %63, %25 : vector<1x128xf32>
    %65 = arith.addf %64, %28 : vector<1x128xf32>
    %66 = vector.extract_strided_slice %65 {offsets = [0, 0], sizes = [1, 32], strides = [1, 1]} : vector<1x128xf32> to vector<1x32xf32>
    %67 = vector.extract_strided_slice %65 {offsets = [0, 32], sizes = [1, 32], strides = [1, 1]} : vector<1x128xf32> to vector<1x32xf32>
    %68 = vector.extract_strided_slice %65 {offsets = [0, 64], sizes = [1, 32], strides = [1, 1]} : vector<1x128xf32> to vector<1x32xf32>
    %69 = vector.extract_strided_slice %65 {offsets = [0, 96], sizes = [1, 32], strides = [1, 1]} : vector<1x128xf32> to vector<1x32xf32>
    %70 = arith.mulf %67, %56 : vector<1x32xf32>
    %71 = arith.mulf %66, %69 : vector<1x32xf32>
    %72 = arith.addf %70, %71 : vector<1x32xf32>
    %73 = math.tanh %72 : vector<1x32xf32>
    %74 = arith.mulf %68, %73 : vector<1x32xf32>
    %75 = tpu.concatenate %58, %40 in 1 : vector<1x32xf32>, vector<1x32xf32> -> vector<1x64xf32>
    %76 = arith.truncf %75 : vector<1x64xf32> to vector<1x64xbf16>
    %cst_28 = arith.constant dense<0.000000e+00> : vector<1x128xf32>
    %77 = tpu.matmul %76, %37, %cst_28 {dimension_numbers = #tpu.dot_dimension_numbers<[1], [0], [0], [1], [0, 0, 1, 1], [], []>} : vector<1x64xbf16>, vector<64x128xbf16>, vector<1x128xf32> -> vector<1x128xf32>
    %78 = arith.addf %77, %38 : vector<1x128xf32>
    %79 = math.tanh %78 : vector<1x128xf32>
    %80 = arith.mulf %79, %25 : vector<1x128xf32>
    %81 = arith.addf %80, %28 : vector<1x128xf32>
    %82 = vector.extract_strided_slice %81 {offsets = [0, 0], sizes = [1, 32], strides = [1, 1]} : vector<1x128xf32> to vector<1x32xf32>
    %83 = vector.extract_strided_slice %81 {offsets = [0, 32], sizes = [1, 32], strides = [1, 1]} : vector<1x128xf32> to vector<1x32xf32>
    %84 = vector.extract_strided_slice %81 {offsets = [0, 64], sizes = [1, 32], strides = [1, 1]} : vector<1x128xf32> to vector<1x32xf32>
    %85 = vector.extract_strided_slice %81 {offsets = [0, 96], sizes = [1, 32], strides = [1, 1]} : vector<1x128xf32> to vector<1x32xf32>
    %86 = arith.mulf %83, %42 : vector<1x32xf32>
    %87 = arith.mulf %82, %85 : vector<1x32xf32>
    %88 = arith.addf %86, %87 : vector<1x32xf32>
    %89 = math.tanh %88 : vector<1x32xf32>
    %90 = arith.mulf %84, %89 : vector<1x32xf32>
    %91 = vector.extract_strided_slice %35 {offsets = [2, 0], sizes = [1, 128], strides = [1, 1]} : vector<16x128xf32> to vector<1x128xf32>
    %92 = arith.truncf %74 : vector<1x32xf32> to vector<1x32xbf16>
    %cst_29 = arith.constant dense<0.000000e+00> : vector<1x128xf32>
    %93 = tpu.matmul %92, %31, %cst_29 {dimension_numbers = #tpu.dot_dimension_numbers<[1], [0], [0], [1], [0, 0, 1, 1], [], []>} : vector<1x32xbf16>, vector<32x128xbf16>, vector<1x128xf32> -> vector<1x128xf32>
    %94 = arith.addf %91, %93 : vector<1x128xf32>
    %95 = math.tanh %94 : vector<1x128xf32>
    %96 = arith.mulf %95, %25 : vector<1x128xf32>
    %97 = arith.addf %96, %28 : vector<1x128xf32>
    %98 = vector.extract_strided_slice %97 {offsets = [0, 0], sizes = [1, 32], strides = [1, 1]} : vector<1x128xf32> to vector<1x32xf32>
    %99 = vector.extract_strided_slice %97 {offsets = [0, 32], sizes = [1, 32], strides = [1, 1]} : vector<1x128xf32> to vector<1x32xf32>
    %100 = vector.extract_strided_slice %97 {offsets = [0, 64], sizes = [1, 32], strides = [1, 1]} : vector<1x128xf32> to vector<1x32xf32>
    %101 = vector.extract_strided_slice %97 {offsets = [0, 96], sizes = [1, 32], strides = [1, 1]} : vector<1x128xf32> to vector<1x32xf32>
    %102 = arith.mulf %99, %72 : vector<1x32xf32>
    %103 = arith.mulf %98, %101 : vector<1x32xf32>
    %104 = arith.addf %102, %103 : vector<1x32xf32>
    %105 = math.tanh %104 : vector<1x32xf32>
    %106 = arith.mulf %100, %105 : vector<1x32xf32>
    %107 = tpu.concatenate %74, %90 in 1 : vector<1x32xf32>, vector<1x32xf32> -> vector<1x64xf32>
    %108 = arith.truncf %107 : vector<1x64xf32> to vector<1x64xbf16>
    %cst_30 = arith.constant dense<0.000000e+00> : vector<1x128xf32>
    %109 = tpu.matmul %108, %37, %cst_30 {dimension_numbers = #tpu.dot_dimension_numbers<[1], [0], [0], [1], [0, 0, 1, 1], [], []>} : vector<1x64xbf16>, vector<64x128xbf16>, vector<1x128xf32> -> vector<1x128xf32>
    %110 = arith.addf %109, %38 : vector<1x128xf32>
    %111 = math.tanh %110 : vector<1x128xf32>
    %112 = arith.mulf %111, %25 : vector<1x128xf32>
    %113 = arith.addf %112, %28 : vector<1x128xf32>
    %114 = vector.extract_strided_slice %113 {offsets = [0, 0], sizes = [1, 32], strides = [1, 1]} : vector<1x128xf32> to vector<1x32xf32>
    %115 = vector.extract_strided_slice %113 {offsets = [0, 32], sizes = [1, 32], strides = [1, 1]} : vector<1x128xf32> to vector<1x32xf32>
    %116 = vector.extract_strided_slice %113 {offsets = [0, 64], sizes = [1, 32], strides = [1, 1]} : vector<1x128xf32> to vector<1x32xf32>
    %117 = vector.extract_strided_slice %113 {offsets = [0, 96], sizes = [1, 32], strides = [1, 1]} : vector<1x128xf32> to vector<1x32xf32>
    %118 = arith.mulf %115, %88 : vector<1x32xf32>
    %119 = arith.mulf %114, %117 : vector<1x32xf32>
    %120 = arith.addf %118, %119 : vector<1x32xf32>
    %121 = math.tanh %120 : vector<1x32xf32>
    %122 = arith.mulf %116, %121 : vector<1x32xf32>
    %123 = vector.extract_strided_slice %35 {offsets = [3, 0], sizes = [1, 128], strides = [1, 1]} : vector<16x128xf32> to vector<1x128xf32>
    %124 = arith.truncf %106 : vector<1x32xf32> to vector<1x32xbf16>
    %cst_31 = arith.constant dense<0.000000e+00> : vector<1x128xf32>
    %125 = tpu.matmul %124, %31, %cst_31 {dimension_numbers = #tpu.dot_dimension_numbers<[1], [0], [0], [1], [0, 0, 1, 1], [], []>} : vector<1x32xbf16>, vector<32x128xbf16>, vector<1x128xf32> -> vector<1x128xf32>
    %126 = arith.addf %123, %125 : vector<1x128xf32>
    %127 = math.tanh %126 : vector<1x128xf32>
    %128 = arith.mulf %127, %25 : vector<1x128xf32>
    %129 = arith.addf %128, %28 : vector<1x128xf32>
    %130 = vector.extract_strided_slice %129 {offsets = [0, 0], sizes = [1, 32], strides = [1, 1]} : vector<1x128xf32> to vector<1x32xf32>
    %131 = vector.extract_strided_slice %129 {offsets = [0, 32], sizes = [1, 32], strides = [1, 1]} : vector<1x128xf32> to vector<1x32xf32>
    %132 = vector.extract_strided_slice %129 {offsets = [0, 64], sizes = [1, 32], strides = [1, 1]} : vector<1x128xf32> to vector<1x32xf32>
    %133 = vector.extract_strided_slice %129 {offsets = [0, 96], sizes = [1, 32], strides = [1, 1]} : vector<1x128xf32> to vector<1x32xf32>
    %134 = arith.mulf %131, %104 : vector<1x32xf32>
    %135 = arith.mulf %130, %133 : vector<1x32xf32>
    %136 = arith.addf %134, %135 : vector<1x32xf32>
    %137 = math.tanh %136 : vector<1x32xf32>
    %138 = arith.mulf %132, %137 : vector<1x32xf32>
    %139 = tpu.concatenate %106, %122 in 1 : vector<1x32xf32>, vector<1x32xf32> -> vector<1x64xf32>
    %140 = arith.truncf %139 : vector<1x64xf32> to vector<1x64xbf16>
    %cst_32 = arith.constant dense<0.000000e+00> : vector<1x128xf32>
    %141 = tpu.matmul %140, %37, %cst_32 {dimension_numbers = #tpu.dot_dimension_numbers<[1], [0], [0], [1], [0, 0, 1, 1], [], []>} : vector<1x64xbf16>, vector<64x128xbf16>, vector<1x128xf32> -> vector<1x128xf32>
    %142 = arith.addf %141, %38 : vector<1x128xf32>
    %143 = math.tanh %142 : vector<1x128xf32>
    %144 = arith.mulf %143, %25 : vector<1x128xf32>
    %145 = arith.addf %144, %28 : vector<1x128xf32>
    %146 = vector.extract_strided_slice %145 {offsets = [0, 0], sizes = [1, 32], strides = [1, 1]} : vector<1x128xf32> to vector<1x32xf32>
    %147 = vector.extract_strided_slice %145 {offsets = [0, 32], sizes = [1, 32], strides = [1, 1]} : vector<1x128xf32> to vector<1x32xf32>
    %148 = vector.extract_strided_slice %145 {offsets = [0, 64], sizes = [1, 32], strides = [1, 1]} : vector<1x128xf32> to vector<1x32xf32>
    %149 = vector.extract_strided_slice %145 {offsets = [0, 96], sizes = [1, 32], strides = [1, 1]} : vector<1x128xf32> to vector<1x32xf32>
    %150 = arith.mulf %147, %120 : vector<1x32xf32>
    %151 = arith.mulf %146, %149 : vector<1x32xf32>
    %152 = arith.addf %150, %151 : vector<1x32xf32>
    %153 = math.tanh %152 : vector<1x32xf32>
    %154 = arith.mulf %148, %153 : vector<1x32xf32>
    %155 = vector.extract_strided_slice %35 {offsets = [4, 0], sizes = [1, 128], strides = [1, 1]} : vector<16x128xf32> to vector<1x128xf32>
    %156 = arith.truncf %138 : vector<1x32xf32> to vector<1x32xbf16>
    %cst_33 = arith.constant dense<0.000000e+00> : vector<1x128xf32>
    %157 = tpu.matmul %156, %31, %cst_33 {dimension_numbers = #tpu.dot_dimension_numbers<[1], [0], [0], [1], [0, 0, 1, 1], [], []>} : vector<1x32xbf16>, vector<32x128xbf16>, vector<1x128xf32> -> vector<1x128xf32>
    %158 = arith.addf %155, %157 : vector<1x128xf32>
    %159 = math.tanh %158 : vector<1x128xf32>
    %160 = arith.mulf %159, %25 : vector<1x128xf32>
    %161 = arith.addf %160, %28 : vector<1x128xf32>
    %162 = vector.extract_strided_slice %161 {offsets = [0, 0], sizes = [1, 32], strides = [1, 1]} : vector<1x128xf32> to vector<1x32xf32>
    %163 = vector.extract_strided_slice %161 {offsets = [0, 32], sizes = [1, 32], strides = [1, 1]} : vector<1x128xf32> to vector<1x32xf32>
    %164 = vector.extract_strided_slice %161 {offsets = [0, 64], sizes = [1, 32], strides = [1, 1]} : vector<1x128xf32> to vector<1x32xf32>
    %165 = vector.extract_strided_slice %161 {offsets = [0, 96], sizes = [1, 32], strides = [1, 1]} : vector<1x128xf32> to vector<1x32xf32>
    %166 = arith.mulf %163, %136 : vector<1x32xf32>
    %167 = arith.mulf %162, %165 : vector<1x32xf32>
    %168 = arith.addf %166, %167 : vector<1x32xf32>
    %169 = math.tanh %168 : vector<1x32xf32>
    %170 = arith.mulf %164, %169 : vector<1x32xf32>
    %171 = tpu.concatenate %138, %154 in 1 : vector<1x32xf32>, vector<1x32xf32> -> vector<1x64xf32>
    %172 = arith.truncf %171 : vector<1x64xf32> to vector<1x64xbf16>
    %cst_34 = arith.constant dense<0.000000e+00> : vector<1x128xf32>
    %173 = tpu.matmul %172, %37, %cst_34 {dimension_numbers = #tpu.dot_dimension_numbers<[1], [0], [0], [1], [0, 0, 1, 1], [], []>} : vector<1x64xbf16>, vector<64x128xbf16>, vector<1x128xf32> -> vector<1x128xf32>
    %174 = arith.addf %173, %38 : vector<1x128xf32>
    %175 = math.tanh %174 : vector<1x128xf32>
    %176 = arith.mulf %175, %25 : vector<1x128xf32>
    %177 = arith.addf %176, %28 : vector<1x128xf32>
    %178 = vector.extract_strided_slice %177 {offsets = [0, 0], sizes = [1, 32], strides = [1, 1]} : vector<1x128xf32> to vector<1x32xf32>
    %179 = vector.extract_strided_slice %177 {offsets = [0, 32], sizes = [1, 32], strides = [1, 1]} : vector<1x128xf32> to vector<1x32xf32>
    %180 = vector.extract_strided_slice %177 {offsets = [0, 64], sizes = [1, 32], strides = [1, 1]} : vector<1x128xf32> to vector<1x32xf32>
    %181 = vector.extract_strided_slice %177 {offsets = [0, 96], sizes = [1, 32], strides = [1, 1]} : vector<1x128xf32> to vector<1x32xf32>
    %182 = arith.mulf %179, %152 : vector<1x32xf32>
    %183 = arith.mulf %178, %181 : vector<1x32xf32>
    %184 = arith.addf %182, %183 : vector<1x32xf32>
    %185 = math.tanh %184 : vector<1x32xf32>
    %186 = arith.mulf %180, %185 : vector<1x32xf32>
    %187 = vector.extract_strided_slice %35 {offsets = [5, 0], sizes = [1, 128], strides = [1, 1]} : vector<16x128xf32> to vector<1x128xf32>
    %188 = arith.truncf %170 : vector<1x32xf32> to vector<1x32xbf16>
    %cst_35 = arith.constant dense<0.000000e+00> : vector<1x128xf32>
    %189 = tpu.matmul %188, %31, %cst_35 {dimension_numbers = #tpu.dot_dimension_numbers<[1], [0], [0], [1], [0, 0, 1, 1], [], []>} : vector<1x32xbf16>, vector<32x128xbf16>, vector<1x128xf32> -> vector<1x128xf32>
    %190 = arith.addf %187, %189 : vector<1x128xf32>
    %191 = math.tanh %190 : vector<1x128xf32>
    %192 = arith.mulf %191, %25 : vector<1x128xf32>
    %193 = arith.addf %192, %28 : vector<1x128xf32>
    %194 = vector.extract_strided_slice %193 {offsets = [0, 0], sizes = [1, 32], strides = [1, 1]} : vector<1x128xf32> to vector<1x32xf32>
    %195 = vector.extract_strided_slice %193 {offsets = [0, 32], sizes = [1, 32], strides = [1, 1]} : vector<1x128xf32> to vector<1x32xf32>
    %196 = vector.extract_strided_slice %193 {offsets = [0, 64], sizes = [1, 32], strides = [1, 1]} : vector<1x128xf32> to vector<1x32xf32>
    %197 = vector.extract_strided_slice %193 {offsets = [0, 96], sizes = [1, 32], strides = [1, 1]} : vector<1x128xf32> to vector<1x32xf32>
    %198 = arith.mulf %195, %168 : vector<1x32xf32>
    %199 = arith.mulf %194, %197 : vector<1x32xf32>
    %200 = arith.addf %198, %199 : vector<1x32xf32>
    %201 = math.tanh %200 : vector<1x32xf32>
    %202 = arith.mulf %196, %201 : vector<1x32xf32>
    %203 = tpu.concatenate %170, %186 in 1 : vector<1x32xf32>, vector<1x32xf32> -> vector<1x64xf32>
    %204 = arith.truncf %203 : vector<1x64xf32> to vector<1x64xbf16>
    %cst_36 = arith.constant dense<0.000000e+00> : vector<1x128xf32>
    %205 = tpu.matmul %204, %37, %cst_36 {dimension_numbers = #tpu.dot_dimension_numbers<[1], [0], [0], [1], [0, 0, 1, 1], [], []>} : vector<1x64xbf16>, vector<64x128xbf16>, vector<1x128xf32> -> vector<1x128xf32>
    %206 = arith.addf %205, %38 : vector<1x128xf32>
    %207 = math.tanh %206 : vector<1x128xf32>
    %208 = arith.mulf %207, %25 : vector<1x128xf32>
    %209 = arith.addf %208, %28 : vector<1x128xf32>
    %210 = vector.extract_strided_slice %209 {offsets = [0, 0], sizes = [1, 32], strides = [1, 1]} : vector<1x128xf32> to vector<1x32xf32>
    %211 = vector.extract_strided_slice %209 {offsets = [0, 32], sizes = [1, 32], strides = [1, 1]} : vector<1x128xf32> to vector<1x32xf32>
    %212 = vector.extract_strided_slice %209 {offsets = [0, 64], sizes = [1, 32], strides = [1, 1]} : vector<1x128xf32> to vector<1x32xf32>
    %213 = vector.extract_strided_slice %209 {offsets = [0, 96], sizes = [1, 32], strides = [1, 1]} : vector<1x128xf32> to vector<1x32xf32>
    %214 = arith.mulf %211, %184 : vector<1x32xf32>
    %215 = arith.mulf %210, %213 : vector<1x32xf32>
    %216 = arith.addf %214, %215 : vector<1x32xf32>
    %217 = math.tanh %216 : vector<1x32xf32>
    %218 = arith.mulf %212, %217 : vector<1x32xf32>
    %219 = vector.extract_strided_slice %35 {offsets = [6, 0], sizes = [1, 128], strides = [1, 1]} : vector<16x128xf32> to vector<1x128xf32>
    %220 = arith.truncf %202 : vector<1x32xf32> to vector<1x32xbf16>
    %cst_37 = arith.constant dense<0.000000e+00> : vector<1x128xf32>
    %221 = tpu.matmul %220, %31, %cst_37 {dimension_numbers = #tpu.dot_dimension_numbers<[1], [0], [0], [1], [0, 0, 1, 1], [], []>} : vector<1x32xbf16>, vector<32x128xbf16>, vector<1x128xf32> -> vector<1x128xf32>
    %222 = arith.addf %219, %221 : vector<1x128xf32>
    %223 = math.tanh %222 : vector<1x128xf32>
    %224 = arith.mulf %223, %25 : vector<1x128xf32>
    %225 = arith.addf %224, %28 : vector<1x128xf32>
    %226 = vector.extract_strided_slice %225 {offsets = [0, 0], sizes = [1, 32], strides = [1, 1]} : vector<1x128xf32> to vector<1x32xf32>
    %227 = vector.extract_strided_slice %225 {offsets = [0, 32], sizes = [1, 32], strides = [1, 1]} : vector<1x128xf32> to vector<1x32xf32>
    %228 = vector.extract_strided_slice %225 {offsets = [0, 64], sizes = [1, 32], strides = [1, 1]} : vector<1x128xf32> to vector<1x32xf32>
    %229 = vector.extract_strided_slice %225 {offsets = [0, 96], sizes = [1, 32], strides = [1, 1]} : vector<1x128xf32> to vector<1x32xf32>
    %230 = arith.mulf %227, %200 : vector<1x32xf32>
    %231 = arith.mulf %226, %229 : vector<1x32xf32>
    %232 = arith.addf %230, %231 : vector<1x32xf32>
    %233 = math.tanh %232 : vector<1x32xf32>
    %234 = arith.mulf %228, %233 : vector<1x32xf32>
    %235 = tpu.concatenate %202, %218 in 1 : vector<1x32xf32>, vector<1x32xf32> -> vector<1x64xf32>
    %236 = arith.truncf %235 : vector<1x64xf32> to vector<1x64xbf16>
    %cst_38 = arith.constant dense<0.000000e+00> : vector<1x128xf32>
    %237 = tpu.matmul %236, %37, %cst_38 {dimension_numbers = #tpu.dot_dimension_numbers<[1], [0], [0], [1], [0, 0, 1, 1], [], []>} : vector<1x64xbf16>, vector<64x128xbf16>, vector<1x128xf32> -> vector<1x128xf32>
    %238 = arith.addf %237, %38 : vector<1x128xf32>
    %239 = math.tanh %238 : vector<1x128xf32>
    %240 = arith.mulf %239, %25 : vector<1x128xf32>
    %241 = arith.addf %240, %28 : vector<1x128xf32>
    %242 = vector.extract_strided_slice %241 {offsets = [0, 0], sizes = [1, 32], strides = [1, 1]} : vector<1x128xf32> to vector<1x32xf32>
    %243 = vector.extract_strided_slice %241 {offsets = [0, 32], sizes = [1, 32], strides = [1, 1]} : vector<1x128xf32> to vector<1x32xf32>
    %244 = vector.extract_strided_slice %241 {offsets = [0, 64], sizes = [1, 32], strides = [1, 1]} : vector<1x128xf32> to vector<1x32xf32>
    %245 = vector.extract_strided_slice %241 {offsets = [0, 96], sizes = [1, 32], strides = [1, 1]} : vector<1x128xf32> to vector<1x32xf32>
    %246 = arith.mulf %243, %216 : vector<1x32xf32>
    %247 = arith.mulf %242, %245 : vector<1x32xf32>
    %248 = arith.addf %246, %247 : vector<1x32xf32>
    %249 = math.tanh %248 : vector<1x32xf32>
    %250 = arith.mulf %244, %249 : vector<1x32xf32>
    %251 = vector.extract_strided_slice %35 {offsets = [7, 0], sizes = [1, 128], strides = [1, 1]} : vector<16x128xf32> to vector<1x128xf32>
    %252 = arith.truncf %234 : vector<1x32xf32> to vector<1x32xbf16>
    %cst_39 = arith.constant dense<0.000000e+00> : vector<1x128xf32>
    %253 = tpu.matmul %252, %31, %cst_39 {dimension_numbers = #tpu.dot_dimension_numbers<[1], [0], [0], [1], [0, 0, 1, 1], [], []>} : vector<1x32xbf16>, vector<32x128xbf16>, vector<1x128xf32> -> vector<1x128xf32>
    %254 = arith.addf %251, %253 : vector<1x128xf32>
    %255 = math.tanh %254 : vector<1x128xf32>
    %256 = arith.mulf %255, %25 : vector<1x128xf32>
    %257 = arith.addf %256, %28 : vector<1x128xf32>
    %258 = vector.extract_strided_slice %257 {offsets = [0, 0], sizes = [1, 32], strides = [1, 1]} : vector<1x128xf32> to vector<1x32xf32>
    %259 = vector.extract_strided_slice %257 {offsets = [0, 32], sizes = [1, 32], strides = [1, 1]} : vector<1x128xf32> to vector<1x32xf32>
    %260 = vector.extract_strided_slice %257 {offsets = [0, 64], sizes = [1, 32], strides = [1, 1]} : vector<1x128xf32> to vector<1x32xf32>
    %261 = vector.extract_strided_slice %257 {offsets = [0, 96], sizes = [1, 32], strides = [1, 1]} : vector<1x128xf32> to vector<1x32xf32>
    %262 = arith.mulf %259, %232 : vector<1x32xf32>
    %263 = arith.mulf %258, %261 : vector<1x32xf32>
    %264 = arith.addf %262, %263 : vector<1x32xf32>
    %265 = math.tanh %264 : vector<1x32xf32>
    %266 = arith.mulf %260, %265 : vector<1x32xf32>
    %267 = tpu.concatenate %234, %250 in 1 : vector<1x32xf32>, vector<1x32xf32> -> vector<1x64xf32>
    %268 = arith.truncf %267 : vector<1x64xf32> to vector<1x64xbf16>
    %cst_40 = arith.constant dense<0.000000e+00> : vector<1x128xf32>
    %269 = tpu.matmul %268, %37, %cst_40 {dimension_numbers = #tpu.dot_dimension_numbers<[1], [0], [0], [1], [0, 0, 1, 1], [], []>} : vector<1x64xbf16>, vector<64x128xbf16>, vector<1x128xf32> -> vector<1x128xf32>
    %270 = arith.addf %269, %38 : vector<1x128xf32>
    %271 = math.tanh %270 : vector<1x128xf32>
    %272 = arith.mulf %271, %25 : vector<1x128xf32>
    %273 = arith.addf %272, %28 : vector<1x128xf32>
    %274 = vector.extract_strided_slice %273 {offsets = [0, 0], sizes = [1, 32], strides = [1, 1]} : vector<1x128xf32> to vector<1x32xf32>
    %275 = vector.extract_strided_slice %273 {offsets = [0, 32], sizes = [1, 32], strides = [1, 1]} : vector<1x128xf32> to vector<1x32xf32>
    %276 = vector.extract_strided_slice %273 {offsets = [0, 64], sizes = [1, 32], strides = [1, 1]} : vector<1x128xf32> to vector<1x32xf32>
    %277 = vector.extract_strided_slice %273 {offsets = [0, 96], sizes = [1, 32], strides = [1, 1]} : vector<1x128xf32> to vector<1x32xf32>
    %278 = arith.mulf %275, %248 : vector<1x32xf32>
    %279 = arith.mulf %274, %277 : vector<1x32xf32>
    %280 = arith.addf %278, %279 : vector<1x32xf32>
    %281 = math.tanh %280 : vector<1x32xf32>
    %282 = arith.mulf %276, %281 : vector<1x32xf32>
    %283 = vector.extract_strided_slice %35 {offsets = [8, 0], sizes = [1, 128], strides = [1, 1]} : vector<16x128xf32> to vector<1x128xf32>
    %284 = arith.truncf %266 : vector<1x32xf32> to vector<1x32xbf16>
    %cst_41 = arith.constant dense<0.000000e+00> : vector<1x128xf32>
    %285 = tpu.matmul %284, %31, %cst_41 {dimension_numbers = #tpu.dot_dimension_numbers<[1], [0], [0], [1], [0, 0, 1, 1], [], []>} : vector<1x32xbf16>, vector<32x128xbf16>, vector<1x128xf32> -> vector<1x128xf32>
    %286 = arith.addf %283, %285 : vector<1x128xf32>
    %287 = math.tanh %286 : vector<1x128xf32>
    %288 = arith.mulf %287, %25 : vector<1x128xf32>
    %289 = arith.addf %288, %28 : vector<1x128xf32>
    %290 = vector.extract_strided_slice %289 {offsets = [0, 0], sizes = [1, 32], strides = [1, 1]} : vector<1x128xf32> to vector<1x32xf32>
    %291 = vector.extract_strided_slice %289 {offsets = [0, 32], sizes = [1, 32], strides = [1, 1]} : vector<1x128xf32> to vector<1x32xf32>
    %292 = vector.extract_strided_slice %289 {offsets = [0, 64], sizes = [1, 32], strides = [1, 1]} : vector<1x128xf32> to vector<1x32xf32>
    %293 = vector.extract_strided_slice %289 {offsets = [0, 96], sizes = [1, 32], strides = [1, 1]} : vector<1x128xf32> to vector<1x32xf32>
    %294 = arith.mulf %291, %264 : vector<1x32xf32>
    %295 = arith.mulf %290, %293 : vector<1x32xf32>
    %296 = arith.addf %294, %295 : vector<1x32xf32>
    %297 = math.tanh %296 : vector<1x32xf32>
    %298 = arith.mulf %292, %297 : vector<1x32xf32>
    %299 = tpu.concatenate %266, %282 in 1 : vector<1x32xf32>, vector<1x32xf32> -> vector<1x64xf32>
    %300 = arith.truncf %299 : vector<1x64xf32> to vector<1x64xbf16>
    %cst_42 = arith.constant dense<0.000000e+00> : vector<1x128xf32>
    %301 = tpu.matmul %300, %37, %cst_42 {dimension_numbers = #tpu.dot_dimension_numbers<[1], [0], [0], [1], [0, 0, 1, 1], [], []>} : vector<1x64xbf16>, vector<64x128xbf16>, vector<1x128xf32> -> vector<1x128xf32>
    %302 = arith.addf %301, %38 : vector<1x128xf32>
    %303 = math.tanh %302 : vector<1x128xf32>
    %304 = arith.mulf %303, %25 : vector<1x128xf32>
    %305 = arith.addf %304, %28 : vector<1x128xf32>
    %306 = vector.extract_strided_slice %305 {offsets = [0, 0], sizes = [1, 32], strides = [1, 1]} : vector<1x128xf32> to vector<1x32xf32>
    %307 = vector.extract_strided_slice %305 {offsets = [0, 32], sizes = [1, 32], strides = [1, 1]} : vector<1x128xf32> to vector<1x32xf32>
    %308 = vector.extract_strided_slice %305 {offsets = [0, 64], sizes = [1, 32], strides = [1, 1]} : vector<1x128xf32> to vector<1x32xf32>
    %309 = vector.extract_strided_slice %305 {offsets = [0, 96], sizes = [1, 32], strides = [1, 1]} : vector<1x128xf32> to vector<1x32xf32>
    %310 = arith.mulf %307, %280 : vector<1x32xf32>
    %311 = arith.mulf %306, %309 : vector<1x32xf32>
    %312 = arith.addf %310, %311 : vector<1x32xf32>
    %313 = math.tanh %312 : vector<1x32xf32>
    %314 = arith.mulf %308, %313 : vector<1x32xf32>
    %315 = vector.extract_strided_slice %35 {offsets = [9, 0], sizes = [1, 128], strides = [1, 1]} : vector<16x128xf32> to vector<1x128xf32>
    %316 = arith.truncf %298 : vector<1x32xf32> to vector<1x32xbf16>
    %cst_43 = arith.constant dense<0.000000e+00> : vector<1x128xf32>
    %317 = tpu.matmul %316, %31, %cst_43 {dimension_numbers = #tpu.dot_dimension_numbers<[1], [0], [0], [1], [0, 0, 1, 1], [], []>} : vector<1x32xbf16>, vector<32x128xbf16>, vector<1x128xf32> -> vector<1x128xf32>
    %318 = arith.addf %315, %317 : vector<1x128xf32>
    %319 = math.tanh %318 : vector<1x128xf32>
    %320 = arith.mulf %319, %25 : vector<1x128xf32>
    %321 = arith.addf %320, %28 : vector<1x128xf32>
    %322 = vector.extract_strided_slice %321 {offsets = [0, 0], sizes = [1, 32], strides = [1, 1]} : vector<1x128xf32> to vector<1x32xf32>
    %323 = vector.extract_strided_slice %321 {offsets = [0, 32], sizes = [1, 32], strides = [1, 1]} : vector<1x128xf32> to vector<1x32xf32>
    %324 = vector.extract_strided_slice %321 {offsets = [0, 64], sizes = [1, 32], strides = [1, 1]} : vector<1x128xf32> to vector<1x32xf32>
    %325 = vector.extract_strided_slice %321 {offsets = [0, 96], sizes = [1, 32], strides = [1, 1]} : vector<1x128xf32> to vector<1x32xf32>
    %326 = arith.mulf %323, %296 : vector<1x32xf32>
    %327 = arith.mulf %322, %325 : vector<1x32xf32>
    %328 = arith.addf %326, %327 : vector<1x32xf32>
    %329 = math.tanh %328 : vector<1x32xf32>
    %330 = arith.mulf %324, %329 : vector<1x32xf32>
    %331 = tpu.concatenate %298, %314 in 1 : vector<1x32xf32>, vector<1x32xf32> -> vector<1x64xf32>
    %332 = arith.truncf %331 : vector<1x64xf32> to vector<1x64xbf16>
    %cst_44 = arith.constant dense<0.000000e+00> : vector<1x128xf32>
    %333 = tpu.matmul %332, %37, %cst_44 {dimension_numbers = #tpu.dot_dimension_numbers<[1], [0], [0], [1], [0, 0, 1, 1], [], []>} : vector<1x64xbf16>, vector<64x128xbf16>, vector<1x128xf32> -> vector<1x128xf32>
    %334 = arith.addf %333, %38 : vector<1x128xf32>
    %335 = math.tanh %334 : vector<1x128xf32>
    %336 = arith.mulf %335, %25 : vector<1x128xf32>
    %337 = arith.addf %336, %28 : vector<1x128xf32>
    %338 = vector.extract_strided_slice %337 {offsets = [0, 0], sizes = [1, 32], strides = [1, 1]} : vector<1x128xf32> to vector<1x32xf32>
    %339 = vector.extract_strided_slice %337 {offsets = [0, 32], sizes = [1, 32], strides = [1, 1]} : vector<1x128xf32> to vector<1x32xf32>
    %340 = vector.extract_strided_slice %337 {offsets = [0, 64], sizes = [1, 32], strides = [1, 1]} : vector<1x128xf32> to vector<1x32xf32>
    %341 = vector.extract_strided_slice %337 {offsets = [0, 96], sizes = [1, 32], strides = [1, 1]} : vector<1x128xf32> to vector<1x32xf32>
    %342 = arith.mulf %339, %312 : vector<1x32xf32>
    %343 = arith.mulf %338, %341 : vector<1x32xf32>
    %344 = arith.addf %342, %343 : vector<1x32xf32>
    %345 = math.tanh %344 : vector<1x32xf32>
    %346 = arith.mulf %340, %345 : vector<1x32xf32>
    %347 = vector.extract_strided_slice %35 {offsets = [10, 0], sizes = [1, 128], strides = [1, 1]} : vector<16x128xf32> to vector<1x128xf32>
    %348 = arith.truncf %330 : vector<1x32xf32> to vector<1x32xbf16>
    %cst_45 = arith.constant dense<0.000000e+00> : vector<1x128xf32>
    %349 = tpu.matmul %348, %31, %cst_45 {dimension_numbers = #tpu.dot_dimension_numbers<[1], [0], [0], [1], [0, 0, 1, 1], [], []>} : vector<1x32xbf16>, vector<32x128xbf16>, vector<1x128xf32> -> vector<1x128xf32>
    %350 = arith.addf %347, %349 : vector<1x128xf32>
    %351 = math.tanh %350 : vector<1x128xf32>
    %352 = arith.mulf %351, %25 : vector<1x128xf32>
    %353 = arith.addf %352, %28 : vector<1x128xf32>
    %354 = vector.extract_strided_slice %353 {offsets = [0, 0], sizes = [1, 32], strides = [1, 1]} : vector<1x128xf32> to vector<1x32xf32>
    %355 = vector.extract_strided_slice %353 {offsets = [0, 32], sizes = [1, 32], strides = [1, 1]} : vector<1x128xf32> to vector<1x32xf32>
    %356 = vector.extract_strided_slice %353 {offsets = [0, 64], sizes = [1, 32], strides = [1, 1]} : vector<1x128xf32> to vector<1x32xf32>
    %357 = vector.extract_strided_slice %353 {offsets = [0, 96], sizes = [1, 32], strides = [1, 1]} : vector<1x128xf32> to vector<1x32xf32>
    %358 = arith.mulf %355, %328 : vector<1x32xf32>
    %359 = arith.mulf %354, %357 : vector<1x32xf32>
    %360 = arith.addf %358, %359 : vector<1x32xf32>
    %361 = math.tanh %360 : vector<1x32xf32>
    %362 = arith.mulf %356, %361 : vector<1x32xf32>
    %363 = tpu.concatenate %330, %346 in 1 : vector<1x32xf32>, vector<1x32xf32> -> vector<1x64xf32>
    %364 = arith.truncf %363 : vector<1x64xf32> to vector<1x64xbf16>
    %cst_46 = arith.constant dense<0.000000e+00> : vector<1x128xf32>
    %365 = tpu.matmul %364, %37, %cst_46 {dimension_numbers = #tpu.dot_dimension_numbers<[1], [0], [0], [1], [0, 0, 1, 1], [], []>} : vector<1x64xbf16>, vector<64x128xbf16>, vector<1x128xf32> -> vector<1x128xf32>
    %366 = arith.addf %365, %38 : vector<1x128xf32>
    %367 = math.tanh %366 : vector<1x128xf32>
    %368 = arith.mulf %367, %25 : vector<1x128xf32>
    %369 = arith.addf %368, %28 : vector<1x128xf32>
    %370 = vector.extract_strided_slice %369 {offsets = [0, 0], sizes = [1, 32], strides = [1, 1]} : vector<1x128xf32> to vector<1x32xf32>
    %371 = vector.extract_strided_slice %369 {offsets = [0, 32], sizes = [1, 32], strides = [1, 1]} : vector<1x128xf32> to vector<1x32xf32>
    %372 = vector.extract_strided_slice %369 {offsets = [0, 64], sizes = [1, 32], strides = [1, 1]} : vector<1x128xf32> to vector<1x32xf32>
    %373 = vector.extract_strided_slice %369 {offsets = [0, 96], sizes = [1, 32], strides = [1, 1]} : vector<1x128xf32> to vector<1x32xf32>
    %374 = arith.mulf %371, %344 : vector<1x32xf32>
    %375 = arith.mulf %370, %373 : vector<1x32xf32>
    %376 = arith.addf %374, %375 : vector<1x32xf32>
    %377 = math.tanh %376 : vector<1x32xf32>
    %378 = arith.mulf %372, %377 : vector<1x32xf32>
    %379 = vector.extract_strided_slice %35 {offsets = [11, 0], sizes = [1, 128], strides = [1, 1]} : vector<16x128xf32> to vector<1x128xf32>
    %380 = arith.truncf %362 : vector<1x32xf32> to vector<1x32xbf16>
    %cst_47 = arith.constant dense<0.000000e+00> : vector<1x128xf32>
    %381 = tpu.matmul %380, %31, %cst_47 {dimension_numbers = #tpu.dot_dimension_numbers<[1], [0], [0], [1], [0, 0, 1, 1], [], []>} : vector<1x32xbf16>, vector<32x128xbf16>, vector<1x128xf32> -> vector<1x128xf32>
    %382 = arith.addf %379, %381 : vector<1x128xf32>
    %383 = math.tanh %382 : vector<1x128xf32>
    %384 = arith.mulf %383, %25 : vector<1x128xf32>
    %385 = arith.addf %384, %28 : vector<1x128xf32>
    %386 = vector.extract_strided_slice %385 {offsets = [0, 0], sizes = [1, 32], strides = [1, 1]} : vector<1x128xf32> to vector<1x32xf32>
    %387 = vector.extract_strided_slice %385 {offsets = [0, 32], sizes = [1, 32], strides = [1, 1]} : vector<1x128xf32> to vector<1x32xf32>
    %388 = vector.extract_strided_slice %385 {offsets = [0, 64], sizes = [1, 32], strides = [1, 1]} : vector<1x128xf32> to vector<1x32xf32>
    %389 = vector.extract_strided_slice %385 {offsets = [0, 96], sizes = [1, 32], strides = [1, 1]} : vector<1x128xf32> to vector<1x32xf32>
    %390 = arith.mulf %387, %360 : vector<1x32xf32>
    %391 = arith.mulf %386, %389 : vector<1x32xf32>
    %392 = arith.addf %390, %391 : vector<1x32xf32>
    %393 = math.tanh %392 : vector<1x32xf32>
    %394 = arith.mulf %388, %393 : vector<1x32xf32>
    %395 = tpu.concatenate %362, %378 in 1 : vector<1x32xf32>, vector<1x32xf32> -> vector<1x64xf32>
    %396 = arith.truncf %395 : vector<1x64xf32> to vector<1x64xbf16>
    %cst_48 = arith.constant dense<0.000000e+00> : vector<1x128xf32>
    %397 = tpu.matmul %396, %37, %cst_48 {dimension_numbers = #tpu.dot_dimension_numbers<[1], [0], [0], [1], [0, 0, 1, 1], [], []>} : vector<1x64xbf16>, vector<64x128xbf16>, vector<1x128xf32> -> vector<1x128xf32>
    %398 = arith.addf %397, %38 : vector<1x128xf32>
    %399 = math.tanh %398 : vector<1x128xf32>
    %400 = arith.mulf %399, %25 : vector<1x128xf32>
    %401 = arith.addf %400, %28 : vector<1x128xf32>
    %402 = vector.extract_strided_slice %401 {offsets = [0, 0], sizes = [1, 32], strides = [1, 1]} : vector<1x128xf32> to vector<1x32xf32>
    %403 = vector.extract_strided_slice %401 {offsets = [0, 32], sizes = [1, 32], strides = [1, 1]} : vector<1x128xf32> to vector<1x32xf32>
    %404 = vector.extract_strided_slice %401 {offsets = [0, 64], sizes = [1, 32], strides = [1, 1]} : vector<1x128xf32> to vector<1x32xf32>
    %405 = vector.extract_strided_slice %401 {offsets = [0, 96], sizes = [1, 32], strides = [1, 1]} : vector<1x128xf32> to vector<1x32xf32>
    %406 = arith.mulf %403, %376 : vector<1x32xf32>
    %407 = arith.mulf %402, %405 : vector<1x32xf32>
    %408 = arith.addf %406, %407 : vector<1x32xf32>
    %409 = math.tanh %408 : vector<1x32xf32>
    %410 = arith.mulf %404, %409 : vector<1x32xf32>
    %411 = vector.extract_strided_slice %35 {offsets = [12, 0], sizes = [1, 128], strides = [1, 1]} : vector<16x128xf32> to vector<1x128xf32>
    %412 = arith.truncf %394 : vector<1x32xf32> to vector<1x32xbf16>
    %cst_49 = arith.constant dense<0.000000e+00> : vector<1x128xf32>
    %413 = tpu.matmul %412, %31, %cst_49 {dimension_numbers = #tpu.dot_dimension_numbers<[1], [0], [0], [1], [0, 0, 1, 1], [], []>} : vector<1x32xbf16>, vector<32x128xbf16>, vector<1x128xf32> -> vector<1x128xf32>
    %414 = arith.addf %411, %413 : vector<1x128xf32>
    %415 = math.tanh %414 : vector<1x128xf32>
    %416 = arith.mulf %415, %25 : vector<1x128xf32>
    %417 = arith.addf %416, %28 : vector<1x128xf32>
    %418 = vector.extract_strided_slice %417 {offsets = [0, 0], sizes = [1, 32], strides = [1, 1]} : vector<1x128xf32> to vector<1x32xf32>
    %419 = vector.extract_strided_slice %417 {offsets = [0, 32], sizes = [1, 32], strides = [1, 1]} : vector<1x128xf32> to vector<1x32xf32>
    %420 = vector.extract_strided_slice %417 {offsets = [0, 64], sizes = [1, 32], strides = [1, 1]} : vector<1x128xf32> to vector<1x32xf32>
    %421 = vector.extract_strided_slice %417 {offsets = [0, 96], sizes = [1, 32], strides = [1, 1]} : vector<1x128xf32> to vector<1x32xf32>
    %422 = arith.mulf %419, %392 : vector<1x32xf32>
    %423 = arith.mulf %418, %421 : vector<1x32xf32>
    %424 = arith.addf %422, %423 : vector<1x32xf32>
    %425 = math.tanh %424 : vector<1x32xf32>
    %426 = arith.mulf %420, %425 : vector<1x32xf32>
    %427 = tpu.concatenate %394, %410 in 1 : vector<1x32xf32>, vector<1x32xf32> -> vector<1x64xf32>
    %428 = arith.truncf %427 : vector<1x64xf32> to vector<1x64xbf16>
    %cst_50 = arith.constant dense<0.000000e+00> : vector<1x128xf32>
    %429 = tpu.matmul %428, %37, %cst_50 {dimension_numbers = #tpu.dot_dimension_numbers<[1], [0], [0], [1], [0, 0, 1, 1], [], []>} : vector<1x64xbf16>, vector<64x128xbf16>, vector<1x128xf32> -> vector<1x128xf32>
    %430 = arith.addf %429, %38 : vector<1x128xf32>
    %431 = math.tanh %430 : vector<1x128xf32>
    %432 = arith.mulf %431, %25 : vector<1x128xf32>
    %433 = arith.addf %432, %28 : vector<1x128xf32>
    %434 = vector.extract_strided_slice %433 {offsets = [0, 0], sizes = [1, 32], strides = [1, 1]} : vector<1x128xf32> to vector<1x32xf32>
    %435 = vector.extract_strided_slice %433 {offsets = [0, 32], sizes = [1, 32], strides = [1, 1]} : vector<1x128xf32> to vector<1x32xf32>
    %436 = vector.extract_strided_slice %433 {offsets = [0, 64], sizes = [1, 32], strides = [1, 1]} : vector<1x128xf32> to vector<1x32xf32>
    %437 = vector.extract_strided_slice %433 {offsets = [0, 96], sizes = [1, 32], strides = [1, 1]} : vector<1x128xf32> to vector<1x32xf32>
    %438 = arith.mulf %435, %408 : vector<1x32xf32>
    %439 = arith.mulf %434, %437 : vector<1x32xf32>
    %440 = arith.addf %438, %439 : vector<1x32xf32>
    %441 = math.tanh %440 : vector<1x32xf32>
    %442 = arith.mulf %436, %441 : vector<1x32xf32>
    %443 = vector.extract_strided_slice %35 {offsets = [13, 0], sizes = [1, 128], strides = [1, 1]} : vector<16x128xf32> to vector<1x128xf32>
    %444 = arith.truncf %426 : vector<1x32xf32> to vector<1x32xbf16>
    %cst_51 = arith.constant dense<0.000000e+00> : vector<1x128xf32>
    %445 = tpu.matmul %444, %31, %cst_51 {dimension_numbers = #tpu.dot_dimension_numbers<[1], [0], [0], [1], [0, 0, 1, 1], [], []>} : vector<1x32xbf16>, vector<32x128xbf16>, vector<1x128xf32> -> vector<1x128xf32>
    %446 = arith.addf %443, %445 : vector<1x128xf32>
    %447 = math.tanh %446 : vector<1x128xf32>
    %448 = arith.mulf %447, %25 : vector<1x128xf32>
    %449 = arith.addf %448, %28 : vector<1x128xf32>
    %450 = vector.extract_strided_slice %449 {offsets = [0, 0], sizes = [1, 32], strides = [1, 1]} : vector<1x128xf32> to vector<1x32xf32>
    %451 = vector.extract_strided_slice %449 {offsets = [0, 32], sizes = [1, 32], strides = [1, 1]} : vector<1x128xf32> to vector<1x32xf32>
    %452 = vector.extract_strided_slice %449 {offsets = [0, 64], sizes = [1, 32], strides = [1, 1]} : vector<1x128xf32> to vector<1x32xf32>
    %453 = vector.extract_strided_slice %449 {offsets = [0, 96], sizes = [1, 32], strides = [1, 1]} : vector<1x128xf32> to vector<1x32xf32>
    %454 = arith.mulf %451, %424 : vector<1x32xf32>
    %455 = arith.mulf %450, %453 : vector<1x32xf32>
    %456 = arith.addf %454, %455 : vector<1x32xf32>
    %457 = math.tanh %456 : vector<1x32xf32>
    %458 = arith.mulf %452, %457 : vector<1x32xf32>
    %459 = tpu.concatenate %426, %442 in 1 : vector<1x32xf32>, vector<1x32xf32> -> vector<1x64xf32>
    %460 = arith.truncf %459 : vector<1x64xf32> to vector<1x64xbf16>
    %cst_52 = arith.constant dense<0.000000e+00> : vector<1x128xf32>
    %461 = tpu.matmul %460, %37, %cst_52 {dimension_numbers = #tpu.dot_dimension_numbers<[1], [0], [0], [1], [0, 0, 1, 1], [], []>} : vector<1x64xbf16>, vector<64x128xbf16>, vector<1x128xf32> -> vector<1x128xf32>
    %462 = arith.addf %461, %38 : vector<1x128xf32>
    %463 = math.tanh %462 : vector<1x128xf32>
    %464 = arith.mulf %463, %25 : vector<1x128xf32>
    %465 = arith.addf %464, %28 : vector<1x128xf32>
    %466 = vector.extract_strided_slice %465 {offsets = [0, 0], sizes = [1, 32], strides = [1, 1]} : vector<1x128xf32> to vector<1x32xf32>
    %467 = vector.extract_strided_slice %465 {offsets = [0, 32], sizes = [1, 32], strides = [1, 1]} : vector<1x128xf32> to vector<1x32xf32>
    %468 = vector.extract_strided_slice %465 {offsets = [0, 64], sizes = [1, 32], strides = [1, 1]} : vector<1x128xf32> to vector<1x32xf32>
    %469 = vector.extract_strided_slice %465 {offsets = [0, 96], sizes = [1, 32], strides = [1, 1]} : vector<1x128xf32> to vector<1x32xf32>
    %470 = arith.mulf %467, %440 : vector<1x32xf32>
    %471 = arith.mulf %466, %469 : vector<1x32xf32>
    %472 = arith.addf %470, %471 : vector<1x32xf32>
    %473 = math.tanh %472 : vector<1x32xf32>
    %474 = arith.mulf %468, %473 : vector<1x32xf32>
    %475 = vector.extract_strided_slice %35 {offsets = [14, 0], sizes = [1, 128], strides = [1, 1]} : vector<16x128xf32> to vector<1x128xf32>
    %476 = arith.truncf %458 : vector<1x32xf32> to vector<1x32xbf16>
    %cst_53 = arith.constant dense<0.000000e+00> : vector<1x128xf32>
    %477 = tpu.matmul %476, %31, %cst_53 {dimension_numbers = #tpu.dot_dimension_numbers<[1], [0], [0], [1], [0, 0, 1, 1], [], []>} : vector<1x32xbf16>, vector<32x128xbf16>, vector<1x128xf32> -> vector<1x128xf32>
    %478 = arith.addf %475, %477 : vector<1x128xf32>
    %479 = math.tanh %478 : vector<1x128xf32>
    %480 = arith.mulf %479, %25 : vector<1x128xf32>
    %481 = arith.addf %480, %28 : vector<1x128xf32>
    %482 = vector.extract_strided_slice %481 {offsets = [0, 0], sizes = [1, 32], strides = [1, 1]} : vector<1x128xf32> to vector<1x32xf32>
    %483 = vector.extract_strided_slice %481 {offsets = [0, 32], sizes = [1, 32], strides = [1, 1]} : vector<1x128xf32> to vector<1x32xf32>
    %484 = vector.extract_strided_slice %481 {offsets = [0, 64], sizes = [1, 32], strides = [1, 1]} : vector<1x128xf32> to vector<1x32xf32>
    %485 = vector.extract_strided_slice %481 {offsets = [0, 96], sizes = [1, 32], strides = [1, 1]} : vector<1x128xf32> to vector<1x32xf32>
    %486 = arith.mulf %483, %456 : vector<1x32xf32>
    %487 = arith.mulf %482, %485 : vector<1x32xf32>
    %488 = arith.addf %486, %487 : vector<1x32xf32>
    %489 = math.tanh %488 : vector<1x32xf32>
    %490 = arith.mulf %484, %489 : vector<1x32xf32>
    %491 = tpu.concatenate %458, %474 in 1 : vector<1x32xf32>, vector<1x32xf32> -> vector<1x64xf32>
    %492 = arith.truncf %491 : vector<1x64xf32> to vector<1x64xbf16>
    %cst_54 = arith.constant dense<0.000000e+00> : vector<1x128xf32>
    %493 = tpu.matmul %492, %37, %cst_54 {dimension_numbers = #tpu.dot_dimension_numbers<[1], [0], [0], [1], [0, 0, 1, 1], [], []>} : vector<1x64xbf16>, vector<64x128xbf16>, vector<1x128xf32> -> vector<1x128xf32>
    %494 = arith.addf %493, %38 : vector<1x128xf32>
    %495 = math.tanh %494 : vector<1x128xf32>
    %496 = arith.mulf %495, %25 : vector<1x128xf32>
    %497 = arith.addf %496, %28 : vector<1x128xf32>
    %498 = vector.extract_strided_slice %497 {offsets = [0, 0], sizes = [1, 32], strides = [1, 1]} : vector<1x128xf32> to vector<1x32xf32>
    %499 = vector.extract_strided_slice %497 {offsets = [0, 32], sizes = [1, 32], strides = [1, 1]} : vector<1x128xf32> to vector<1x32xf32>
    %500 = vector.extract_strided_slice %497 {offsets = [0, 64], sizes = [1, 32], strides = [1, 1]} : vector<1x128xf32> to vector<1x32xf32>
    %501 = vector.extract_strided_slice %497 {offsets = [0, 96], sizes = [1, 32], strides = [1, 1]} : vector<1x128xf32> to vector<1x32xf32>
    %502 = arith.mulf %499, %472 : vector<1x32xf32>
    %503 = arith.mulf %498, %501 : vector<1x32xf32>
    %504 = arith.addf %502, %503 : vector<1x32xf32>
    %505 = math.tanh %504 : vector<1x32xf32>
    %506 = arith.mulf %500, %505 : vector<1x32xf32>
    %507 = vector.extract_strided_slice %35 {offsets = [15, 0], sizes = [1, 128], strides = [1, 1]} : vector<16x128xf32> to vector<1x128xf32>
    %508 = arith.truncf %490 : vector<1x32xf32> to vector<1x32xbf16>
    %cst_55 = arith.constant dense<0.000000e+00> : vector<1x128xf32>
    %509 = tpu.matmul %508, %31, %cst_55 {dimension_numbers = #tpu.dot_dimension_numbers<[1], [0], [0], [1], [0, 0, 1, 1], [], []>} : vector<1x32xbf16>, vector<32x128xbf16>, vector<1x128xf32> -> vector<1x128xf32>
    %510 = arith.addf %507, %509 : vector<1x128xf32>
    %511 = math.tanh %510 : vector<1x128xf32>
    %512 = arith.mulf %511, %25 : vector<1x128xf32>
    %513 = arith.addf %512, %28 : vector<1x128xf32>
    %514 = vector.extract_strided_slice %513 {offsets = [0, 0], sizes = [1, 32], strides = [1, 1]} : vector<1x128xf32> to vector<1x32xf32>
    %515 = vector.extract_strided_slice %513 {offsets = [0, 32], sizes = [1, 32], strides = [1, 1]} : vector<1x128xf32> to vector<1x32xf32>
    %516 = vector.extract_strided_slice %513 {offsets = [0, 64], sizes = [1, 32], strides = [1, 1]} : vector<1x128xf32> to vector<1x32xf32>
    %517 = vector.extract_strided_slice %513 {offsets = [0, 96], sizes = [1, 32], strides = [1, 1]} : vector<1x128xf32> to vector<1x32xf32>
    %518 = arith.mulf %515, %488 : vector<1x32xf32>
    %519 = arith.mulf %514, %517 : vector<1x32xf32>
    %520 = arith.addf %518, %519 : vector<1x32xf32>
    %521 = math.tanh %520 : vector<1x32xf32>
    %522 = arith.mulf %516, %521 : vector<1x32xf32>
    %523 = tpu.concatenate %490, %506 in 1 : vector<1x32xf32>, vector<1x32xf32> -> vector<1x64xf32>
    %524 = arith.truncf %523 : vector<1x64xf32> to vector<1x64xbf16>
    %cst_56 = arith.constant dense<0.000000e+00> : vector<1x128xf32>
    %525 = tpu.matmul %524, %37, %cst_56 {dimension_numbers = #tpu.dot_dimension_numbers<[1], [0], [0], [1], [0, 0, 1, 1], [], []>} : vector<1x64xbf16>, vector<64x128xbf16>, vector<1x128xf32> -> vector<1x128xf32>
    %526 = arith.addf %525, %38 : vector<1x128xf32>
    %527 = math.tanh %526 : vector<1x128xf32>
    %528 = arith.mulf %527, %25 : vector<1x128xf32>
    %529 = arith.addf %528, %28 : vector<1x128xf32>
    %530 = vector.extract_strided_slice %529 {offsets = [0, 0], sizes = [1, 32], strides = [1, 1]} : vector<1x128xf32> to vector<1x32xf32>
    %531 = vector.extract_strided_slice %529 {offsets = [0, 32], sizes = [1, 32], strides = [1, 1]} : vector<1x128xf32> to vector<1x32xf32>
    %532 = vector.extract_strided_slice %529 {offsets = [0, 64], sizes = [1, 32], strides = [1, 1]} : vector<1x128xf32> to vector<1x32xf32>
    %533 = vector.extract_strided_slice %529 {offsets = [0, 96], sizes = [1, 32], strides = [1, 1]} : vector<1x128xf32> to vector<1x32xf32>
    %534 = arith.mulf %531, %504 : vector<1x32xf32>
    %535 = arith.mulf %530, %533 : vector<1x32xf32>
    %536 = arith.addf %534, %535 : vector<1x32xf32>
    %537 = math.tanh %536 : vector<1x32xf32>
    %538 = arith.mulf %532, %537 : vector<1x32xf32>
    %539 = tpu.concatenate %522, %538 in 1 : vector<1x32xf32>, vector<1x32xf32> -> vector<1x64xf32>
    %540 = arith.truncf %539 : vector<1x64xf32> to vector<1x64xbf16>
    %cst_57 = arith.constant dense<0.000000e+00> : vector<1x128xf32>
    %541 = tpu.matmul %540, %37, %cst_57 {dimension_numbers = #tpu.dot_dimension_numbers<[1], [0], [0], [1], [0, 0, 1, 1], [], []>} : vector<1x64xbf16>, vector<64x128xbf16>, vector<1x128xf32> -> vector<1x128xf32>
    %542 = arith.addf %541, %38 : vector<1x128xf32>
    %543 = math.tanh %542 : vector<1x128xf32>
    %544 = arith.mulf %543, %25 : vector<1x128xf32>
    %545 = arith.addf %544, %28 : vector<1x128xf32>
    %546 = vector.extract_strided_slice %545 {offsets = [0, 0], sizes = [1, 32], strides = [1, 1]} : vector<1x128xf32> to vector<1x32xf32>
    %547 = vector.extract_strided_slice %545 {offsets = [0, 32], sizes = [1, 32], strides = [1, 1]} : vector<1x128xf32> to vector<1x32xf32>
    %548 = vector.extract_strided_slice %545 {offsets = [0, 64], sizes = [1, 32], strides = [1, 1]} : vector<1x128xf32> to vector<1x32xf32>
    %549 = vector.extract_strided_slice %545 {offsets = [0, 96], sizes = [1, 32], strides = [1, 1]} : vector<1x128xf32> to vector<1x32xf32>
    %550 = arith.mulf %547, %536 : vector<1x32xf32>
    %551 = arith.mulf %546, %549 : vector<1x32xf32>
    %552 = arith.addf %550, %551 : vector<1x32xf32>
    %553 = math.tanh %552 : vector<1x32xf32>
    %554 = arith.mulf %548, %553 : vector<1x32xf32>
    %555 = tpu.concatenate %90, %122, %154, %186, %218, %250, %282, %314, %346, %378, %410, %442, %474, %506, %538, %554 in 0 : vector<1x32xf32>, vector<1x32xf32>, vector<1x32xf32>, vector<1x32xf32>, vector<1x32xf32>, vector<1x32xf32>, vector<1x32xf32>, vector<1x32xf32>, vector<1x32xf32>, vector<1x32xf32>, vector<1x32xf32>, vector<1x32xf32>, vector<1x32xf32>, vector<1x32xf32>, vector<1x32xf32>, vector<1x32xf32> -> vector<16x32xf32>
    %c200 = arith.constant 200 : index
    %c0_58 = arith.constant 0 : index
    %556 = vector.load %arg2[%c200, %c0_58] : memref<240x128xf32, #tpu.memory_space<vmem>>, vector<32x128xf32>
    %557 = vector.extract_strided_slice %556 {offsets = [0, 0], sizes = [32, 3], strides = [1, 1]} : vector<32x128xf32> to vector<32x3xf32>
    %c232 = arith.constant 232 : index
    %c0_59 = arith.constant 0 : index
    %558 = vector.load %arg2[%c232, %c0_59] : memref<240x128xf32, #tpu.memory_space<vmem>>, vector<1x128xf32>
    %559 = vector.extract_strided_slice %558 {offsets = [0, 0], sizes = [1, 3], strides = [1, 1]} : vector<1x128xf32> to vector<1x3xf32>
    %cst_60 = arith.constant dense<0.000000e+00> : vector<16x3xf32>
    %560 = tpu.matmul %555, %557, %cst_60 {dimension_numbers = #tpu.dot_dimension_numbers<[1], [0], [0], [1], [0, 0, 1, 1], [], []>} : vector<16x32xf32>, vector<32x3xf32>, vector<16x3xf32> -> vector<16x3xf32>
    %561 = vector.broadcast %559 : vector<1x3xf32> to vector<16x3xf32>
    %562 = arith.addf %560, %561 : vector<16x3xf32>
    %c0_61 = arith.constant 0 : index
    %c0_62 = arith.constant 0 : index
    %563 = vector.load %arg3[%c0_61, %c0_62] : memref<16x3xf32, #tpu.memory_space<vmem>>, vector<16x3xf32>
    tpu.vector_store %arg3[%c0_61, %c0_62], %562 {strides = array<i32>} : memref<16x3xf32, #tpu.memory_space<vmem>>, vector<16x3xf32>,
    return
  }
}

</mosaic_0001>

<llo_original>
// kernel: tpu_custom_call.1
$region0: #{tpu_custom_call.1}
  #allocation0 [shape = 'u32[]', space=smem, size = 0x4, offset = 0x4, fixed_abs, tag = 'smem constant byte address 0x4 - core index']
  #allocation1 [shape = 'u32[144,128]{1,0:T(1,128)}', space=vmem, size = 0x12000, scoped, tag = 'internal scratch']
  %s0 = inlined_call_operand.vmem [shape: f32[16,16], index: 0, kind: input, shape index: {}]
  %s1 = inlined_call_operand.vmem [shape: f32[16,4], index: 1, kind: input, shape index: {}]
  %s2 = inlined_call_operand.hbm [shape: f32[240,128], index: 2, kind: input, shape index: {}]
  %s3 = inlined_call_operand.vmem [shape: f32[16,3], index: 3, kind: output, shape index: {}]
  %s4 = sld [smem:[#allocation0]]
  $region26: #{tpu_custom_call.1} parent=0
    _
  %s6 = ssub.s32 1, %s4
  %s7 = scalar_select 0, %s6, %s4
  $region1: #{tpu_custom_call.1} parent=0
    #allocation2 [shape = 'u8[122880]{0}', space=vmem, size = 0x1e000, scoped, tag = 'input window, operand 2, single buffered']
    #allocation3 [shape = 's32[1]{0}', space=sflag, size = 0x4, scoped, tag = 'scoped memory for tpu_custom_call.1']
    %8 = vsyncpa [#allocation3], 0
    // Predicated region
    $region2: #{tpu_custom_call.1} parent=1 // pred_check
      _
    $region3: #{tpu_custom_call.1} parent=1 // pred_check_branch
      %10 = sbr.rel (0) target = $region5
    $region4: #{tpu_custom_call.1} parent=1 // pred_region
      _
    $region5: #{tpu_custom_call.1} parent=1 // pred_fallthru
      _
    // Predicated region
    $region6: #{tpu_custom_call.1} parent=1 // pred_check
      _
    $region7: #{tpu_custom_call.1} parent=1 // pred_check_branch
      %12 = sbr.rel (0) target = $region9
    $region8: #{tpu_custom_call.1} parent=1 // pred_region
      _
    $region9: #{tpu_custom_call.1} parent=1 // pred_fallthru
      _
    // Predicated region
    $region10: #{tpu_custom_call.1} parent=1 // pred_check
      _
    $region11: #{tpu_custom_call.1} parent=1 // pred_check_branch
      %14 = sbr.rel (0) target = $region13
    $region12: #{tpu_custom_call.1} parent=1 // pred_region
      %s16 = ssub.s32 3840, 3840
      %17 = vsyncadd [#allocation3], %s16
      %s18 = sshll.u32 [#allocation2], 4
      %s19 = int_to_ptr.vmem [resolvable:$true] %s18
      %24 = dma.hbm_to_vmem [thread:$0]  %s2, 3840, %s19, [#allocation3], 128, 128, 8
    $region13: #{tpu_custom_call.1} parent=1 // pred_fallthru
      _
    // Predicated region
    $region14: #{tpu_custom_call.1} parent=1 // pred_check
      _
    $region15: #{tpu_custom_call.1} parent=1 // pred_check_branch
      %26 = sbr.rel (0) target = $region17
    $region16: #{tpu_custom_call.1} parent=1 // pred_region
      %27 = dma.done [#allocation3], 3840
    $region17: #{tpu_custom_call.1} parent=1 // pred_fallthru
      _
    %v29 = vld [vmem:[%s0] sm:$0xff]
    %v30 = vld [vmem:[%s0 + $0x8] sm:$0xff]
    %v31 = vld [vmem:[%s1] sm:$0xff]
    %v32 = vld [vmem:[%s1 + $0x8] sm:$0xff]
    %v33 = vld [vmem:[#allocation2] sm:$0xf]
    %v34 = vld [vmem:[#allocation2 + $0x8] sm:$0x1]
    %vm35 = vcmask 31744
    %v37 = vsel %vm35, %v31, 0
    %v40 = vsel %vm35, %v32, 0
    %vm42 = vcmask 1043456
    %v44 = vsel %vm42, %v33, 0
    %46 = vmatprep.subr.mxu0 0.0
    %47 = vmatpush1.msra.mxu0 %v44
    %48 = vmatprep.subr.mxu0 0.0
    %49 = vmatpush1.msra.mxu0 0.0
    %50 = vmatprep.subr.mxu0 0.0
    %51 = vmatpush1.msra.mxu0 0.0
    %52 = vmatprep.subr.mxu0 0.0
    %53 = vmatpush1.msra.mxu0 0.0
    %54 = vmatprep.subr.mxu0 0.0
    %55 = vmatpush1.msra.mxu0 0.0
    %56 = vmatprep.subr.mxu0 0.0
    %57 = vmatpush1.msra.mxu0 0.0
    %58 = vmatprep.subr.mxu0 0.0
    %59 = vmatpush1.msra.mxu0 0.0
    %60 = vmatprep.subr.mxu0 0.0
    %61 = vmatpush1.msra.mxu0 0.0
    %62 = vmatprep.subr.mxu0 0.0
    %63 = vmatpush1.msra.mxu0 0.0
    %64 = vmatprep.subr.mxu0 0.0
    %65 = vmatpush1.msra.mxu0 0.0
    %66 = vmatprep.subr.mxu0 0.0
    %67 = vmatpush1.msra.mxu0 0.0
    %68 = vmatprep.subr.mxu0 0.0
    %69 = vmatpush1.msra.mxu0 0.0
    %70 = vmatprep.subr.mxu0 0.0
    %71 = vmatpush1.msra.mxu0 0.0
    %72 = vmatprep.subr.mxu0 0.0
    %73 = vmatpush1.msra.mxu0 0.0
    %74 = vmatprep.subr.mxu0 0.0
    %75 = vmatpush1.msra.mxu0 0.0
    %76 = vmatprep.subr.mxu0 0.0
    %77 = vmatpush1.msra.mxu0 0.0
    %78 = vmatprep.subr.mxu0 0.0
    %79 = vmatpush1.msra.mxu0 0.0
    %80 = vmatprep.subr.mxu0 0.0
    %81 = vmatpush1.msra.mxu0 0.0
    %82 = vmatprep.subr.mxu0 0.0
    %83 = vmatpush1.msra.mxu0 0.0
    %84 = vmatprep.subr.mxu0 0.0
    %85 = vmatpush1.msra.mxu0 0.0
    %86 = vmatprep.subr.mxu0 0.0
    %87 = vmatpush1.msra.mxu0 0.0
    %88 = vmatprep.subr.mxu0 0.0
    %89 = vmatpush1.msra.mxu0 0.0
    %90 = vmatprep.subr.mxu0 0.0
    %91 = vmatpush1.msra.mxu0 0.0
    %92 = vmatprep.subr.mxu0 0.0
    %93 = vmatpush1.msra.mxu0 0.0
    %94 = vmatprep.subr.mxu0 0.0
    %95 = vmatpush1.msra.mxu0 0.0
    %96 = vmatprep.subr.mxu0 0.0
    %97 = vmatpush1.msra.mxu0 0.0
    %98 = vmatprep.subr.mxu0 0.0
    %99 = vmatpush1.msra.mxu0 0.0
    %100 = vmatprep.subr.mxu0 0.0
    %101 = vmatpush1.msra.mxu0 0.0
    %102 = vmatprep.subr.mxu0 0.0
    %103 = vmatpush1.msra.mxu0 0.0
    %104 = vmatprep.subr.mxu0 0.0
    %105 = vmatpush1.msra.mxu0 0.0
    %106 = vmatprep.subr.mxu0 0.0
    %107 = vmatpush1.msra.mxu0 0.0
    %108 = vmatprep.subr.mxu0 0.0
    %109 = vmatpush1.msra.mxu0 0.0
    %110 = vmatprep.mubr.f32.mxu0 0.0
    %111 = vmatmul.mubr.f32.gmra.mrb[0].mxu0 %v37
    %v112 = vpop.f32.mrb[0].mxu0
    %v113 = vadd.f32 0.0, %v112
    %v114 = vpop.f32.mrb[0].mxu0
    %115 = vmatprep.mubr.f32.mxu0 0.0
    %116 = vmatmul.mubr.f32.gmra.mrb[0].mxu0 %v40
    %v117 = vpop.f32.mrb[0].mxu0
    %v118 = vadd.f32 0.0, %v117
    %v119 = vpop.f32.mrb[0].mxu0
    %120 = vdwg.mxu0
    %v121 = vlaneseq
    %v122 = vshrl.u32 %v121, 7
    %v123 = vsub.s32 0, %v122
    %v124 = vrot.slane %v34, %v123
    %vm125 = vcmask 130048
    %v127 = vsel %vm125, %v29, 0
    %v130 = vsel %vm125, %v30, 0
    %132 = vmatprep.subr.mxu0 0.0
    %133 = vmatpush1.msra.mxu0 %v113
    %134 = vmatprep.subr.mxu0 0.0
    %135 = vmatpush1.msra.mxu0 %v118
    %136 = vmatprep.subr.mxu0 0.0
    %137 = vmatpush1.msra.mxu0 0.0
    %138 = vmatprep.subr.mxu0 0.0
    %139 = vmatpush1.msra.mxu0 0.0
    %140 = vmatprep.subr.mxu0 0.0
    %141 = vmatpush1.msra.mxu0 0.0
    %142 = vmatprep.subr.mxu0 0.0
    %143 = vmatpush1.msra.mxu0 0.0
    %144 = vmatprep.subr.mxu0 0.0
    %145 = vmatpush1.msra.mxu0 0.0
    %146 = vmatprep.subr.mxu0 0.0
    %147 = vmatpush1.msra.mxu0 0.0
    %148 = vmatprep.subr.mxu0 0.0
    %149 = vmatpush1.msra.mxu0 0.0
    %150 = vmatprep.subr.mxu0 0.0
    %151 = vmatpush1.msra.mxu0 0.0
    %152 = vmatprep.subr.mxu0 0.0
    %153 = vmatpush1.msra.mxu0 0.0
    %154 = vmatprep.subr.mxu0 0.0
    %155 = vmatpush1.msra.mxu0 0.0
    %156 = vmatprep.subr.mxu0 0.0
    %157 = vmatpush1.msra.mxu0 0.0
    %158 = vmatprep.subr.mxu0 0.0
    %159 = vmatpush1.msra.mxu0 0.0
    %160 = vmatprep.subr.mxu0 0.0
    %161 = vmatpush1.msra.mxu0 0.0
    %162 = vmatprep.subr.mxu0 0.0
    %163 = vmatpush1.msra.mxu0 0.0
    %164 = vmatprep.subr.mxu0 0.0
    %165 = vmatpush1.msra.mxu0 0.0
    %166 = vmatprep.subr.mxu0 0.0
    %167 = vmatpush1.msra.mxu0 0.0
    %168 = vmatprep.subr.mxu0 0.0
    %169 = vmatpush1.msra.mxu0 0.0
    %170 = vmatprep.subr.mxu0 0.0
    %171 = vmatpush1.msra.mxu0 0.0
    %172 = vmatprep.subr.mxu0 0.0
    %173 = vmatpush1.msra.mxu0 0.0
    %174 = vmatprep.subr.mxu0 0.0
    %175 = vmatpush1.msra.mxu0 0.0
    %176 = vmatprep.subr.mxu0 0.0
    %177 = vmatpush1.msra.mxu0 0.0
    %178 = vmatprep.subr.mxu0 0.0
    %179 = vmatpush1.msra.mxu0 0.0
    %180 = vmatprep.subr.mxu0 0.0
    %181 = vmatpush1.msra.mxu0 0.0
    %182 = vmatprep.subr.mxu0 0.0
    %183 = vmatpush1.msra.mxu0 0.0
    %184 = vmatprep.subr.mxu0 0.0
    %185 = vmatpush1.msra.mxu0 0.0
    %186 = vmatprep.subr.mxu0 0.0
    %187 = vmatpush1.msra.mxu0 0.0
    %188 = vmatprep.subr.mxu0 0.0
    %189 = vmatpush1.msra.mxu0 0.0
    %190 = vmatprep.subr.mxu0 0.0
    %191 = vmatpush1.msra.mxu0 0.0
    %192 = vmatprep.subr.mxu0 0.0
    %193 = vmatpush1.msra.mxu0 0.0
    %194 = vmatprep.subr.mxu0 0.0
    %195 = vmatpush1.msra.mxu0 0.0
    %196 = vmatprep.mubr.f32.mxu0 0.0
    %197 = vmatmul.mubr.f32.gmra.mrb[0].mxu0 %v127
    %v198 = vpop.f32.mrb[0].mxu0
    %v199 = vadd.f32 %v124, %v198
    %v200 = vpop.f32.mrb[0].mxu0
    %201 = vmatprep.mubr.f32.mxu0 0.0
    %202 = vmatmul.mubr.f32.gmra.mrb[0].mxu0 %v130
    %v203 = vpop.f32.mrb[0].mxu0
    %v204 = vadd.f32 %v124, %v203
    %v205 = vpop.f32.mrb[0].mxu0
    %206 = vdwg.mxu0
    %v207 = vmax.f32 %v199, 0.0
    %v208 = vmax.f32 %v204, 0.0
    %v209 = vld [vmem:[#allocation2 + $0x10] sm:$0xff]
    %v210 = vld [vmem:[#allocation2 + $0x18] sm:$0xff]
    %v211 = vld [vmem:[#allocation2 + $0x20] sm:$0xff]
    %v212 = vld [vmem:[#allocation2 + $0x28] sm:$0xff]
    %v213 = vld [vmem:[#allocation2 + $0x30] sm:$0x1]
    %vm214 = vcmask 261120
    %v216 = vsel %vm214, %v207, 0
    %v219 = vsel %vm214, %v208, 0
    %221 = vmatprep.subr.mxu0 0.0
    %222 = vmatpush1.msra.mxu0 %v209
    %223 = vmatprep.subr.mxu0 0.0
    %224 = vmatpush1.msra.mxu0 %v210
    %225 = vmatprep.subr.mxu0 0.0
    %226 = vmatpush1.msra.mxu0 %v211
    %227 = vmatprep.subr.mxu0 0.0
    %228 = vmatpush1.msra.mxu0 %v212
    %229 = vmatprep.subr.mxu0 0.0
    %230 = vmatpush1.msra.mxu0 0.0
    %231 = vmatprep.subr.mxu0 0.0
    %232 = vmatpush1.msra.mxu0 0.0
    %233 = vmatprep.subr.mxu0 0.0
    %234 = vmatpush1.msra.mxu0 0.0
    %235 = vmatprep.subr.mxu0 0.0
    %236 = vmatpush1.msra.mxu0 0.0
    %237 = vmatprep.subr.mxu0 0.0
    %238 = vmatpush1.msra.mxu0 0.0
    %239 = vmatprep.subr.mxu0 0.0
    %240 = vmatpush1.msra.mxu0 0.0
    %241 = vmatprep.subr.mxu0 0.0
    %242 = vmatpush1.msra.mxu0 0.0
    %243 = vmatprep.subr.mxu0 0.0
    %244 = vmatpush1.msra.mxu0 0.0
    %245 = vmatprep.subr.mxu0 0.0
    %246 = vmatpush1.msra.mxu0 0.0
    %247 = vmatprep.subr.mxu0 0.0
    %248 = vmatpush1.msra.mxu0 0.0
    %249 = vmatprep.subr.mxu0 0.0
    %250 = vmatpush1.msra.mxu0 0.0
    %251 = vmatprep.subr.mxu0 0.0
    %252 = vmatpush1.msra.mxu0 0.0
    %253 = vmatprep.subr.mxu0 0.0
    %254 = vmatpush1.msra.mxu0 0.0
    %255 = vmatprep.subr.mxu0 0.0
    %256 = vmatpush1.msra.mxu0 0.0
    %257 = vmatprep.subr.mxu0 0.0
    %258 = vmatpush1.msra.mxu0 0.0
    %259 = vmatprep.subr.mxu0 0.0
    %260 = vmatpush1.msra.mxu0 0.0
    %261 = vmatprep.subr.mxu0 0.0
    %262 = vmatpush1.msra.mxu0 0.0
    %263 = vmatprep.subr.mxu0 0.0
    %264 = vmatpush1.msra.mxu0 0.0
    %265 = vmatprep.subr.mxu0 0.0
    %266 = vmatpush1.msra.mxu0 0.0
    %267 = vmatprep.subr.mxu0 0.0
    %268 = vmatpush1.msra.mxu0 0.0
    %269 = vmatprep.subr.mxu0 0.0
    %270 = vmatpush1.msra.mxu0 0.0
    %271 = vmatprep.subr.mxu0 0.0
    %272 = vmatpush1.msra.mxu0 0.0
    %273 = vmatprep.subr.mxu0 0.0
    %274 = vmatpush1.msra.mxu0 0.0
    %275 = vmatprep.subr.mxu0 0.0
    %276 = vmatpush1.msra.mxu0 0.0
    %277 = vmatprep.subr.mxu0 0.0
    %278 = vmatpush1.msra.mxu0 0.0
    %279 = vmatprep.subr.mxu0 0.0
    %280 = vmatpush1.msra.mxu0 0.0
    %281 = vmatprep.subr.mxu0 0.0
    %282 = vmatpush1.msra.mxu0 0.0
    %283 = vmatprep.subr.mxu0 0.0
    %284 = vmatpush1.msra.mxu0 0.0
    %285 = vmatprep.mubr.f32.mxu0 0.0
    %286 = vmatmul.mubr.f32.gmra.mrb[0].mxu0 %v216
    %v287 = vpop.f32.mrb[0].mxu0
    %v288 = vadd.f32 0.0, %v287
    %v289 = vpop.f32.mrb[0].mxu0
    %290 = vmatprep.mubr.f32.mxu0 0.0
    %291 = vmatmul.mubr.f32.gmra.mrb[0].mxu0 %v219
    %v292 = vpop.f32.mrb[0].mxu0
    %v293 = vadd.f32 0.0, %v292
    %v294 = vpop.f32.mrb[0].mxu0
    %295 = vdwg.mxu0
    %v296 = vlaneseq
    %v297 = vshrl.u32 %v296, 7
    %v298 = vsub.s32 0, %v297
    %v299 = vrot.slane %v213, %v298
    %300 = vmatprep.subr.mxu0 0.0
    %301 = vmatpush1.msra.mxu0 %v288
    %302 = vmatprep.subr.mxu0 0.0
    %303 = vmatpush1.msra.mxu0 %v293
    %304 = vmatprep.subr.mxu0 0.0
    %305 = vmatpush1.msra.mxu0 0.0
    %306 = vmatprep.subr.mxu0 0.0
    %307 = vmatpush1.msra.mxu0 0.0
    %308 = vmatprep.subr.mxu0 0.0
    %309 = vmatpush1.msra.mxu0 0.0
    %310 = vmatprep.subr.mxu0 0.0
    %311 = vmatpush1.msra.mxu0 0.0
    %312 = vmatprep.subr.mxu0 0.0
    %313 = vmatpush1.msra.mxu0 0.0
    %314 = vmatprep.subr.mxu0 0.0
    %315 = vmatpush1.msra.mxu0 0.0
    %316 = vmatprep.subr.mxu0 0.0
    %317 = vmatpush1.msra.mxu0 0.0
    %318 = vmatprep.subr.mxu0 0.0
    %319 = vmatpush1.msra.mxu0 0.0
    %320 = vmatprep.subr.mxu0 0.0
    %321 = vmatpush1.msra.mxu0 0.0
    %322 = vmatprep.subr.mxu0 0.0
    %323 = vmatpush1.msra.mxu0 0.0
    %324 = vmatprep.subr.mxu0 0.0
    %325 = vmatpush1.msra.mxu0 0.0
    %326 = vmatprep.subr.mxu0 0.0
    %327 = vmatpush1.msra.mxu0 0.0
    %328 = vmatprep.subr.mxu0 0.0
    %329 = vmatpush1.msra.mxu0 0.0
    %330 = vmatprep.subr.mxu0 0.0
    %331 = vmatpush1.msra.mxu0 0.0
    %332 = vmatprep.subr.mxu0 0.0
    %333 = vmatpush1.msra.mxu0 0.0
    %334 = vmatprep.subr.mxu0 0.0
    %335 = vmatpush1.msra.mxu0 0.0
    %336 = vmatprep.subr.mxu0 0.0
    %337 = vmatpush1.msra.mxu0 0.0
    %338 = vmatprep.subr.mxu0 0.0
    %339 = vmatpush1.msra.mxu0 0.0
    %340 = vmatprep.subr.mxu0 0.0
    %341 = vmatpush1.msra.mxu0 0.0
    %342 = vmatprep.subr.mxu0 0.0
    %343 = vmatpush1.msra.mxu0 0.0
    %344 = vmatprep.subr.mxu0 0.0
    %345 = vmatpush1.msra.mxu0 0.0
    %346 = vmatprep.subr.mxu0 0.0
    %347 = vmatpush1.msra.mxu0 0.0
    %348 = vmatprep.subr.mxu0 0.0
    %349 = vmatpush1.msra.mxu0 0.0
    %350 = vmatprep.subr.mxu0 0.0
    %351 = vmatpush1.msra.mxu0 0.0
    %352 = vmatprep.subr.mxu0 0.0
    %353 = vmatpush1.msra.mxu0 0.0
    %354 = vmatprep.subr.mxu0 0.0
    %355 = vmatpush1.msra.mxu0 0.0
    %356 = vmatprep.subr.mxu0 0.0
    %357 = vmatpush1.msra.mxu0 0.0
    %358 = vmatprep.subr.mxu0 0.0
    %359 = vmatpush1.msra.mxu0 0.0
    %360 = vmatprep.subr.mxu0 0.0
    %361 = vmatpush1.msra.mxu0 0.0
    %362 = vmatprep.subr.mxu0 0.0
    %363 = vmatpush1.msra.mxu0 0.0
    %364 = vmatprep.mubr.f32.mxu0 0.0
    %365 = vmatmul.mubr.f32.gmra.mrb[0].mxu0 %v127
    %v366 = vpop.f32.mrb[0].mxu0
    %v367 = vadd.f32 %v299, %v366
    %v368 = vpop.f32.mrb[0].mxu0
    %369 = vmatprep.mubr.f32.mxu0 0.0
    %370 = vmatmul.mubr.f32.gmra.mrb[0].mxu0 %v130
    %v371 = vpop.f32.mrb[0].mxu0
    %v372 = vadd.f32 %v299, %v371
    %v373 = vpop.f32.mrb[0].mxu0
    %374 = vdwg.mxu0
    %v375 = vlaneseq
    %v376 = vand.u32 %v375, 127
    %vm377 = vcmp.ge.s32.totalorder %v376, 96
    %v378 = vsel %vm377, 1.0, 0.5
    %v379 = vsel %vm377, 0.0, 0.5
    %v380 = vld [vmem:[#allocation2 + $0x38] sm:$0xff]
    %v381 = vld [vmem:[#allocation2 + $0x40] sm:$0xff]
    %v382 = vld [vmem:[#allocation2 + $0x48] sm:$0xff]
    %v383 = vld [vmem:[#allocation2 + $0x50] sm:$0xff]
    %v384 = vld [vmem:[#allocation2 + $0x58] sm:$0xff]
    %v385 = vld [vmem:[#allocation2 + $0x60] sm:$0xff]
    %v386 = vld [vmem:[#allocation2 + $0x68] sm:$0xff]
    %v387 = vld [vmem:[#allocation2 + $0x70] sm:$0xff]
    %v388 = vpack.c.bf16 %v385, %v384
    %v389 = vpack.c.bf16 %v387, %v386
    %v390 = vld [vmem:[#allocation2 + $0x78] sm:$0x1]
    %v391 = vlaneseq
    %v392 = vshrl.u32 %v391, 7
    %v393 = vsub.s32 0, %v392
    %v394 = vrot.slane %v390, %v393
    %v396 = vsel %vm214, %v367, 0
    %v399 = vsel %vm214, %v372, 0
    %401 = vmatprep.subr.mxu0 0.0
    %402 = vmatpush1.msra.mxu0 %v380
    %403 = vmatprep.subr.mxu0 0.0
    %404 = vmatpush1.msra.mxu0 %v381
    %405 = vmatprep.subr.mxu0 0.0
    %406 = vmatpush1.msra.mxu0 %v382
    %407 = vmatprep.subr.mxu0 0.0
    %408 = vmatpush1.msra.mxu0 %v383
    %409 = vmatprep.subr.mxu0 0.0
    %410 = vmatpush1.msra.mxu0 0.0
    %411 = vmatprep.subr.mxu0 0.0
    %412 = vmatpush1.msra.mxu0 0.0
    %413 = vmatprep.subr.mxu0 0.0
    %414 = vmatpush1.msra.mxu0 0.0
    %415 = vmatprep.subr.mxu0 0.0
    %416 = vmatpush1.msra.mxu0 0.0
    %417 = vmatprep.subr.mxu0 0.0
    %418 = vmatpush1.msra.mxu0 0.0
    %419 = vmatprep.subr.mxu0 0.0
    %420 = vmatpush1.msra.mxu0 0.0
    %421 = vmatprep.subr.mxu0 0.0
    %422 = vmatpush1.msra.mxu0 0.0
    %423 = vmatprep.subr.mxu0 0.0
    %424 = vmatpush1.msra.mxu0 0.0
    %425 = vmatprep.subr.mxu0 0.0
    %426 = vmatpush1.msra.mxu0 0.0
    %427 = vmatprep.subr.mxu0 0.0
    %428 = vmatpush1.msra.mxu0 0.0
    %429 = vmatprep.subr.mxu0 0.0
    %430 = vmatpush1.msra.mxu0 0.0
    %431 = vmatprep.subr.mxu0 0.0
    %432 = vmatpush1.msra.mxu0 0.0
    %433 = vmatprep.subr.mxu0 0.0
    %434 = vmatpush1.msra.mxu0 0.0
    %435 = vmatprep.subr.mxu0 0.0
    %436 = vmatpush1.msra.mxu0 0.0
    %437 = vmatprep.subr.mxu0 0.0
    %438 = vmatpush1.msra.mxu0 0.0
    %439 = vmatprep.subr.mxu0 0.0
    %440 = vmatpush1.msra.mxu0 0.0
    %441 = vmatprep.subr.mxu0 0.0
    %442 = vmatpush1.msra.mxu0 0.0
    %443 = vmatprep.subr.mxu0 0.0
    %444 = vmatpush1.msra.mxu0 0.0
    %445 = vmatprep.subr.mxu0 0.0
    %446 = vmatpush1.msra.mxu0 0.0
    %447 = vmatprep.subr.mxu0 0.0
    %448 = vmatpush1.msra.mxu0 0.0
    %449 = vmatprep.subr.mxu0 0.0
    %450 = vmatpush1.msra.mxu0 0.0
    %451 = vmatprep.subr.mxu0 0.0
    %452 = vmatpush1.msra.mxu0 0.0
    %453 = vmatprep.subr.mxu0 0.0
    %454 = vmatpush1.msra.mxu0 0.0
    %455 = vmatprep.subr.mxu0 0.0
    %456 = vmatpush1.msra.mxu0 0.0
    %457 = vmatprep.subr.mxu0 0.0
    %458 = vmatpush1.msra.mxu0 0.0
    %459 = vmatprep.subr.mxu0 0.0
    %460 = vmatpush1.msra.mxu0 0.0
    %461 = vmatprep.subr.mxu0 0.0
    %462 = vmatpush1.msra.mxu0 0.0
    %463 = vmatprep.subr.mxu0 0.0
    %464 = vmatpush1.msra.mxu0 0.0
    %465 = vmatprep.mubr.f32.mxu0 0.0
    %466 = vmatmul.mubr.f32.gmra.mrb[0].mxu0 %v396
    %v467 = vpop.f32.mrb[0].mxu0
    %v468 = vadd.f32 %v394, %v467
    %v469 = vpop.f32.mrb[0].mxu0
    %470 = vmatprep.mubr.f32.mxu0 0.0
    %471 = vmatmul.mubr.f32.gmra.mrb[0].mxu0 %v399
    %v472 = vpop.f32.mrb[0].mxu0
    %v473 = vadd.f32 %v394, %v472
    %v474 = vpop.f32.mrb[0].mxu0
    %475 = vdwg.mxu0
    %v476 = vld [vmem:[#allocation2 + $0x80] sm:$0xff]
    %v477 = vld [vmem:[#allocation2 + $0x88] sm:$0xff]
    %v478 = vld [vmem:[#allocation2 + $0x90] sm:$0xff]
    %v479 = vld [vmem:[#allocation2 + $0x98] sm:$0xff]
    %v480 = vld [vmem:[#allocation2 + $0xa0] sm:$0xff]
    %v481 = vld [vmem:[#allocation2 + $0xa8] sm:$0xff]
    %v482 = vld [vmem:[#allocation2 + $0xb0] sm:$0xff]
    %v483 = vld [vmem:[#allocation2 + $0xb8] sm:$0xff]
    %v484 = vpack.c.bf16 %v477, %v476
    %v485 = vpack.c.bf16 %v479, %v478
    %v486 = vpack.c.bf16 %v481, %v480
    %v487 = vpack.c.bf16 %v483, %v482
    %v488 = vld [vmem:[#allocation2 + $0xc0] sm:$0x1]
    %v490 = vsel %vm214, 0, 0
    %492 = vmatprep.subr.bf16.mxu0 0
    %493 = vmatpush1.bf16.msra.mxu0 %v388
    %494 = vmatprep.subr.bf16.mxu0 0
    %495 = vmatpush1.bf16.msra.mxu0 %v389
    %496 = vmatprep.subr.bf16.mxu0 0
    %497 = vmatpush1.bf16.msra.mxu0 0
    %498 = vmatprep.subr.bf16.mxu0 0
    %499 = vmatpush1.bf16.msra.mxu0 0
    %500 = vmatprep.subr.bf16.mxu0 0
    %501 = vmatpush1.bf16.msra.mxu0 0
    %502 = vmatprep.subr.bf16.mxu0 0
    %503 = vmatpush1.bf16.msra.mxu0 0
    %504 = vmatprep.subr.bf16.mxu0 0
    %505 = vmatpush1.bf16.msra.mxu0 0
    %506 = vmatprep.subr.bf16.mxu0 0
    %507 = vmatpush1.bf16.msra.mxu0 0
    %508 = vmatprep.subr.bf16.mxu0 0
    %509 = vmatpush1.bf16.msra.mxu0 0
    %510 = vmatprep.subr.bf16.mxu0 0
    %511 = vmatpush1.bf16.msra.mxu0 0
    %512 = vmatprep.subr.bf16.mxu0 0
    %513 = vmatpush1.bf16.msra.mxu0 0
    %514 = vmatprep.subr.bf16.mxu0 0
    %515 = vmatpush1.bf16.msra.mxu0 0
    %516 = vmatprep.subr.bf16.mxu0 0
    %517 = vmatpush1.bf16.msra.mxu0 0
    %518 = vmatprep.subr.bf16.mxu0 0
    %519 = vmatpush1.bf16.msra.mxu0 0
    %520 = vmatprep.subr.bf16.mxu0 0
    %521 = vmatpush1.bf16.msra.mxu0 0
    %522 = vmatprep.subr.bf16.mxu0 0
    %523 = vmatpush1.bf16.msra.mxu0 0
    %524 = vmatprep.mubr.bf16.mxu0 0
    %525 = vmatmul.mubr.bf16.gmra.mrb[0].mxu0 %v490
    %v526 = vpop.f32.mrb[0].mxu0
    %v527 = vadd.f32 0.0, %v526
    %v528 = vpop.f32.mrb[0].mxu0
    %v529 = vpop.f32.mrb[0].mxu0
    %v530 = vpop.f32.mrb[0].mxu0
    %531 = vdwg.mxu0
    %v532 = vadd.f32 %v468, %v527
    %v533 = vtanh.pop %v532
    %v534 = vmul.f32 %v533, %v378
    %v535 = vadd.f32 %v534, %v379
    %v536 = vmul.f32 %v535, 0.0
    %538 = vrot.lane.b32.xlu0 %v535, 32
    %v539 = vpop.permute.xlu0 %538
    %v541 = vmul.f32 %v535, %v539
    %543 = vrot.lane.b32.xlu0 %v541, 32
    %v544 = vpop.permute.xlu0 %543
    %v546 = vadd.f32 %v536, %v544
    %v547 = vtanh.pop %v546
    %549 = vrot.lane.b32.xlu0 %v547, 32
    %v550 = vpop.permute.xlu0 %549
    %v552 = vmul.f32 %v535, %v550
    %v553 = vpack.c.bf16 %v552, %v552
    %555 = vrot.lane.b32.xlu0 %v553, 64
    %v556 = vpop.permute.xlu0 %555
    %v558 = vsel %vm214, %v556, 0
    %560 = vmatprep.subr.bf16.mxu0 0
    %561 = vmatpush1.bf16.msra.mxu0 %v388
    %562 = vmatprep.subr.bf16.mxu0 0
    %563 = vmatpush1.bf16.msra.mxu0 %v389
    %564 = vmatprep.subr.bf16.mxu0 0
    %565 = vmatpush1.bf16.msra.mxu0 0
    %566 = vmatprep.subr.bf16.mxu0 0
    %567 = vmatpush1.bf16.msra.mxu0 0
    %568 = vmatprep.subr.bf16.mxu0 0
    %569 = vmatpush1.bf16.msra.mxu0 0
    %570 = vmatprep.subr.bf16.mxu0 0
    %571 = vmatpush1.bf16.msra.mxu0 0
    %572 = vmatprep.subr.bf16.mxu0 0
    %573 = vmatpush1.bf16.msra.mxu0 0
    %574 = vmatprep.subr.bf16.mxu0 0
    %575 = vmatpush1.bf16.msra.mxu0 0
    %576 = vmatprep.subr.bf16.mxu0 0
    %577 = vmatpush1.bf16.msra.mxu0 0
    %578 = vmatprep.subr.bf16.mxu0 0
    %579 = vmatpush1.bf16.msra.mxu0 0
    %580 = vmatprep.subr.bf16.mxu0 0
    %581 = vmatpush1.bf16.msra.mxu0 0
    %582 = vmatprep.subr.bf16.mxu0 0
    %583 = vmatpush1.bf16.msra.mxu0 0
    %584 = vmatprep.subr.bf16.mxu0 0
    %585 = vmatpush1.bf16.msra.mxu0 0
    %586 = vmatprep.subr.bf16.mxu0 0
    %587 = vmatpush1.bf16.msra.mxu0 0
    %588 = vmatprep.subr.bf16.mxu0 0
    %589 = vmatpush1.bf16.msra.mxu0 0
    %590 = vmatprep.subr.bf16.mxu0 0
    %591 = vmatpush1.bf16.msra.mxu0 0
    %592 = vmatprep.mubr.bf16.mxu0 0
    %593 = vmatmul.mubr.bf16.gmra.mrb[0].mxu0 %v558
    %v594 = vpop.f32.mrb[0].mxu0
    %v595 = vadd.f32 0.0, %v594
    %v596 = vpop.f32.mrb[0].mxu0
    %v597 = vpop.f32.mrb[0].mxu0
    %v598 = vpop.f32.mrb[0].mxu0
    %599 = vdwg.mxu0
    %v601 = vrot.slane %v595, 7
    %v603 = vadd.f32 %v468, %v601
    %v604 = vtanh.pop %v603
    %v605 = vmul.f32 %v604, %v378
    %v606 = vadd.f32 %v605, %v379
    %v608 = vrot.slane %v546, 7
    %v610 = vmul.f32 %v606, %v608
    %612 = vrot.lane.b32.xlu0 %v606, 32
    %v613 = vpop.permute.xlu0 %612
    %v615 = vmul.f32 %v606, %v613
    %617 = vrot.lane.b32.xlu0 %v615, 32
    %v618 = vpop.permute.xlu0 %617
    %v620 = vadd.f32 %v610, %v618
    %v621 = vtanh.pop %v620
    %623 = vrot.lane.b32.xlu0 %v621, 32
    %v624 = vpop.permute.xlu0 %623
    %v626 = vmul.f32 %v606, %v624
    %628 = vrot.lane.b32.xlu0 %v552, 64
    %v629 = vpop.permute.xlu0 %628
    %v631 = vsel %vm214, %v629, 0.0
    %v632 = vpack.c.bf16 %v631, %v631
    %vm633 = vcmask 523264
    %v635 = vsel %vm633, %v632, 0
    %637 = vmatprep.subr.bf16.mxu0 0
    %638 = vmatpush1.bf16.msra.mxu0 %v484
    %639 = vmatprep.subr.bf16.mxu0 0
    %640 = vmatpush1.bf16.msra.mxu0 %v485
    %641 = vmatprep.subr.bf16.mxu0 0
    %642 = vmatpush1.bf16.msra.mxu0 %v486
    %643 = vmatprep.subr.bf16.mxu0 0
    %644 = vmatpush1.bf16.msra.mxu0 %v487
    %645 = vmatprep.subr.bf16.mxu0 0
    %646 = vmatpush1.bf16.msra.mxu0 0
    %647 = vmatprep.subr.bf16.mxu0 0
    %648 = vmatpush1.bf16.msra.mxu0 0
    %649 = vmatprep.subr.bf16.mxu0 0
    %650 = vmatpush1.bf16.msra.mxu0 0
    %651 = vmatprep.subr.bf16.mxu0 0
    %652 = vmatpush1.bf16.msra.mxu0 0
    %653 = vmatprep.subr.bf16.mxu0 0
    %654 = vmatpush1.bf16.msra.mxu0 0
    %655 = vmatprep.subr.bf16.mxu0 0
    %656 = vmatpush1.bf16.msra.mxu0 0
    %657 = vmatprep.subr.bf16.mxu0 0
    %658 = vmatpush1.bf16.msra.mxu0 0
    %659 = vmatprep.subr.bf16.mxu0 0
    %660 = vmatpush1.bf16.msra.mxu0 0
    %661 = vmatprep.subr.bf16.mxu0 0
    %662 = vmatpush1.bf16.msra.mxu0 0
    %663 = vmatprep.subr.bf16.mxu0 0
    %664 = vmatpush1.bf16.msra.mxu0 0
    %665 = vmatprep.subr.bf16.mxu0 0
    %666 = vmatpush1.bf16.msra.mxu0 0
    %667 = vmatprep.subr.bf16.mxu0 0
    %668 = vmatpush1.bf16.msra.mxu0 0
    %669 = vmatprep.mubr.bf16.mxu0 0
    %670 = vmatmul.mubr.bf16.gmra.mrb[0].mxu0 %v635
    %v671 = vpop.f32.mrb[0].mxu0
    %v672 = vadd.f32 %v488, %v671
    %v673 = vpop.f32.mrb[0].mxu0
    %v674 = vpop.f32.mrb[0].mxu0
    %v675 = vpop.f32.mrb[0].mxu0
    %676 = vdwg.mxu0
    %v677 = vtanh.pop %v672
    %v678 = vmul.f32 %v677, %v378
    %v679 = vadd.f32 %v678, %v379
    %v680 = vmul.f32 %v679, 0.0
    %682 = vrot.lane.b32.xlu0 %v679, 32
    %v683 = vpop.permute.xlu0 %682
    %v685 = vmul.f32 %v679, %v683
    %687 = vrot.lane.b32.xlu0 %v685, 32
    %v688 = vpop.permute.xlu0 %687
    %v690 = vadd.f32 %v680, %v688
    %v691 = vtanh.pop %v690
    %693 = vrot.lane.b32.xlu0 %v691, 32
    %v694 = vpop.permute.xlu0 %693
    %v696 = vmul.f32 %v679, %v694
    %v697 = vpack.c.bf16 %v626, %v626
    %v699 = vshrl.u32 %v697, 16
    %701 = vrot.lane.b32.xlu0 %v699, 64
    %v702 = vpop.permute.xlu0 %701
    %v704 = vsel %vm214, %v702, 0
    %706 = vmatprep.subr.bf16.mxu0 0
    %707 = vmatpush1.bf16.msra.mxu0 %v388
    %708 = vmatprep.subr.bf16.mxu0 0
    %709 = vmatpush1.bf16.msra.mxu0 %v389
    %710 = vmatprep.subr.bf16.mxu0 0
    %711 = vmatpush1.bf16.msra.mxu0 0
    %712 = vmatprep.subr.bf16.mxu0 0
    %713 = vmatpush1.bf16.msra.mxu0 0
    %714 = vmatprep.subr.bf16.mxu0 0
    %715 = vmatpush1.bf16.msra.mxu0 0
    %716 = vmatprep.subr.bf16.mxu0 0
    %717 = vmatpush1.bf16.msra.mxu0 0
    %718 = vmatprep.subr.bf16.mxu0 0
    %719 = vmatpush1.bf16.msra.mxu0 0
    %720 = vmatprep.subr.bf16.mxu0 0
    %721 = vmatpush1.bf16.msra.mxu0 0
    %722 = vmatprep.subr.bf16.mxu0 0
    %723 = vmatpush1.bf16.msra.mxu0 0
    %724 = vmatprep.subr.bf16.mxu0 0
    %725 = vmatpush1.bf16.msra.mxu0 0
    %726 = vmatprep.subr.bf16.mxu0 0
    %727 = vmatpush1.bf16.msra.mxu0 0
    %728 = vmatprep.subr.bf16.mxu0 0
    %729 = vmatpush1.bf16.msra.mxu0 0
    %730 = vmatprep.subr.bf16.mxu0 0
    %731 = vmatpush1.bf16.msra.mxu0 0
    %732 = vmatprep.subr.bf16.mxu0 0
    %733 = vmatpush1.bf16.msra.mxu0 0
    %734 = vmatprep.subr.bf16.mxu0 0
    %735 = vmatpush1.bf16.msra.mxu0 0
    %736 = vmatprep.subr.bf16.mxu0 0
    %737 = vmatpush1.bf16.msra.mxu0 0
    %738 = vmatprep.mubr.bf16.mxu0 0
    %739 = vmatmul.mubr.bf16.gmra.mrb[0].mxu0 %v704
    %v740 = vpop.f32.mrb[0].mxu0
    %v741 = vadd.f32 0.0, %v740
    %v742 = vpop.f32.mrb[0].mxu0
    %v743 = vpop.f32.mrb[0].mxu0
    %v744 = vpop.f32.mrb[0].mxu0
    %745 = vdwg.mxu0
    %v747 = vrot.slane %v741, 6
    %v749 = vadd.f32 %v468, %v747
    %v750 = vtanh.pop %v749
    %v751 = vmul.f32 %v750, %v378
    %v752 = vadd.f32 %v751, %v379
    %v754 = vrot.slane %v620, 7
    %v756 = vmul.f32 %v752, %v754
    %758 = vrot.lane.b32.xlu0 %v752, 32
    %v759 = vpop.permute.xlu0 %758
    %v761 = vmul.f32 %v752, %v759
    %763 = vrot.lane.b32.xlu0 %v761, 32
    %v764 = vpop.permute.xlu0 %763
    %v766 = vadd.f32 %v756, %v764
    %v767 = vtanh.pop %v766
    %769 = vrot.lane.b32.xlu0 %v767, 32
    %v770 = vpop.permute.xlu0 %769
    %v772 = vmul.f32 %v752, %v770
    %774 = vrot.lane.b32.xlu0 %v626, 64
    %v775 = vpop.permute.xlu0 %774
    %v778 = vrot.slane %v696, 7
    %779 = vrot.lane.b32.xlu0 %v778, 96
    %v780 = vpop.permute.xlu0 %779
    %v782 = vsel %vm214, %v775, %v780
    %v783 = vpack.c.bf16 %v782, %v782
    %v785 = vshrl.u32 %v783, 16
    %v788 = vsel %vm633, %v785, 0
    %790 = vmatprep.subr.bf16.mxu0 0
    %791 = vmatpush1.bf16.msra.mxu0 %v484
    %792 = vmatprep.subr.bf16.mxu0 0
    %793 = vmatpush1.bf16.msra.mxu0 %v485
    %794 = vmatprep.subr.bf16.mxu0 0
    %795 = vmatpush1.bf16.msra.mxu0 %v486
    %796 = vmatprep.subr.bf16.mxu0 0
    %797 = vmatpush1.bf16.msra.mxu0 %v487
    %798 = vmatprep.subr.bf16.mxu0 0
    %799 = vmatpush1.bf16.msra.mxu0 0
    %800 = vmatprep.subr.bf16.mxu0 0
    %801 = vmatpush1.bf16.msra.mxu0 0
    %802 = vmatprep.subr.bf16.mxu0 0
    %803 = vmatpush1.bf16.msra.mxu0 0
    %804 = vmatprep.subr.bf16.mxu0 0
    %805 = vmatpush1.bf16.msra.mxu0 0
    %806 = vmatprep.subr.bf16.mxu0 0
    %807 = vmatpush1.bf16.msra.mxu0 0
    %808 = vmatprep.subr.bf16.mxu0 0
    %809 = vmatpush1.bf16.msra.mxu0 0
    %810 = vmatprep.subr.bf16.mxu0 0
    %811 = vmatpush1.bf16.msra.mxu0 0
    %812 = vmatprep.subr.bf16.mxu0 0
    %813 = vmatpush1.bf16.msra.mxu0 0
    %814 = vmatprep.subr.bf16.mxu0 0
    %815 = vmatpush1.bf16.msra.mxu0 0
    %816 = vmatprep.subr.bf16.mxu0 0
    %817 = vmatpush1.bf16.msra.mxu0 0
    %818 = vmatprep.subr.bf16.mxu0 0
    %819 = vmatpush1.bf16.msra.mxu0 0
    %820 = vmatprep.subr.bf16.mxu0 0
    %821 = vmatpush1.bf16.msra.mxu0 0
    %822 = vmatprep.mubr.bf16.mxu0 0
    %823 = vmatmul.mubr.bf16.gmra.mrb[0].mxu0 %v788
    %v824 = vpop.f32.mrb[0].mxu0
    %v825 = vadd.f32 %v488, %v824
    %v826 = vpop.f32.mrb[0].mxu0
    %v827 = vpop.f32.mrb[0].mxu0
    %v828 = vpop.f32.mrb[0].mxu0
    %829 = vdwg.mxu0
    %v830 = vtanh.pop %v825
    %v831 = vmul.f32 %v830, %v378
    %v832 = vadd.f32 %v831, %v379
    %v833 = vmul.f32 %v832, %v690
    %835 = vrot.lane.b32.xlu0 %v832, 32
    %v836 = vpop.permute.xlu0 %835
    %v838 = vmul.f32 %v832, %v836
    %840 = vrot.lane.b32.xlu0 %v838, 32
    %v841 = vpop.permute.xlu0 %840
    %v843 = vadd.f32 %v833, %v841
    %v844 = vtanh.pop %v843
    %846 = vrot.lane.b32.xlu0 %v844, 32
    %v847 = vpop.permute.xlu0 %846
    %v849 = vmul.f32 %v832, %v847
    %v850 = vpack.c.bf16 %v772, %v772
    %v852 = vrot.slane %v850, 1
    %853 = vrot.lane.b32.xlu0 %v852, 64
    %v854 = vpop.permute.xlu0 %853
    %v856 = vsel %vm214, %v854, 0
    %858 = vmatprep.subr.bf16.mxu0 0
    %859 = vmatpush1.bf16.msra.mxu0 %v388
    %860 = vmatprep.subr.bf16.mxu0 0
    %861 = vmatpush1.bf16.msra.mxu0 %v389
    %862 = vmatprep.subr.bf16.mxu0 0
    %863 = vmatpush1.bf16.msra.mxu0 0
    %864 = vmatprep.subr.bf16.mxu0 0
    %865 = vmatpush1.bf16.msra.mxu0 0
    %866 = vmatprep.subr.bf16.mxu0 0
    %867 = vmatpush1.bf16.msra.mxu0 0
    %868 = vmatprep.subr.bf16.mxu0 0
    %869 = vmatpush1.bf16.msra.mxu0 0
    %870 = vmatprep.subr.bf16.mxu0 0
    %871 = vmatpush1.bf16.msra.mxu0 0
    %872 = vmatprep.subr.bf16.mxu0 0
    %873 = vmatpush1.bf16.msra.mxu0 0
    %874 = vmatprep.subr.bf16.mxu0 0
    %875 = vmatpush1.bf16.msra.mxu0 0
    %876 = vmatprep.subr.bf16.mxu0 0
    %877 = vmatpush1.bf16.msra.mxu0 0
    %878 = vmatprep.subr.bf16.mxu0 0
    %879 = vmatpush1.bf16.msra.mxu0 0
    %880 = vmatprep.subr.bf16.mxu0 0
    %881 = vmatpush1.bf16.msra.mxu0 0
    %882 = vmatprep.subr.bf16.mxu0 0
    %883 = vmatpush1.bf16.msra.mxu0 0
    %884 = vmatprep.subr.bf16.mxu0 0
    %885 = vmatpush1.bf16.msra.mxu0 0
    %886 = vmatprep.subr.bf16.mxu0 0
    %887 = vmatpush1.bf16.msra.mxu0 0
    %888 = vmatprep.subr.bf16.mxu0 0
    %889 = vmatpush1.bf16.msra.mxu0 0
    %890 = vmatprep.mubr.bf16.mxu0 0
    %891 = vmatmul.mubr.bf16.gmra.mrb[0].mxu0 %v856
    %v892 = vpop.f32.mrb[0].mxu0
    %v893 = vadd.f32 0.0, %v892
    %v894 = vpop.f32.mrb[0].mxu0
    %v895 = vpop.f32.mrb[0].mxu0
    %v896 = vpop.f32.mrb[0].mxu0
    %897 = vdwg.mxu0
    %v899 = vrot.slane %v893, 5
    %v901 = vadd.f32 %v468, %v899
    %v902 = vtanh.pop %v901
    %v903 = vmul.f32 %v902, %v378
    %v904 = vadd.f32 %v903, %v379
    %v906 = vrot.slane %v766, 7
    %v908 = vmul.f32 %v904, %v906
    %910 = vrot.lane.b32.xlu0 %v904, 32
    %v911 = vpop.permute.xlu0 %910
    %v913 = vmul.f32 %v904, %v911
    %915 = vrot.lane.b32.xlu0 %v913, 32
    %v916 = vpop.permute.xlu0 %915
    %v918 = vadd.f32 %v908, %v916
    %v919 = vtanh.pop %v918
    %921 = vrot.lane.b32.xlu0 %v919, 32
    %v922 = vpop.permute.xlu0 %921
    %v924 = vmul.f32 %v904, %v922
    %926 = vrot.lane.b32.xlu0 %v772, 64
    %v927 = vpop.permute.xlu0 %926
    %v930 = vrot.slane %v849, 6
    %931 = vrot.lane.b32.xlu0 %v930, 96
    %v932 = vpop.permute.xlu0 %931
    %v934 = vsel %vm214, %v927, %v932
    %v935 = vpack.c.bf16 %v934, %v934
    %v937 = vrot.slane %v935, 1
    %v939 = vsel %vm633, %v937, 0
    %941 = vmatprep.subr.bf16.mxu0 0
    %942 = vmatpush1.bf16.msra.mxu0 %v484
    %943 = vmatprep.subr.bf16.mxu0 0
    %944 = vmatpush1.bf16.msra.mxu0 %v485
    %945 = vmatprep.subr.bf16.mxu0 0
    %946 = vmatpush1.bf16.msra.mxu0 %v486
    %947 = vmatprep.subr.bf16.mxu0 0
    %948 = vmatpush1.bf16.msra.mxu0 %v487
    %949 = vmatprep.subr.bf16.mxu0 0
    %950 = vmatpush1.bf16.msra.mxu0 0
    %951 = vmatprep.subr.bf16.mxu0 0
    %952 = vmatpush1.bf16.msra.mxu0 0
    %953 = vmatprep.subr.bf16.mxu0 0
    %954 = vmatpush1.bf16.msra.mxu0 0
    %955 = vmatprep.subr.bf16.mxu0 0
    %956 = vmatpush1.bf16.msra.mxu0 0
    %957 = vmatprep.subr.bf16.mxu0 0
    %958 = vmatpush1.bf16.msra.mxu0 0
    %959 = vmatprep.subr.bf16.mxu0 0
    %960 = vmatpush1.bf16.msra.mxu0 0
    %961 = vmatprep.subr.bf16.mxu0 0
    %962 = vmatpush1.bf16.msra.mxu0 0
    %963 = vmatprep.subr.bf16.mxu0 0
    %964 = vmatpush1.bf16.msra.mxu0 0
    %965 = vmatprep.subr.bf16.mxu0 0
    %966 = vmatpush1.bf16.msra.mxu0 0
    %967 = vmatprep.subr.bf16.mxu0 0
    %968 = vmatpush1.bf16.msra.mxu0 0
    %969 = vmatprep.subr.bf16.mxu0 0
    %970 = vmatpush1.bf16.msra.mxu0 0
    %971 = vmatprep.subr.bf16.mxu0 0
    %972 = vmatpush1.bf16.msra.mxu0 0
    %973 = vmatprep.mubr.bf16.mxu0 0
    %974 = vmatmul.mubr.bf16.gmra.mrb[0].mxu0 %v939
    %v975 = vpop.f32.mrb[0].mxu0
    %v976 = vadd.f32 %v488, %v975
    %v977 = vpop.f32.mrb[0].mxu0
    %v978 = vpop.f32.mrb[0].mxu0
    %v979 = vpop.f32.mrb[0].mxu0
    %980 = vdwg.mxu0
    %v981 = vtanh.pop %v976
    %v982 = vmul.f32 %v981, %v378
    %v983 = vadd.f32 %v982, %v379
    %v984 = vmul.f32 %v983, %v843
    %986 = vrot.lane.b32.xlu0 %v983, 32
    %v987 = vpop.permute.xlu0 %986
    %v989 = vmul.f32 %v983, %v987
    %991 = vrot.lane.b32.xlu0 %v989, 32
    %v992 = vpop.permute.xlu0 %991
    %v994 = vadd.f32 %v984, %v992
    %v995 = vtanh.pop %v994
    %997 = vrot.lane.b32.xlu0 %v995, 32
    %v998 = vpop.permute.xlu0 %997
    %v1000 = vmul.f32 %v983, %v998
    %v1001 = vpack.c.bf16 %v924, %v924
    %v1003 = vshrl.u32 %v1001, 16
    %v1005 = vrot.slane %v1003, 1
    %1006 = vrot.lane.b32.xlu0 %v1005, 64
    %v1007 = vpop.permute.xlu0 %1006
    %v1009 = vsel %vm214, %v1007, 0
    %1011 = vmatprep.subr.bf16.mxu0 0
    %1012 = vmatpush1.bf16.msra.mxu0 %v388
    %1013 = vmatprep.subr.bf16.mxu0 0
    %1014 = vmatpush1.bf16.msra.mxu0 %v389
    %1015 = vmatprep.subr.bf16.mxu0 0
    %1016 = vmatpush1.bf16.msra.mxu0 0
    %1017 = vmatprep.subr.bf16.mxu0 0
    %1018 = vmatpush1.bf16.msra.mxu0 0
    %1019 = vmatprep.subr.bf16.mxu0 0
    %1020 = vmatpush1.bf16.msra.mxu0 0
    %1021 = vmatprep.subr.bf16.mxu0 0
    %1022 = vmatpush1.bf16.msra.mxu0 0
    %1023 = vmatprep.subr.bf16.mxu0 0
    %1024 = vmatpush1.bf16.msra.mxu0 0
    %1025 = vmatprep.subr.bf16.mxu0 0
    %1026 = vmatpush1.bf16.msra.mxu0 0
    %1027 = vmatprep.subr.bf16.mxu0 0
    %1028 = vmatpush1.bf16.msra.mxu0 0
    %1029 = vmatprep.subr.bf16.mxu0 0
    %1030 = vmatpush1.bf16.msra.mxu0 0
    %1031 = vmatprep.subr.bf16.mxu0 0
    %1032 = vmatpush1.bf16.msra.mxu0 0
    %1033 = vmatprep.subr.bf16.mxu0 0
    %1034 = vmatpush1.bf16.msra.mxu0 0
    %1035 = vmatprep.subr.bf16.mxu0 0
    %1036 = vmatpush1.bf16.msra.mxu0 0
    %1037 = vmatprep.subr.bf16.mxu0 0
    %1038 = vmatpush1.bf16.msra.mxu0 0
    %1039 = vmatprep.subr.bf16.mxu0 0
    %1040 = vmatpush1.bf16.msra.mxu0 0
    %1041 = vmatprep.subr.bf16.mxu0 0
    %1042 = vmatpush1.bf16.msra.mxu0 0
    %1043 = vmatprep.mubr.bf16.mxu0 0
    %1044 = vmatmul.mubr.bf16.gmra.mrb[0].mxu0 %v1009
    %v1045 = vpop.f32.mrb[0].mxu0
    %v1046 = vadd.f32 0.0, %v1045
    %v1047 = vpop.f32.mrb[0].mxu0
    %v1048 = vpop.f32.mrb[0].mxu0
    %v1049 = vpop.f32.mrb[0].mxu0
    %1050 = vdwg.mxu0
    %v1052 = vrot.slane %v1046, 4
    %v1054 = vadd.f32 %v468, %v1052
    %v1055 = vtanh.pop %v1054
    %v1056 = vmul.f32 %v1055, %v378
    %v1057 = vadd.f32 %v1056, %v379
    %v1059 = vrot.slane %v918, 7
    %v1061 = vmul.f32 %v1057, %v1059
    %1063 = vrot.lane.b32.xlu0 %v1057, 32
    %v1064 = vpop.permute.xlu0 %1063
    %v1066 = vmul.f32 %v1057, %v1064
    %1068 = vrot.lane.b32.xlu0 %v1066, 32
    %v1069 = vpop.permute.xlu0 %1068
    %v1071 = vadd.f32 %v1061, %v1069
    %v1072 = vtanh.pop %v1071
    %1074 = vrot.lane.b32.xlu0 %v1072, 32
    %v1075 = vpop.permute.xlu0 %1074
    %v1077 = vmul.f32 %v1057, %v1075
    %1079 = vrot.lane.b32.xlu0 %v924, 64
    %v1080 = vpop.permute.xlu0 %1079
    %v1083 = vrot.slane %v1000, 5
    %1084 = vrot.lane.b32.xlu0 %v1083, 96
    %v1085 = vpop.permute.xlu0 %1084
    %v1087 = vsel %vm214, %v1080, %v1085
    %v1088 = vpack.c.bf16 %v1087, %v1087
    %v1090 = vshrl.u32 %v1088, 16
    %v1092 = vrot.slane %v1090, 1
    %v1094 = vsel %vm633, %v1092, 0
    %1096 = vmatprep.subr.bf16.mxu0 0
    %1097 = vmatpush1.bf16.msra.mxu0 %v484
    %1098 = vmatprep.subr.bf16.mxu0 0
    %1099 = vmatpush1.bf16.msra.mxu0 %v485
    %1100 = vmatprep.subr.bf16.mxu0 0
    %1101 = vmatpush1.bf16.msra.mxu0 %v486
    %1102 = vmatprep.subr.bf16.mxu0 0
    %1103 = vmatpush1.bf16.msra.mxu0 %v487
    %1104 = vmatprep.subr.bf16.mxu0 0
    %1105 = vmatpush1.bf16.msra.mxu0 0
    %1106 = vmatprep.subr.bf16.mxu0 0
    %1107 = vmatpush1.bf16.msra.mxu0 0
    %1108 = vmatprep.subr.bf16.mxu0 0
    %1109 = vmatpush1.bf16.msra.mxu0 0
    %1110 = vmatprep.subr.bf16.mxu0 0
    %1111 = vmatpush1.bf16.msra.mxu0 0
    %1112 = vmatprep.subr.bf16.mxu0 0
    %1113 = vmatpush1.bf16.msra.mxu0 0
    %1114 = vmatprep.subr.bf16.mxu0 0
    %1115 = vmatpush1.bf16.msra.mxu0 0
    %1116 = vmatprep.subr.bf16.mxu0 0
    %1117 = vmatpush1.bf16.msra.mxu0 0
    %1118 = vmatprep.subr.bf16.mxu0 0
    %1119 = vmatpush1.bf16.msra.mxu0 0
    %1120 = vmatprep.subr.bf16.mxu0 0
    %1121 = vmatpush1.bf16.msra.mxu0 0
    %1122 = vmatprep.subr.bf16.mxu0 0
    %1123 = vmatpush1.bf16.msra.mxu0 0
    %1124 = vmatprep.subr.bf16.mxu0 0
    %1125 = vmatpush1.bf16.msra.mxu0 0
    %1126 = vmatprep.subr.bf16.mxu0 0
    %1127 = vmatpush1.bf16.msra.mxu0 0
    %1128 = vmatprep.mubr.bf16.mxu0 0
    %1129 = vmatmul.mubr.bf16.gmra.mrb[0].mxu0 %v1094
    %v1130 = vpop.f32.mrb[0].mxu0
    %v1131 = vadd.f32 %v488, %v1130
    %v1132 = vpop.f32.mrb[0].mxu0
    %v1133 = vpop.f32.mrb[0].mxu0
    %v1134 = vpop.f32.mrb[0].mxu0
    %1135 = vdwg.mxu0
    %v1136 = vtanh.pop %v1131
    %v1137 = vmul.f32 %v1136, %v378
    %v1138 = vadd.f32 %v1137, %v379
    %v1139 = vmul.f32 %v1138, %v994
    %1141 = vrot.lane.b32.xlu0 %v1138, 32
    %v1142 = vpop.permute.xlu0 %1141
    %v1144 = vmul.f32 %v1138, %v1142
    %1146 = vrot.lane.b32.xlu0 %v1144, 32
    %v1147 = vpop.permute.xlu0 %1146
    %v1149 = vadd.f32 %v1139, %v1147
    %v1150 = vtanh.pop %v1149
    %1152 = vrot.lane.b32.xlu0 %v1150, 32
    %v1153 = vpop.permute.xlu0 %1152
    %v1155 = vmul.f32 %v1138, %v1153
    %v1156 = vpack.c.bf16 %v1077, %v1077
    %v1158 = vrot.slane %v1156, 2
    %1159 = vrot.lane.b32.xlu0 %v1158, 64
    %v1160 = vpop.permute.xlu0 %1159
    %v1162 = vsel %vm214, %v1160, 0
    %1164 = vmatprep.subr.bf16.mxu0 0
    %1165 = vmatpush1.bf16.msra.mxu0 %v388
    %1166 = vmatprep.subr.bf16.mxu0 0
    %1167 = vmatpush1.bf16.msra.mxu0 %v389
    %1168 = vmatprep.subr.bf16.mxu0 0
    %1169 = vmatpush1.bf16.msra.mxu0 0
    %1170 = vmatprep.subr.bf16.mxu0 0
    %1171 = vmatpush1.bf16.msra.mxu0 0
    %1172 = vmatprep.subr.bf16.mxu0 0
    %1173 = vmatpush1.bf16.msra.mxu0 0
    %1174 = vmatprep.subr.bf16.mxu0 0
    %1175 = vmatpush1.bf16.msra.mxu0 0
    %1176 = vmatprep.subr.bf16.mxu0 0
    %1177 = vmatpush1.bf16.msra.mxu0 0
    %1178 = vmatprep.subr.bf16.mxu0 0
    %1179 = vmatpush1.bf16.msra.mxu0 0
    %1180 = vmatprep.subr.bf16.mxu0 0
    %1181 = vmatpush1.bf16.msra.mxu0 0
    %1182 = vmatprep.subr.bf16.mxu0 0
    %1183 = vmatpush1.bf16.msra.mxu0 0
    %1184 = vmatprep.subr.bf16.mxu0 0
    %1185 = vmatpush1.bf16.msra.mxu0 0
    %1186 = vmatprep.subr.bf16.mxu0 0
    %1187 = vmatpush1.bf16.msra.mxu0 0
    %1188 = vmatprep.subr.bf16.mxu0 0
    %1189 = vmatpush1.bf16.msra.mxu0 0
    %1190 = vmatprep.subr.bf16.mxu0 0
    %1191 = vmatpush1.bf16.msra.mxu0 0
    %1192 = vmatprep.subr.bf16.mxu0 0
    %1193 = vmatpush1.bf16.msra.mxu0 0
    %1194 = vmatprep.subr.bf16.mxu0 0
    %1195 = vmatpush1.bf16.msra.mxu0 0
    %1196 = vmatprep.mubr.bf16.mxu0 0
    %1197 = vmatmul.mubr.bf16.gmra.mrb[0].mxu0 %v1162
    %v1198 = vpop.f32.mrb[0].mxu0
    %v1199 = vadd.f32 0.0, %v1198
    %v1200 = vpop.f32.mrb[0].mxu0
    %v1201 = vpop.f32.mrb[0].mxu0
    %v1202 = vpop.f32.mrb[0].mxu0
    %1203 = vdwg.mxu0
    %v1205 = vrot.slane %v1199, 3
    %v1207 = vadd.f32 %v468, %v1205
    %v1208 = vtanh.pop %v1207
    %v1209 = vmul.f32 %v1208, %v378
    %v1210 = vadd.f32 %v1209, %v379
    %v1212 = vrot.slane %v1071, 7
    %v1214 = vmul.f32 %v1210, %v1212
    %1216 = vrot.lane.b32.xlu0 %v1210, 32
    %v1217 = vpop.permute.xlu0 %1216
    %v1219 = vmul.f32 %v1210, %v1217
    %1221 = vrot.lane.b32.xlu0 %v1219, 32
    %v1222 = vpop.permute.xlu0 %1221
    %v1224 = vadd.f32 %v1214, %v1222
    %v1225 = vtanh.pop %v1224
    %1227 = vrot.lane.b32.xlu0 %v1225, 32
    %v1228 = vpop.permute.xlu0 %1227
    %v1230 = vmul.f32 %v1210, %v1228
    %1232 = vrot.lane.b32.xlu0 %v1077, 64
    %v1233 = vpop.permute.xlu0 %1232
    %v1236 = vrot.slane %v1155, 4
    %1237 = vrot.lane.b32.xlu0 %v1236, 96
    %v1238 = vpop.permute.xlu0 %1237
    %v1240 = vsel %vm214, %v1233, %v1238
    %v1241 = vpack.c.bf16 %v1240, %v1240
    %v1243 = vrot.slane %v1241, 2
    %v1245 = vsel %vm633, %v1243, 0
    %1247 = vmatprep.subr.bf16.mxu0 0
    %1248 = vmatpush1.bf16.msra.mxu0 %v484
    %1249 = vmatprep.subr.bf16.mxu0 0
    %1250 = vmatpush1.bf16.msra.mxu0 %v485
    %1251 = vmatprep.subr.bf16.mxu0 0
    %1252 = vmatpush1.bf16.msra.mxu0 %v486
    %1253 = vmatprep.subr.bf16.mxu0 0
    %1254 = vmatpush1.bf16.msra.mxu0 %v487
    %1255 = vmatprep.subr.bf16.mxu0 0
    %1256 = vmatpush1.bf16.msra.mxu0 0
    %1257 = vmatprep.subr.bf16.mxu0 0
    %1258 = vmatpush1.bf16.msra.mxu0 0
    %1259 = vmatprep.subr.bf16.mxu0 0
    %1260 = vmatpush1.bf16.msra.mxu0 0
    %1261 = vmatprep.subr.bf16.mxu0 0
    %1262 = vmatpush1.bf16.msra.mxu0 0
    %1263 = vmatprep.subr.bf16.mxu0 0
    %1264 = vmatpush1.bf16.msra.mxu0 0
    %1265 = vmatprep.subr.bf16.mxu0 0
    %1266 = vmatpush1.bf16.msra.mxu0 0
    %1267 = vmatprep.subr.bf16.mxu0 0
    %1268 = vmatpush1.bf16.msra.mxu0 0
    %1269 = vmatprep.subr.bf16.mxu0 0
    %1270 = vmatpush1.bf16.msra.mxu0 0
    %1271 = vmatprep.subr.bf16.mxu0 0
    %1272 = vmatpush1.bf16.msra.mxu0 0
    %1273 = vmatprep.subr.bf16.mxu0 0
    %1274 = vmatpush1.bf16.msra.mxu0 0
    %1275 = vmatprep.subr.bf16.mxu0 0
    %1276 = vmatpush1.bf16.msra.mxu0 0
    %1277 = vmatprep.subr.bf16.mxu0 0
    %1278 = vmatpush1.bf16.msra.mxu0 0
    %1279 = vmatprep.mubr.bf16.mxu0 0
    %1280 = vmatmul.mubr.bf16.gmra.mrb[0].mxu0 %v1245
    %v1281 = vpop.f32.mrb[0].mxu0
    %v1282 = vadd.f32 %v488, %v1281
    %v1283 = vpop.f32.mrb[0].mxu0
    %v1284 = vpop.f32.mrb[0].mxu0
    %v1285 = vpop.f32.mrb[0].mxu0
    %1286 = vdwg.mxu0
    %v1287 = vtanh.pop %v1282
    %v1288 = vmul.f32 %v1287, %v378
    %v1289 = vadd.f32 %v1288, %v379
    %v1290 = vmul.f32 %v1289, %v1149
    %1292 = vrot.lane.b32.xlu0 %v1289, 32
    %v1293 = vpop.permute.xlu0 %1292
    %v1295 = vmul.f32 %v1289, %v1293
    %1297 = vrot.lane.b32.xlu0 %v1295, 32
    %v1298 = vpop.permute.xlu0 %1297
    %v1300 = vadd.f32 %v1290, %v1298
    %v1301 = vtanh.pop %v1300
    %1303 = vrot.lane.b32.xlu0 %v1301, 32
    %v1304 = vpop.permute.xlu0 %1303
    %v1306 = vmul.f32 %v1289, %v1304
    %v1307 = vpack.c.bf16 %v1230, %v1230
    %v1309 = vshrl.u32 %v1307, 16
    %v1311 = vrot.slane %v1309, 2
    %1312 = vrot.lane.b32.xlu0 %v1311, 64
    %v1313 = vpop.permute.xlu0 %1312
    %v1315 = vsel %vm214, %v1313, 0
    %1317 = vmatprep.subr.bf16.mxu0 0
    %1318 = vmatpush1.bf16.msra.mxu0 %v388
    %1319 = vmatprep.subr.bf16.mxu0 0
    %1320 = vmatpush1.bf16.msra.mxu0 %v389
    %1321 = vmatprep.subr.bf16.mxu0 0
    %1322 = vmatpush1.bf16.msra.mxu0 0
    %1323 = vmatprep.subr.bf16.mxu0 0
    %1324 = vmatpush1.bf16.msra.mxu0 0
    %1325 = vmatprep.subr.bf16.mxu0 0
    %1326 = vmatpush1.bf16.msra.mxu0 0
    %1327 = vmatprep.subr.bf16.mxu0 0
    %1328 = vmatpush1.bf16.msra.mxu0 0
    %1329 = vmatprep.subr.bf16.mxu0 0
    %1330 = vmatpush1.bf16.msra.mxu0 0
    %1331 = vmatprep.subr.bf16.mxu0 0
    %1332 = vmatpush1.bf16.msra.mxu0 0
    %1333 = vmatprep.subr.bf16.mxu0 0
    %1334 = vmatpush1.bf16.msra.mxu0 0
    %1335 = vmatprep.subr.bf16.mxu0 0
    %1336 = vmatpush1.bf16.msra.mxu0 0
    %1337 = vmatprep.subr.bf16.mxu0 0
    %1338 = vmatpush1.bf16.msra.mxu0 0
    %1339 = vmatprep.subr.bf16.mxu0 0
    %1340 = vmatpush1.bf16.msra.mxu0 0
    %1341 = vmatprep.subr.bf16.mxu0 0
    %1342 = vmatpush1.bf16.msra.mxu0 0
    %1343 = vmatprep.subr.bf16.mxu0 0
    %1344 = vmatpush1.bf16.msra.mxu0 0
    %1345 = vmatprep.subr.bf16.mxu0 0
    %1346 = vmatpush1.bf16.msra.mxu0 0
    %1347 = vmatprep.subr.bf16.mxu0 0
    %1348 = vmatpush1.bf16.msra.mxu0 0
    %1349 = vmatprep.mubr.bf16.mxu0 0
    %1350 = vmatmul.mubr.bf16.gmra.mrb[0].mxu0 %v1315
    %v1351 = vpop.f32.mrb[0].mxu0
    %v1352 = vadd.f32 0.0, %v1351
    %v1353 = vpop.f32.mrb[0].mxu0
    %v1354 = vpop.f32.mrb[0].mxu0
    %v1355 = vpop.f32.mrb[0].mxu0
    %1356 = vdwg.mxu0
    %v1358 = vrot.slane %v1352, 2
    %v1360 = vadd.f32 %v468, %v1358
    %v1361 = vtanh.pop %v1360
    %v1362 = vmul.f32 %v1361, %v378
    %v1363 = vadd.f32 %v1362, %v379
    %v1365 = vrot.slane %v1224, 7
    %v1367 = vmul.f32 %v1363, %v1365
    %1369 = vrot.lane.b32.xlu0 %v1363, 32
    %v1370 = vpop.permute.xlu0 %1369
    %v1372 = vmul.f32 %v1363, %v1370
    %1374 = vrot.lane.b32.xlu0 %v1372, 32
    %v1375 = vpop.permute.xlu0 %1374
    %v1377 = vadd.f32 %v1367, %v1375
    %v1378 = vtanh.pop %v1377
    %1380 = vrot.lane.b32.xlu0 %v1378, 32
    %v1381 = vpop.permute.xlu0 %1380
    %v1383 = vmul.f32 %v1363, %v1381
    %1385 = vrot.lane.b32.xlu0 %v1230, 64
    %v1386 = vpop.permute.xlu0 %1385
    %v1389 = vrot.slane %v1306, 3
    %1390 = vrot.lane.b32.xlu0 %v1389, 96
    %v1391 = vpop.permute.xlu0 %1390
    %v1393 = vsel %vm214, %v1386, %v1391
    %v1394 = vpack.c.bf16 %v1393, %v1393
    %v1396 = vshrl.u32 %v1394, 16
    %v1398 = vrot.slane %v1396, 2
    %v1400 = vsel %vm633, %v1398, 0
    %1402 = vmatprep.subr.bf16.mxu0 0
    %1403 = vmatpush1.bf16.msra.mxu0 %v484
    %1404 = vmatprep.subr.bf16.mxu0 0
    %1405 = vmatpush1.bf16.msra.mxu0 %v485
    %1406 = vmatprep.subr.bf16.mxu0 0
    %1407 = vmatpush1.bf16.msra.mxu0 %v486
    %1408 = vmatprep.subr.bf16.mxu0 0
    %1409 = vmatpush1.bf16.msra.mxu0 %v487
    %1410 = vmatprep.subr.bf16.mxu0 0
    %1411 = vmatpush1.bf16.msra.mxu0 0
    %1412 = vmatprep.subr.bf16.mxu0 0
    %1413 = vmatpush1.bf16.msra.mxu0 0
    %1414 = vmatprep.subr.bf16.mxu0 0
    %1415 = vmatpush1.bf16.msra.mxu0 0
    %1416 = vmatprep.subr.bf16.mxu0 0
    %1417 = vmatpush1.bf16.msra.mxu0 0
    %1418 = vmatprep.subr.bf16.mxu0 0
    %1419 = vmatpush1.bf16.msra.mxu0 0
    %1420 = vmatprep.subr.bf16.mxu0 0
    %1421 = vmatpush1.bf16.msra.mxu0 0
    %1422 = vmatprep.subr.bf16.mxu0 0
    %1423 = vmatpush1.bf16.msra.mxu0 0
    %1424 = vmatprep.subr.bf16.mxu0 0
    %1425 = vmatpush1.bf16.msra.mxu0 0
    %1426 = vmatprep.subr.bf16.mxu0 0
    %1427 = vmatpush1.bf16.msra.mxu0 0
    %1428 = vmatprep.subr.bf16.mxu0 0
    %1429 = vmatpush1.bf16.msra.mxu0 0
    %1430 = vmatprep.subr.bf16.mxu0 0
    %1431 = vmatpush1.bf16.msra.mxu0 0
    %1432 = vmatprep.subr.bf16.mxu0 0
    %1433 = vmatpush1.bf16.msra.mxu0 0
    %1434 = vmatprep.mubr.bf16.mxu0 0
    %1435 = vmatmul.mubr.bf16.gmra.mrb[0].mxu0 %v1400
    %v1436 = vpop.f32.mrb[0].mxu0
    %v1437 = vadd.f32 %v488, %v1436
    %v1438 = vpop.f32.mrb[0].mxu0
    %v1439 = vpop.f32.mrb[0].mxu0
    %v1440 = vpop.f32.mrb[0].mxu0
    %1441 = vdwg.mxu0
    %v1442 = vtanh.pop %v1437
    %v1443 = vmul.f32 %v1442, %v378
    %v1444 = vadd.f32 %v1443, %v379
    %v1445 = vmul.f32 %v1444, %v1300
    %1447 = vrot.lane.b32.xlu0 %v1444, 32
    %v1448 = vpop.permute.xlu0 %1447
    %v1450 = vmul.f32 %v1444, %v1448
    %1452 = vrot.lane.b32.xlu0 %v1450, 32
    %v1453 = vpop.permute.xlu0 %1452
    %v1455 = vadd.f32 %v1445, %v1453
    %v1456 = vtanh.pop %v1455
    %1458 = vrot.lane.b32.xlu0 %v1456, 32
    %v1459 = vpop.permute.xlu0 %1458
    %v1461 = vmul.f32 %v1444, %v1459
    %v1462 = vpack.c.bf16 %v1383, %v1383
    %v1464 = vrot.slane %v1462, 3
    %1465 = vrot.lane.b32.xlu0 %v1464, 64
    %v1466 = vpop.permute.xlu0 %1465
    %v1468 = vsel %vm214, %v1466, 0
    %1470 = vmatprep.subr.bf16.mxu0 0
    %1471 = vmatpush1.bf16.msra.mxu0 %v388
    %1472 = vmatprep.subr.bf16.mxu0 0
    %1473 = vmatpush1.bf16.msra.mxu0 %v389
    %1474 = vmatprep.subr.bf16.mxu0 0
    %1475 = vmatpush1.bf16.msra.mxu0 0
    %1476 = vmatprep.subr.bf16.mxu0 0
    %1477 = vmatpush1.bf16.msra.mxu0 0
    %1478 = vmatprep.subr.bf16.mxu0 0
    %1479 = vmatpush1.bf16.msra.mxu0 0
    %1480 = vmatprep.subr.bf16.mxu0 0
    %1481 = vmatpush1.bf16.msra.mxu0 0
    %1482 = vmatprep.subr.bf16.mxu0 0
    %1483 = vmatpush1.bf16.msra.mxu0 0
    %1484 = vmatprep.subr.bf16.mxu0 0
    %1485 = vmatpush1.bf16.msra.mxu0 0
    %1486 = vmatprep.subr.bf16.mxu0 0
    %1487 = vmatpush1.bf16.msra.mxu0 0
    %1488 = vmatprep.subr.bf16.mxu0 0
    %1489 = vmatpush1.bf16.msra.mxu0 0
    %1490 = vmatprep.subr.bf16.mxu0 0
    %1491 = vmatpush1.bf16.msra.mxu0 0
    %1492 = vmatprep.subr.bf16.mxu0 0
    %1493 = vmatpush1.bf16.msra.mxu0 0
    %1494 = vmatprep.subr.bf16.mxu0 0
    %1495 = vmatpush1.bf16.msra.mxu0 0
    %1496 = vmatprep.subr.bf16.mxu0 0
    %1497 = vmatpush1.bf16.msra.mxu0 0
    %1498 = vmatprep.subr.bf16.mxu0 0
    %1499 = vmatpush1.bf16.msra.mxu0 0
    %1500 = vmatprep.subr.bf16.mxu0 0
    %1501 = vmatpush1.bf16.msra.mxu0 0
    %1502 = vmatprep.mubr.bf16.mxu0 0
    %1503 = vmatmul.mubr.bf16.gmra.mrb[0].mxu0 %v1468
    %v1504 = vpop.f32.mrb[0].mxu0
    %v1505 = vadd.f32 0.0, %v1504
    %v1506 = vpop.f32.mrb[0].mxu0
    %v1507 = vpop.f32.mrb[0].mxu0
    %v1508 = vpop.f32.mrb[0].mxu0
    %1509 = vdwg.mxu0
    %v1511 = vrot.slane %v1505, 1
    %v1513 = vadd.f32 %v468, %v1511
    %v1514 = vtanh.pop %v1513
    %v1515 = vmul.f32 %v1514, %v378
    %v1516 = vadd.f32 %v1515, %v379
    %v1518 = vrot.slane %v1377, 7
    %v1520 = vmul.f32 %v1516, %v1518
    %1522 = vrot.lane.b32.xlu0 %v1516, 32
    %v1523 = vpop.permute.xlu0 %1522
    %v1525 = vmul.f32 %v1516, %v1523
    %1527 = vrot.lane.b32.xlu0 %v1525, 32
    %v1528 = vpop.permute.xlu0 %1527
    %v1530 = vadd.f32 %v1520, %v1528
    %v1531 = vtanh.pop %v1530
    %1533 = vrot.lane.b32.xlu0 %v1531, 32
    %v1534 = vpop.permute.xlu0 %1533
    %v1536 = vmul.f32 %v1516, %v1534
    %1538 = vrot.lane.b32.xlu0 %v1383, 64
    %v1539 = vpop.permute.xlu0 %1538
    %v1542 = vrot.slane %v1461, 2
    %1543 = vrot.lane.b32.xlu0 %v1542, 96
    %v1544 = vpop.permute.xlu0 %1543
    %v1546 = vsel %vm214, %v1539, %v1544
    %v1547 = vpack.c.bf16 %v1546, %v1546
    %v1549 = vrot.slane %v1547, 3
    %v1551 = vsel %vm633, %v1549, 0
    %1553 = vmatprep.subr.bf16.mxu0 0
    %1554 = vmatpush1.bf16.msra.mxu0 %v484
    %1555 = vmatprep.subr.bf16.mxu0 0
    %1556 = vmatpush1.bf16.msra.mxu0 %v485
    %1557 = vmatprep.subr.bf16.mxu0 0
    %1558 = vmatpush1.bf16.msra.mxu0 %v486
    %1559 = vmatprep.subr.bf16.mxu0 0
    %1560 = vmatpush1.bf16.msra.mxu0 %v487
    %1561 = vmatprep.subr.bf16.mxu0 0
    %1562 = vmatpush1.bf16.msra.mxu0 0
    %1563 = vmatprep.subr.bf16.mxu0 0
    %1564 = vmatpush1.bf16.msra.mxu0 0
    %1565 = vmatprep.subr.bf16.mxu0 0
    %1566 = vmatpush1.bf16.msra.mxu0 0
    %1567 = vmatprep.subr.bf16.mxu0 0
    %1568 = vmatpush1.bf16.msra.mxu0 0
    %1569 = vmatprep.subr.bf16.mxu0 0
    %1570 = vmatpush1.bf16.msra.mxu0 0
    %1571 = vmatprep.subr.bf16.mxu0 0
    %1572 = vmatpush1.bf16.msra.mxu0 0
    %1573 = vmatprep.subr.bf16.mxu0 0
    %1574 = vmatpush1.bf16.msra.mxu0 0
    %1575 = vmatprep.subr.bf16.mxu0 0
    %1576 = vmatpush1.bf16.msra.mxu0 0
    %1577 = vmatprep.subr.bf16.mxu0 0
    %1578 = vmatpush1.bf16.msra.mxu0 0
    %1579 = vmatprep.subr.bf16.mxu0 0
    %1580 = vmatpush1.bf16.msra.mxu0 0
    %1581 = vmatprep.subr.bf16.mxu0 0
    %1582 = vmatpush1.bf16.msra.mxu0 0
    %1583 = vmatprep.subr.bf16.mxu0 0
    %1584 = vmatpush1.bf16.msra.mxu0 0
    %1585 = vmatprep.mubr.bf16.mxu0 0
    %1586 = vmatmul.mubr.bf16.gmra.mrb[0].mxu0 %v1551
    %v1587 = vpop.f32.mrb[0].mxu0
    %v1588 = vadd.f32 %v488, %v1587
    %v1589 = vpop.f32.mrb[0].mxu0
    %v1590 = vpop.f32.mrb[0].mxu0
    %v1591 = vpop.f32.mrb[0].mxu0
    %1592 = vdwg.mxu0
    %v1593 = vtanh.pop %v1588
    %v1594 = vmul.f32 %v1593, %v378
    %v1595 = vadd.f32 %v1594, %v379
    %v1596 = vmul.f32 %v1595, %v1455
    %1598 = vrot.lane.b32.xlu0 %v1595, 32
    %v1599 = vpop.permute.xlu0 %1598
    %v1601 = vmul.f32 %v1595, %v1599
    %1603 = vrot.lane.b32.xlu0 %v1601, 32
    %v1604 = vpop.permute.xlu0 %1603
    %v1606 = vadd.f32 %v1596, %v1604
    %v1607 = vtanh.pop %v1606
    %1609 = vrot.lane.b32.xlu0 %v1607, 32
    %v1610 = vpop.permute.xlu0 %1609
    %v1612 = vmul.f32 %v1595, %v1610
    %v1613 = vpack.c.bf16 %v1536, %v1536
    %v1615 = vshrl.u32 %v1613, 16
    %v1617 = vrot.slane %v1615, 3
    %1618 = vrot.lane.b32.xlu0 %v1617, 64
    %v1619 = vpop.permute.xlu0 %1618
    %v1621 = vsel %vm214, %v1619, 0
    %1623 = vmatprep.subr.bf16.mxu0 0
    %1624 = vmatpush1.bf16.msra.mxu0 %v388
    %1625 = vmatprep.subr.bf16.mxu0 0
    %1626 = vmatpush1.bf16.msra.mxu0 %v389
    %1627 = vmatprep.subr.bf16.mxu0 0
    %1628 = vmatpush1.bf16.msra.mxu0 0
    %1629 = vmatprep.subr.bf16.mxu0 0
    %1630 = vmatpush1.bf16.msra.mxu0 0
    %1631 = vmatprep.subr.bf16.mxu0 0
    %1632 = vmatpush1.bf16.msra.mxu0 0
    %1633 = vmatprep.subr.bf16.mxu0 0
    %1634 = vmatpush1.bf16.msra.mxu0 0
    %1635 = vmatprep.subr.bf16.mxu0 0
    %1636 = vmatpush1.bf16.msra.mxu0 0
    %1637 = vmatprep.subr.bf16.mxu0 0
    %1638 = vmatpush1.bf16.msra.mxu0 0
    %1639 = vmatprep.subr.bf16.mxu0 0
    %1640 = vmatpush1.bf16.msra.mxu0 0
    %1641 = vmatprep.subr.bf16.mxu0 0
    %1642 = vmatpush1.bf16.msra.mxu0 0
    %1643 = vmatprep.subr.bf16.mxu0 0
    %1644 = vmatpush1.bf16.msra.mxu0 0
    %1645 = vmatprep.subr.bf16.mxu0 0
    %1646 = vmatpush1.bf16.msra.mxu0 0
    %1647 = vmatprep.subr.bf16.mxu0 0
    %1648 = vmatpush1.bf16.msra.mxu0 0
    %1649 = vmatprep.subr.bf16.mxu0 0
    %1650 = vmatpush1.bf16.msra.mxu0 0
    %1651 = vmatprep.subr.bf16.mxu0 0
    %1652 = vmatpush1.bf16.msra.mxu0 0
    %1653 = vmatprep.subr.bf16.mxu0 0
    %1654 = vmatpush1.bf16.msra.mxu0 0
    %1655 = vmatprep.mubr.bf16.mxu0 0
    %1656 = vmatmul.mubr.bf16.gmra.mrb[0].mxu0 %v1621
    %v1657 = vpop.f32.mrb[0].mxu0
    %v1658 = vadd.f32 0.0, %v1657
    %v1659 = vpop.f32.mrb[0].mxu0
    %v1660 = vpop.f32.mrb[0].mxu0
    %v1661 = vpop.f32.mrb[0].mxu0
    %1662 = vdwg.mxu0
    %v1663 = vadd.f32 %v473, %v1658
    %v1664 = vtanh.pop %v1663
    %v1665 = vmul.f32 %v1664, %v378
    %v1666 = vadd.f32 %v1665, %v379
    %v1668 = vrot.slane %v1530, 7
    %v1670 = vmul.f32 %v1666, %v1668
    %1672 = vrot.lane.b32.xlu0 %v1666, 32
    %v1673 = vpop.permute.xlu0 %1672
    %v1675 = vmul.f32 %v1666, %v1673
    %1677 = vrot.lane.b32.xlu0 %v1675, 32
    %v1678 = vpop.permute.xlu0 %1677
    %v1680 = vadd.f32 %v1670, %v1678
    %v1681 = vtanh.pop %v1680
    %1683 = vrot.lane.b32.xlu0 %v1681, 32
    %v1684 = vpop.permute.xlu0 %1683
    %v1686 = vmul.f32 %v1666, %v1684
    %1688 = vrot.lane.b32.xlu0 %v1536, 64
    %v1689 = vpop.permute.xlu0 %1688
    %v1692 = vrot.slane %v1612, 1
    %1693 = vrot.lane.b32.xlu0 %v1692, 96
    %v1694 = vpop.permute.xlu0 %1693
    %v1696 = vsel %vm214, %v1689, %v1694
    %v1697 = vpack.c.bf16 %v1696, %v1696
    %v1699 = vshrl.u32 %v1697, 16
    %v1701 = vrot.slane %v1699, 3
    %v1703 = vsel %vm633, %v1701, 0
    %1705 = vmatprep.subr.bf16.mxu0 0
    %1706 = vmatpush1.bf16.msra.mxu0 %v484
    %1707 = vmatprep.subr.bf16.mxu0 0
    %1708 = vmatpush1.bf16.msra.mxu0 %v485
    %1709 = vmatprep.subr.bf16.mxu0 0
    %1710 = vmatpush1.bf16.msra.mxu0 %v486
    %1711 = vmatprep.subr.bf16.mxu0 0
    %1712 = vmatpush1.bf16.msra.mxu0 %v487
    %1713 = vmatprep.subr.bf16.mxu0 0
    %1714 = vmatpush1.bf16.msra.mxu0 0
    %1715 = vmatprep.subr.bf16.mxu0 0
    %1716 = vmatpush1.bf16.msra.mxu0 0
    %1717 = vmatprep.subr.bf16.mxu0 0
    %1718 = vmatpush1.bf16.msra.mxu0 0
    %1719 = vmatprep.subr.bf16.mxu0 0
    %1720 = vmatpush1.bf16.msra.mxu0 0
    %1721 = vmatprep.subr.bf16.mxu0 0
    %1722 = vmatpush1.bf16.msra.mxu0 0
    %1723 = vmatprep.subr.bf16.mxu0 0
    %1724 = vmatpush1.bf16.msra.mxu0 0
    %1725 = vmatprep.subr.bf16.mxu0 0
    %1726 = vmatpush1.bf16.msra.mxu0 0
    %1727 = vmatprep.subr.bf16.mxu0 0
    %1728 = vmatpush1.bf16.msra.mxu0 0
    %1729 = vmatprep.subr.bf16.mxu0 0
    %1730 = vmatpush1.bf16.msra.mxu0 0
    %1731 = vmatprep.subr.bf16.mxu0 0
    %1732 = vmatpush1.bf16.msra.mxu0 0
    %1733 = vmatprep.subr.bf16.mxu0 0
    %1734 = vmatpush1.bf16.msra.mxu0 0
    %1735 = vmatprep.subr.bf16.mxu0 0
    %1736 = vmatpush1.bf16.msra.mxu0 0
    %1737 = vmatprep.mubr.bf16.mxu0 0
    %1738 = vmatmul.mubr.bf16.gmra.mrb[0].mxu0 %v1703
    %v1739 = vpop.f32.mrb[0].mxu0
    %v1740 = vadd.f32 %v488, %v1739
    %v1741 = vpop.f32.mrb[0].mxu0
    %v1742 = vpop.f32.mrb[0].mxu0
    %v1743 = vpop.f32.mrb[0].mxu0
    %1744 = vdwg.mxu0
    %v1745 = vtanh.pop %v1740
    %v1746 = vmul.f32 %v1745, %v378
    %v1747 = vadd.f32 %v1746, %v379
    %v1748 = vmul.f32 %v1747, %v1606
    %1750 = vrot.lane.b32.xlu0 %v1747, 32
    %v1751 = vpop.permute.xlu0 %1750
    %v1753 = vmul.f32 %v1747, %v1751
    %1755 = vrot.lane.b32.xlu0 %v1753, 32
    %v1756 = vpop.permute.xlu0 %1755
    %v1758 = vadd.f32 %v1748, %v1756
    %v1759 = vtanh.pop %v1758
    %1761 = vrot.lane.b32.xlu0 %v1759, 32
    %v1762 = vpop.permute.xlu0 %1761
    %v1764 = vmul.f32 %v1747, %v1762
    %v1765 = vpack.c.bf16 %v1686, %v1686
    %1767 = vrot.lane.b32.xlu0 %v1765, 64
    %v1768 = vpop.permute.xlu0 %1767
    %v1770 = vsel %vm214, %v1768, 0
    %1772 = vmatprep.subr.bf16.mxu0 0
    %1773 = vmatpush1.bf16.msra.mxu0 %v388
    %1774 = vmatprep.subr.bf16.mxu0 0
    %1775 = vmatpush1.bf16.msra.mxu0 %v389
    %1776 = vmatprep.subr.bf16.mxu0 0
    %1777 = vmatpush1.bf16.msra.mxu0 0
    %1778 = vmatprep.subr.bf16.mxu0 0
    %1779 = vmatpush1.bf16.msra.mxu0 0
    %1780 = vmatprep.subr.bf16.mxu0 0
    %1781 = vmatpush1.bf16.msra.mxu0 0
    %1782 = vmatprep.subr.bf16.mxu0 0
    %1783 = vmatpush1.bf16.msra.mxu0 0
    %1784 = vmatprep.subr.bf16.mxu0 0
    %1785 = vmatpush1.bf16.msra.mxu0 0
    %1786 = vmatprep.subr.bf16.mxu0 0
    %1787 = vmatpush1.bf16.msra.mxu0 0
    %1788 = vmatprep.subr.bf16.mxu0 0
    %1789 = vmatpush1.bf16.msra.mxu0 0
    %1790 = vmatprep.subr.bf16.mxu0 0
    %1791 = vmatpush1.bf16.msra.mxu0 0
    %1792 = vmatprep.subr.bf16.mxu0 0
    %1793 = vmatpush1.bf16.msra.mxu0 0
    %1794 = vmatprep.subr.bf16.mxu0 0
    %1795 = vmatpush1.bf16.msra.mxu0 0
    %1796 = vmatprep.subr.bf16.mxu0 0
    %1797 = vmatpush1.bf16.msra.mxu0 0
    %1798 = vmatprep.subr.bf16.mxu0 0
    %1799 = vmatpush1.bf16.msra.mxu0 0
    %1800 = vmatprep.subr.bf16.mxu0 0
    %1801 = vmatpush1.bf16.msra.mxu0 0
    %1802 = vmatprep.subr.bf16.mxu0 0
    %1803 = vmatpush1.bf16.msra.mxu0 0
    %1804 = vmatprep.mubr.bf16.mxu0 0
    %1805 = vmatmul.mubr.bf16.gmra.mrb[0].mxu0 %v1770
    %v1806 = vpop.f32.mrb[0].mxu0
    %v1807 = vadd.f32 0.0, %v1806
    %v1808 = vpop.f32.mrb[0].mxu0
    %v1809 = vpop.f32.mrb[0].mxu0
    %v1810 = vpop.f32.mrb[0].mxu0
    %1811 = vdwg.mxu0
    %v1813 = vrot.slane %v1807, 7
    %v1815 = vadd.f32 %v473, %v1813
    %v1816 = vtanh.pop %v1815
    %v1817 = vmul.f32 %v1816, %v378
    %v1818 = vadd.f32 %v1817, %v379
    %v1820 = vrot.slane %v1680, 7
    %v1822 = vmul.f32 %v1818, %v1820
    %1824 = vrot.lane.b32.xlu0 %v1818, 32
    %v1825 = vpop.permute.xlu0 %1824
    %v1827 = vmul.f32 %v1818, %v1825
    %1829 = vrot.lane.b32.xlu0 %v1827, 32
    %v1830 = vpop.permute.xlu0 %1829
    %v1832 = vadd.f32 %v1822, %v1830
    %v1833 = vtanh.pop %v1832
    %1835 = vrot.lane.b32.xlu0 %v1833, 32
    %v1836 = vpop.permute.xlu0 %1835
    %v1838 = vmul.f32 %v1818, %v1836
    %1840 = vrot.lane.b32.xlu0 %v1686, 64
    %v1841 = vpop.permute.xlu0 %1840
    %1844 = vrot.lane.b32.xlu0 %v1764, 96
    %v1845 = vpop.permute.xlu0 %1844
    %v1847 = vsel %vm214, %v1841, %v1845
    %v1848 = vpack.c.bf16 %v1847, %v1847
    %v1850 = vsel %vm633, %v1848, 0
    %1852 = vmatprep.subr.bf16.mxu0 0
    %1853 = vmatpush1.bf16.msra.mxu0 %v484
    %1854 = vmatprep.subr.bf16.mxu0 0
    %1855 = vmatpush1.bf16.msra.mxu0 %v485
    %1856 = vmatprep.subr.bf16.mxu0 0
    %1857 = vmatpush1.bf16.msra.mxu0 %v486
    %1858 = vmatprep.subr.bf16.mxu0 0
    %1859 = vmatpush1.bf16.msra.mxu0 %v487
    %1860 = vmatprep.subr.bf16.mxu0 0
    %1861 = vmatpush1.bf16.msra.mxu0 0
    %1862 = vmatprep.subr.bf16.mxu0 0
    %1863 = vmatpush1.bf16.msra.mxu0 0
    %1864 = vmatprep.subr.bf16.mxu0 0
    %1865 = vmatpush1.bf16.msra.mxu0 0
    %1866 = vmatprep.subr.bf16.mxu0 0
    %1867 = vmatpush1.bf16.msra.mxu0 0
    %1868 = vmatprep.subr.bf16.mxu0 0
    %1869 = vmatpush1.bf16.msra.mxu0 0
    %1870 = vmatprep.subr.bf16.mxu0 0
    %1871 = vmatpush1.bf16.msra.mxu0 0
    %1872 = vmatprep.subr.bf16.mxu0 0
    %1873 = vmatpush1.bf16.msra.mxu0 0
    %1874 = vmatprep.subr.bf16.mxu0 0
    %1875 = vmatpush1.bf16.msra.mxu0 0
    %1876 = vmatprep.subr.bf16.mxu0 0
    %1877 = vmatpush1.bf16.msra.mxu0 0
    %1878 = vmatprep.subr.bf16.mxu0 0
    %1879 = vmatpush1.bf16.msra.mxu0 0
    %1880 = vmatprep.subr.bf16.mxu0 0
    %1881 = vmatpush1.bf16.msra.mxu0 0
    %1882 = vmatprep.subr.bf16.mxu0 0
    %1883 = vmatpush1.bf16.msra.mxu0 0
    %1884 = vmatprep.mubr.bf16.mxu0 0
    %1885 = vmatmul.mubr.bf16.gmra.mrb[0].mxu0 %v1850
    %v1886 = vpop.f32.mrb[0].mxu0
    %v1887 = vadd.f32 %v488, %v1886
    %v1888 = vpop.f32.mrb[0].mxu0
    %v1889 = vpop.f32.mrb[0].mxu0
    %v1890 = vpop.f32.mrb[0].mxu0
    %1891 = vdwg.mxu0
    %v1892 = vtanh.pop %v1887
    %v1893 = vmul.f32 %v1892, %v378
    %v1894 = vadd.f32 %v1893, %v379
    %v1895 = vmul.f32 %v1894, %v1758
    %1897 = vrot.lane.b32.xlu0 %v1894, 32
    %v1898 = vpop.permute.xlu0 %1897
    %v1900 = vmul.f32 %v1894, %v1898
    %1902 = vrot.lane.b32.xlu0 %v1900, 32
    %v1903 = vpop.permute.xlu0 %1902
    %v1905 = vadd.f32 %v1895, %v1903
    %v1906 = vtanh.pop %v1905
    %1908 = vrot.lane.b32.xlu0 %v1906, 32
    %v1909 = vpop.permute.xlu0 %1908
    %v1911 = vmul.f32 %v1894, %v1909
    %v1912 = vpack.c.bf16 %v1838, %v1838
    %v1914 = vshrl.u32 %v1912, 16
    %1916 = vrot.lane.b32.xlu0 %v1914, 64
    %v1917 = vpop.permute.xlu0 %1916
    %v1919 = vsel %vm214, %v1917, 0
    %1921 = vmatprep.subr.bf16.mxu0 0
    %1922 = vmatpush1.bf16.msra.mxu0 %v388
    %1923 = vmatprep.subr.bf16.mxu0 0
    %1924 = vmatpush1.bf16.msra.mxu0 %v389
    %1925 = vmatprep.subr.bf16.mxu0 0
    %1926 = vmatpush1.bf16.msra.mxu0 0
    %1927 = vmatprep.subr.bf16.mxu0 0
    %1928 = vmatpush1.bf16.msra.mxu0 0
    %1929 = vmatprep.subr.bf16.mxu0 0
    %1930 = vmatpush1.bf16.msra.mxu0 0
    %1931 = vmatprep.subr.bf16.mxu0 0
    %1932 = vmatpush1.bf16.msra.mxu0 0
    %1933 = vmatprep.subr.bf16.mxu0 0
    %1934 = vmatpush1.bf16.msra.mxu0 0
    %1935 = vmatprep.subr.bf16.mxu0 0
    %1936 = vmatpush1.bf16.msra.mxu0 0
    %1937 = vmatprep.subr.bf16.mxu0 0
    %1938 = vmatpush1.bf16.msra.mxu0 0
    %1939 = vmatprep.subr.bf16.mxu0 0
    %1940 = vmatpush1.bf16.msra.mxu0 0
    %1941 = vmatprep.subr.bf16.mxu0 0
    %1942 = vmatpush1.bf16.msra.mxu0 0
    %1943 = vmatprep.subr.bf16.mxu0 0
    %1944 = vmatpush1.bf16.msra.mxu0 0
    %1945 = vmatprep.subr.bf16.mxu0 0
    %1946 = vmatpush1.bf16.msra.mxu0 0
    %1947 = vmatprep.subr.bf16.mxu0 0
    %1948 = vmatpush1.bf16.msra.mxu0 0
    %1949 = vmatprep.subr.bf16.mxu0 0
    %1950 = vmatpush1.bf16.msra.mxu0 0
    %1951 = vmatprep.subr.bf16.mxu0 0
    %1952 = vmatpush1.bf16.msra.mxu0 0
    %1953 = vmatprep.mubr.bf16.mxu0 0
    %1954 = vmatmul.mubr.bf16.gmra.mrb[0].mxu0 %v1919
    %v1955 = vpop.f32.mrb[0].mxu0
    %v1956 = vadd.f32 0.0, %v1955
    %v1957 = vpop.f32.mrb[0].mxu0
    %v1958 = vpop.f32.mrb[0].mxu0
    %v1959 = vpop.f32.mrb[0].mxu0
    %1960 = vdwg.mxu0
    %v1962 = vrot.slane %v1956, 6
    %v1964 = vadd.f32 %v473, %v1962
    %v1965 = vtanh.pop %v1964
    %v1966 = vmul.f32 %v1965, %v378
    %v1967 = vadd.f32 %v1966, %v379
    %v1969 = vrot.slane %v1832, 7
    %v1971 = vmul.f32 %v1967, %v1969
    %1973 = vrot.lane.b32.xlu0 %v1967, 32
    %v1974 = vpop.permute.xlu0 %1973
    %v1976 = vmul.f32 %v1967, %v1974
    %1978 = vrot.lane.b32.xlu0 %v1976, 32
    %v1979 = vpop.permute.xlu0 %1978
    %v1981 = vadd.f32 %v1971, %v1979
    %v1982 = vtanh.pop %v1981
    %1984 = vrot.lane.b32.xlu0 %v1982, 32
    %v1985 = vpop.permute.xlu0 %1984
    %v1987 = vmul.f32 %v1967, %v1985
    %1989 = vrot.lane.b32.xlu0 %v1838, 64
    %v1990 = vpop.permute.xlu0 %1989
    %v1993 = vrot.slane %v1911, 7
    %1994 = vrot.lane.b32.xlu0 %v1993, 96
    %v1995 = vpop.permute.xlu0 %1994
    %v1997 = vsel %vm214, %v1990, %v1995
    %v1998 = vpack.c.bf16 %v1997, %v1997
    %v2000 = vshrl.u32 %v1998, 16
    %v2003 = vsel %vm633, %v2000, 0
    %2005 = vmatprep.subr.bf16.mxu0 0
    %2006 = vmatpush1.bf16.msra.mxu0 %v484
    %2007 = vmatprep.subr.bf16.mxu0 0
    %2008 = vmatpush1.bf16.msra.mxu0 %v485
    %2009 = vmatprep.subr.bf16.mxu0 0
    %2010 = vmatpush1.bf16.msra.mxu0 %v486
    %2011 = vmatprep.subr.bf16.mxu0 0
    %2012 = vmatpush1.bf16.msra.mxu0 %v487
    %2013 = vmatprep.subr.bf16.mxu0 0
    %2014 = vmatpush1.bf16.msra.mxu0 0
    %2015 = vmatprep.subr.bf16.mxu0 0
    %2016 = vmatpush1.bf16.msra.mxu0 0
    %2017 = vmatprep.subr.bf16.mxu0 0
    %2018 = vmatpush1.bf16.msra.mxu0 0
    %2019 = vmatprep.subr.bf16.mxu0 0
    %2020 = vmatpush1.bf16.msra.mxu0 0
    %2021 = vmatprep.subr.bf16.mxu0 0
    %2022 = vmatpush1.bf16.msra.mxu0 0
    %2023 = vmatprep.subr.bf16.mxu0 0
    %2024 = vmatpush1.bf16.msra.mxu0 0
    %2025 = vmatprep.subr.bf16.mxu0 0
    %2026 = vmatpush1.bf16.msra.mxu0 0
    %2027 = vmatprep.subr.bf16.mxu0 0
    %2028 = vmatpush1.bf16.msra.mxu0 0
    %2029 = vmatprep.subr.bf16.mxu0 0
    %2030 = vmatpush1.bf16.msra.mxu0 0
    %2031 = vmatprep.subr.bf16.mxu0 0
    %2032 = vmatpush1.bf16.msra.mxu0 0
    %2033 = vmatprep.subr.bf16.mxu0 0
    %2034 = vmatpush1.bf16.msra.mxu0 0
    %2035 = vmatprep.subr.bf16.mxu0 0
    %2036 = vmatpush1.bf16.msra.mxu0 0
    %2037 = vmatprep.mubr.bf16.mxu0 0
    %2038 = vmatmul.mubr.bf16.gmra.mrb[0].mxu0 %v2003
    %v2039 = vpop.f32.mrb[0].mxu0
    %v2040 = vadd.f32 %v488, %v2039
    %v2041 = vpop.f32.mrb[0].mxu0
    %v2042 = vpop.f32.mrb[0].mxu0
    %v2043 = vpop.f32.mrb[0].mxu0
    %2044 = vdwg.mxu0
    %v2045 = vtanh.pop %v2040
    %v2046 = vmul.f32 %v2045, %v378
    %v2047 = vadd.f32 %v2046, %v379
    %v2048 = vmul.f32 %v2047, %v1905
    %2050 = vrot.lane.b32.xlu0 %v2047, 32
    %v2051 = vpop.permute.xlu0 %2050
    %v2053 = vmul.f32 %v2047, %v2051
    %2055 = vrot.lane.b32.xlu0 %v2053, 32
    %v2056 = vpop.permute.xlu0 %2055
    %v2058 = vadd.f32 %v2048, %v2056
    %v2059 = vtanh.pop %v2058
    %2061 = vrot.lane.b32.xlu0 %v2059, 32
    %v2062 = vpop.permute.xlu0 %2061
    %v2064 = vmul.f32 %v2047, %v2062
    %v2065 = vpack.c.bf16 %v1987, %v1987
    %v2067 = vrot.slane %v2065, 1
    %2068 = vrot.lane.b32.xlu0 %v2067, 64
    %v2069 = vpop.permute.xlu0 %2068
    %v2071 = vsel %vm214, %v2069, 0
    %2073 = vmatprep.subr.bf16.mxu0 0
    %2074 = vmatpush1.bf16.msra.mxu0 %v388
    %2075 = vmatprep.subr.bf16.mxu0 0
    %2076 = vmatpush1.bf16.msra.mxu0 %v389
    %2077 = vmatprep.subr.bf16.mxu0 0
    %2078 = vmatpush1.bf16.msra.mxu0 0
    %2079 = vmatprep.subr.bf16.mxu0 0
    %2080 = vmatpush1.bf16.msra.mxu0 0
    %2081 = vmatprep.subr.bf16.mxu0 0
    %2082 = vmatpush1.bf16.msra.mxu0 0
    %2083 = vmatprep.subr.bf16.mxu0 0
    %2084 = vmatpush1.bf16.msra.mxu0 0
    %2085 = vmatprep.subr.bf16.mxu0 0
    %2086 = vmatpush1.bf16.msra.mxu0 0
    %2087 = vmatprep.subr.bf16.mxu0 0
    %2088 = vmatpush1.bf16.msra.mxu0 0
    %2089 = vmatprep.subr.bf16.mxu0 0
    %2090 = vmatpush1.bf16.msra.mxu0 0
    %2091 = vmatprep.subr.bf16.mxu0 0
    %2092 = vmatpush1.bf16.msra.mxu0 0
    %2093 = vmatprep.subr.bf16.mxu0 0
    %2094 = vmatpush1.bf16.msra.mxu0 0
    %2095 = vmatprep.subr.bf16.mxu0 0
    %2096 = vmatpush1.bf16.msra.mxu0 0
    %2097 = vmatprep.subr.bf16.mxu0 0
    %2098 = vmatpush1.bf16.msra.mxu0 0
    %2099 = vmatprep.subr.bf16.mxu0 0
    %2100 = vmatpush1.bf16.msra.mxu0 0
    %2101 = vmatprep.subr.bf16.mxu0 0
    %2102 = vmatpush1.bf16.msra.mxu0 0
    %2103 = vmatprep.subr.bf16.mxu0 0
    %2104 = vmatpush1.bf16.msra.mxu0 0
    %2105 = vmatprep.mubr.bf16.mxu0 0
    %2106 = vmatmul.mubr.bf16.gmra.mrb[0].mxu0 %v2071
    %v2107 = vpop.f32.mrb[0].mxu0
    %v2108 = vadd.f32 0.0, %v2107
    %v2109 = vpop.f32.mrb[0].mxu0
    %v2110 = vpop.f32.mrb[0].mxu0
    %v2111 = vpop.f32.mrb[0].mxu0
    %2112 = vdwg.mxu0
    %v2114 = vrot.slane %v2108, 5
    %v2116 = vadd.f32 %v473, %v2114
    %v2117 = vtanh.pop %v2116
    %v2118 = vmul.f32 %v2117, %v378
    %v2119 = vadd.f32 %v2118, %v379
    %v2121 = vrot.slane %v1981, 7
    %v2123 = vmul.f32 %v2119, %v2121
    %2125 = vrot.lane.b32.xlu0 %v2119, 32
    %v2126 = vpop.permute.xlu0 %2125
    %v2128 = vmul.f32 %v2119, %v2126
    %2130 = vrot.lane.b32.xlu0 %v2128, 32
    %v2131 = vpop.permute.xlu0 %2130
    %v2133 = vadd.f32 %v2123, %v2131
    %v2134 = vtanh.pop %v2133
    %2136 = vrot.lane.b32.xlu0 %v2134, 32
    %v2137 = vpop.permute.xlu0 %2136
    %v2139 = vmul.f32 %v2119, %v2137
    %2141 = vrot.lane.b32.xlu0 %v1987, 64
    %v2142 = vpop.permute.xlu0 %2141
    %v2145 = vrot.slane %v2064, 6
    %2146 = vrot.lane.b32.xlu0 %v2145, 96
    %v2147 = vpop.permute.xlu0 %2146
    %v2149 = vsel %vm214, %v2142, %v2147
    %v2150 = vpack.c.bf16 %v2149, %v2149
    %v2152 = vrot.slane %v2150, 1
    %v2154 = vsel %vm633, %v2152, 0
    %2156 = vmatprep.subr.bf16.mxu0 0
    %2157 = vmatpush1.bf16.msra.mxu0 %v484
    %2158 = vmatprep.subr.bf16.mxu0 0
    %2159 = vmatpush1.bf16.msra.mxu0 %v485
    %2160 = vmatprep.subr.bf16.mxu0 0
    %2161 = vmatpush1.bf16.msra.mxu0 %v486
    %2162 = vmatprep.subr.bf16.mxu0 0
    %2163 = vmatpush1.bf16.msra.mxu0 %v487
    %2164 = vmatprep.subr.bf16.mxu0 0
    %2165 = vmatpush1.bf16.msra.mxu0 0
    %2166 = vmatprep.subr.bf16.mxu0 0
    %2167 = vmatpush1.bf16.msra.mxu0 0
    %2168 = vmatprep.subr.bf16.mxu0 0
    %2169 = vmatpush1.bf16.msra.mxu0 0
    %2170 = vmatprep.subr.bf16.mxu0 0
    %2171 = vmatpush1.bf16.msra.mxu0 0
    %2172 = vmatprep.subr.bf16.mxu0 0
    %2173 = vmatpush1.bf16.msra.mxu0 0
    %2174 = vmatprep.subr.bf16.mxu0 0
    %2175 = vmatpush1.bf16.msra.mxu0 0
    %2176 = vmatprep.subr.bf16.mxu0 0
    %2177 = vmatpush1.bf16.msra.mxu0 0
    %2178 = vmatprep.subr.bf16.mxu0 0
    %2179 = vmatpush1.bf16.msra.mxu0 0
    %2180 = vmatprep.subr.bf16.mxu0 0
    %2181 = vmatpush1.bf16.msra.mxu0 0
    %2182 = vmatprep.subr.bf16.mxu0 0
    %2183 = vmatpush1.bf16.msra.mxu0 0
    %2184 = vmatprep.subr.bf16.mxu0 0
    %2185 = vmatpush1.bf16.msra.mxu0 0
    %2186 = vmatprep.subr.bf16.mxu0 0
    %2187 = vmatpush1.bf16.msra.mxu0 0
    %2188 = vmatprep.mubr.bf16.mxu0 0
    %2189 = vmatmul.mubr.bf16.gmra.mrb[0].mxu0 %v2154
    %v2190 = vpop.f32.mrb[0].mxu0
    %v2191 = vadd.f32 %v488, %v2190
    %v2192 = vpop.f32.mrb[0].mxu0
    %v2193 = vpop.f32.mrb[0].mxu0
    %v2194 = vpop.f32.mrb[0].mxu0
    %2195 = vdwg.mxu0
    %v2196 = vtanh.pop %v2191
    %v2197 = vmul.f32 %v2196, %v378
    %v2198 = vadd.f32 %v2197, %v379
    %v2199 = vmul.f32 %v2198, %v2058
    %2201 = vrot.lane.b32.xlu0 %v2198, 32
    %v2202 = vpop.permute.xlu0 %2201
    %v2204 = vmul.f32 %v2198, %v2202
    %2206 = vrot.lane.b32.xlu0 %v2204, 32
    %v2207 = vpop.permute.xlu0 %2206
    %v2209 = vadd.f32 %v2199, %v2207
    %v2210 = vtanh.pop %v2209
    %2212 = vrot.lane.b32.xlu0 %v2210, 32
    %v2213 = vpop.permute.xlu0 %2212
    %v2215 = vmul.f32 %v2198, %v2213
    %v2216 = vpack.c.bf16 %v2139, %v2139
    %v2218 = vshrl.u32 %v2216, 16
    %v2220 = vrot.slane %v2218, 1
    %2221 = vrot.lane.b32.xlu0 %v2220, 64
    %v2222 = vpop.permute.xlu0 %2221
    %v2224 = vsel %vm214, %v2222, 0
    %2226 = vmatprep.subr.bf16.mxu0 0
    %2227 = vmatpush1.bf16.msra.mxu0 %v388
    %2228 = vmatprep.subr.bf16.mxu0 0
    %2229 = vmatpush1.bf16.msra.mxu0 %v389
    %2230 = vmatprep.subr.bf16.mxu0 0
    %2231 = vmatpush1.bf16.msra.mxu0 0
    %2232 = vmatprep.subr.bf16.mxu0 0
    %2233 = vmatpush1.bf16.msra.mxu0 0
    %2234 = vmatprep.subr.bf16.mxu0 0
    %2235 = vmatpush1.bf16.msra.mxu0 0
    %2236 = vmatprep.subr.bf16.mxu0 0
    %2237 = vmatpush1.bf16.msra.mxu0 0
    %2238 = vmatprep.subr.bf16.mxu0 0
    %2239 = vmatpush1.bf16.msra.mxu0 0
    %2240 = vmatprep.subr.bf16.mxu0 0
    %2241 = vmatpush1.bf16.msra.mxu0 0
    %2242 = vmatprep.subr.bf16.mxu0 0
    %2243 = vmatpush1.bf16.msra.mxu0 0
    %2244 = vmatprep.subr.bf16.mxu0 0
    %2245 = vmatpush1.bf16.msra.mxu0 0
    %2246 = vmatprep.subr.bf16.mxu0 0
    %2247 = vmatpush1.bf16.msra.mxu0 0
    %2248 = vmatprep.subr.bf16.mxu0 0
    %2249 = vmatpush1.bf16.msra.mxu0 0
    %2250 = vmatprep.subr.bf16.mxu0 0
    %2251 = vmatpush1.bf16.msra.mxu0 0
    %2252 = vmatprep.subr.bf16.mxu0 0
    %2253 = vmatpush1.bf16.msra.mxu0 0
    %2254 = vmatprep.subr.bf16.mxu0 0
    %2255 = vmatpush1.bf16.msra.mxu0 0
    %2256 = vmatprep.subr.bf16.mxu0 0
    %2257 = vmatpush1.bf16.msra.mxu0 0
    %2258 = vmatprep.mubr.bf16.mxu0 0
    %2259 = vmatmul.mubr.bf16.gmra.mrb[0].mxu0 %v2224
    %v2260 = vpop.f32.mrb[0].mxu0
    %v2261 = vadd.f32 0.0, %v2260
    %v2262 = vpop.f32.mrb[0].mxu0
    %v2263 = vpop.f32.mrb[0].mxu0
    %v2264 = vpop.f32.mrb[0].mxu0
    %2265 = vdwg.mxu0
    %v2267 = vrot.slane %v2261, 4
    %v2269 = vadd.f32 %v473, %v2267
    %v2270 = vtanh.pop %v2269
    %v2271 = vmul.f32 %v2270, %v378
    %v2272 = vadd.f32 %v2271, %v379
    %v2274 = vrot.slane %v2133, 7
    %v2276 = vmul.f32 %v2272, %v2274
    %2278 = vrot.lane.b32.xlu0 %v2272, 32
    %v2279 = vpop.permute.xlu0 %2278
    %v2281 = vmul.f32 %v2272, %v2279
    %2283 = vrot.lane.b32.xlu0 %v2281, 32
    %v2284 = vpop.permute.xlu0 %2283
    %v2286 = vadd.f32 %v2276, %v2284
    %v2287 = vtanh.pop %v2286
    %2289 = vrot.lane.b32.xlu0 %v2287, 32
    %v2290 = vpop.permute.xlu0 %2289
    %v2292 = vmul.f32 %v2272, %v2290
    %2294 = vrot.lane.b32.xlu0 %v2139, 64
    %v2295 = vpop.permute.xlu0 %2294
    %v2298 = vrot.slane %v2215, 5
    %2299 = vrot.lane.b32.xlu0 %v2298, 96
    %v2300 = vpop.permute.xlu0 %2299
    %v2302 = vsel %vm214, %v2295, %v2300
    %v2303 = vpack.c.bf16 %v2302, %v2302
    %v2305 = vshrl.u32 %v2303, 16
    %v2307 = vrot.slane %v2305, 1
    %v2309 = vsel %vm633, %v2307, 0
    %2311 = vmatprep.subr.bf16.mxu0 0
    %2312 = vmatpush1.bf16.msra.mxu0 %v484
    %2313 = vmatprep.subr.bf16.mxu0 0
    %2314 = vmatpush1.bf16.msra.mxu0 %v485
    %2315 = vmatprep.subr.bf16.mxu0 0
    %2316 = vmatpush1.bf16.msra.mxu0 %v486
    %2317 = vmatprep.subr.bf16.mxu0 0
    %2318 = vmatpush1.bf16.msra.mxu0 %v487
    %2319 = vmatprep.subr.bf16.mxu0 0
    %2320 = vmatpush1.bf16.msra.mxu0 0
    %2321 = vmatprep.subr.bf16.mxu0 0
    %2322 = vmatpush1.bf16.msra.mxu0 0
    %2323 = vmatprep.subr.bf16.mxu0 0
    %2324 = vmatpush1.bf16.msra.mxu0 0
    %2325 = vmatprep.subr.bf16.mxu0 0
    %2326 = vmatpush1.bf16.msra.mxu0 0
    %2327 = vmatprep.subr.bf16.mxu0 0
    %2328 = vmatpush1.bf16.msra.mxu0 0
    %2329 = vmatprep.subr.bf16.mxu0 0
    %2330 = vmatpush1.bf16.msra.mxu0 0
    %2331 = vmatprep.subr.bf16.mxu0 0
    %2332 = vmatpush1.bf16.msra.mxu0 0
    %2333 = vmatprep.subr.bf16.mxu0 0
    %2334 = vmatpush1.bf16.msra.mxu0 0
    %2335 = vmatprep.subr.bf16.mxu0 0
    %2336 = vmatpush1.bf16.msra.mxu0 0
    %2337 = vmatprep.subr.bf16.mxu0 0
    %2338 = vmatpush1.bf16.msra.mxu0 0
    %2339 = vmatprep.subr.bf16.mxu0 0
    %2340 = vmatpush1.bf16.msra.mxu0 0
    %2341 = vmatprep.subr.bf16.mxu0 0
    %2342 = vmatpush1.bf16.msra.mxu0 0
    %2343 = vmatprep.mubr.bf16.mxu0 0
    %2344 = vmatmul.mubr.bf16.gmra.mrb[0].mxu0 %v2309
    %v2345 = vpop.f32.mrb[0].mxu0
    %v2346 = vadd.f32 %v488, %v2345
    %v2347 = vpop.f32.mrb[0].mxu0
    %v2348 = vpop.f32.mrb[0].mxu0
    %v2349 = vpop.f32.mrb[0].mxu0
    %2350 = vdwg.mxu0
    %v2351 = vtanh.pop %v2346
    %v2352 = vmul.f32 %v2351, %v378
    %v2353 = vadd.f32 %v2352, %v379
    %v2354 = vmul.f32 %v2353, %v2209
    %2356 = vrot.lane.b32.xlu0 %v2353, 32
    %v2357 = vpop.permute.xlu0 %2356
    %v2359 = vmul.f32 %v2353, %v2357
    %2361 = vrot.lane.b32.xlu0 %v2359, 32
    %v2362 = vpop.permute.xlu0 %2361
    %v2364 = vadd.f32 %v2354, %v2362
    %v2365 = vtanh.pop %v2364
    %2367 = vrot.lane.b32.xlu0 %v2365, 32
    %v2368 = vpop.permute.xlu0 %2367
    %v2370 = vmul.f32 %v2353, %v2368
    %v2371 = vpack.c.bf16 %v2292, %v2292
    %v2373 = vrot.slane %v2371, 2
    %2374 = vrot.lane.b32.xlu0 %v2373, 64
    %v2375 = vpop.permute.xlu0 %2374
    %v2377 = vsel %vm214, %v2375, 0
    %2379 = vmatprep.subr.bf16.mxu0 0
    %2380 = vmatpush1.bf16.msra.mxu0 %v388
    %2381 = vmatprep.subr.bf16.mxu0 0
    %2382 = vmatpush1.bf16.msra.mxu0 %v389
    %2383 = vmatprep.subr.bf16.mxu0 0
    %2384 = vmatpush1.bf16.msra.mxu0 0
    %2385 = vmatprep.subr.bf16.mxu0 0
    %2386 = vmatpush1.bf16.msra.mxu0 0
    %2387 = vmatprep.subr.bf16.mxu0 0
    %2388 = vmatpush1.bf16.msra.mxu0 0
    %2389 = vmatprep.subr.bf16.mxu0 0
    %2390 = vmatpush1.bf16.msra.mxu0 0
    %2391 = vmatprep.subr.bf16.mxu0 0
    %2392 = vmatpush1.bf16.msra.mxu0 0
    %2393 = vmatprep.subr.bf16.mxu0 0
    %2394 = vmatpush1.bf16.msra.mxu0 0
    %2395 = vmatprep.subr.bf16.mxu0 0
    %2396 = vmatpush1.bf16.msra.mxu0 0
    %2397 = vmatprep.subr.bf16.mxu0 0
    %2398 = vmatpush1.bf16.msra.mxu0 0
    %2399 = vmatprep.subr.bf16.mxu0 0
    %2400 = vmatpush1.bf16.msra.mxu0 0
    %2401 = vmatprep.subr.bf16.mxu0 0
    %2402 = vmatpush1.bf16.msra.mxu0 0
    %2403 = vmatprep.subr.bf16.mxu0 0
    %2404 = vmatpush1.bf16.msra.mxu0 0
    %2405 = vmatprep.subr.bf16.mxu0 0
    %2406 = vmatpush1.bf16.msra.mxu0 0
    %2407 = vmatprep.subr.bf16.mxu0 0
    %2408 = vmatpush1.bf16.msra.mxu0 0
    %2409 = vmatprep.subr.bf16.mxu0 0
    %2410 = vmatpush1.bf16.msra.mxu0 0
    %2411 = vmatprep.mubr.bf16.mxu0 0
    %2412 = vmatmul.mubr.bf16.gmra.mrb[0].mxu0 %v2377
    %v2413 = vpop.f32.mrb[0].mxu0
    %v2414 = vadd.f32 0.0, %v2413
    %v2415 = vpop.f32.mrb[0].mxu0
    %v2416 = vpop.f32.mrb[0].mxu0
    %v2417 = vpop.f32.mrb[0].mxu0
    %2418 = vdwg.mxu0
    %v2420 = vrot.slane %v2414, 3
    %v2422 = vadd.f32 %v473, %v2420
    %v2423 = vtanh.pop %v2422
    %v2424 = vmul.f32 %v2423, %v378
    %v2425 = vadd.f32 %v2424, %v379
    %v2427 = vrot.slane %v2286, 7
    %v2429 = vmul.f32 %v2425, %v2427
    %2431 = vrot.lane.b32.xlu0 %v2425, 32
    %v2432 = vpop.permute.xlu0 %2431
    %v2434 = vmul.f32 %v2425, %v2432
    %2436 = vrot.lane.b32.xlu0 %v2434, 32
    %v2437 = vpop.permute.xlu0 %2436
    %v2439 = vadd.f32 %v2429, %v2437
    %v2440 = vtanh.pop %v2439
    %2442 = vrot.lane.b32.xlu0 %v2440, 32
    %v2443 = vpop.permute.xlu0 %2442
    %v2445 = vmul.f32 %v2425, %v2443
    %2447 = vrot.lane.b32.xlu0 %v2292, 64
    %v2448 = vpop.permute.xlu0 %2447
    %v2451 = vrot.slane %v2370, 4
    %2452 = vrot.lane.b32.xlu0 %v2451, 96
    %v2453 = vpop.permute.xlu0 %2452
    %v2455 = vsel %vm214, %v2448, %v2453
    %v2456 = vpack.c.bf16 %v2455, %v2455
    %v2458 = vrot.slane %v2456, 2
    %v2460 = vsel %vm633, %v2458, 0
    %2462 = vmatprep.subr.bf16.mxu0 0
    %2463 = vmatpush1.bf16.msra.mxu0 %v484
    %2464 = vmatprep.subr.bf16.mxu0 0
    %2465 = vmatpush1.bf16.msra.mxu0 %v485
    %2466 = vmatprep.subr.bf16.mxu0 0
    %2467 = vmatpush1.bf16.msra.mxu0 %v486
    %2468 = vmatprep.subr.bf16.mxu0 0
    %2469 = vmatpush1.bf16.msra.mxu0 %v487
    %2470 = vmatprep.subr.bf16.mxu0 0
    %2471 = vmatpush1.bf16.msra.mxu0 0
    %2472 = vmatprep.subr.bf16.mxu0 0
    %2473 = vmatpush1.bf16.msra.mxu0 0
    %2474 = vmatprep.subr.bf16.mxu0 0
    %2475 = vmatpush1.bf16.msra.mxu0 0
    %2476 = vmatprep.subr.bf16.mxu0 0
    %2477 = vmatpush1.bf16.msra.mxu0 0
    %2478 = vmatprep.subr.bf16.mxu0 0
    %2479 = vmatpush1.bf16.msra.mxu0 0
    %2480 = vmatprep.subr.bf16.mxu0 0
    %2481 = vmatpush1.bf16.msra.mxu0 0
    %2482 = vmatprep.subr.bf16.mxu0 0
    %2483 = vmatpush1.bf16.msra.mxu0 0
    %2484 = vmatprep.subr.bf16.mxu0 0
    %2485 = vmatpush1.bf16.msra.mxu0 0
    %2486 = vmatprep.subr.bf16.mxu0 0
    %2487 = vmatpush1.bf16.msra.mxu0 0
    %2488 = vmatprep.subr.bf16.mxu0 0
    %2489 = vmatpush1.bf16.msra.mxu0 0
    %2490 = vmatprep.subr.bf16.mxu0 0
    %2491 = vmatpush1.bf16.msra.mxu0 0
    %2492 = vmatprep.subr.bf16.mxu0 0
    %2493 = vmatpush1.bf16.msra.mxu0 0
    %2494 = vmatprep.mubr.bf16.mxu0 0
    %2495 = vmatmul.mubr.bf16.gmra.mrb[0].mxu0 %v2460
    %v2496 = vpop.f32.mrb[0].mxu0
    %v2497 = vadd.f32 %v488, %v2496
    %v2498 = vpop.f32.mrb[0].mxu0
    %v2499 = vpop.f32.mrb[0].mxu0
    %v2500 = vpop.f32.mrb[0].mxu0
    %2501 = vdwg.mxu0
    %v2502 = vtanh.pop %v2497
    %v2503 = vmul.f32 %v2502, %v378
    %v2504 = vadd.f32 %v2503, %v379
    %v2505 = vmul.f32 %v2504, %v2364
    %2507 = vrot.lane.b32.xlu0 %v2504, 32
    %v2508 = vpop.permute.xlu0 %2507
    %v2510 = vmul.f32 %v2504, %v2508
    %2512 = vrot.lane.b32.xlu0 %v2510, 32
    %v2513 = vpop.permute.xlu0 %2512
    %v2515 = vadd.f32 %v2505, %v2513
    %v2516 = vtanh.pop %v2515
    %2518 = vrot.lane.b32.xlu0 %v2516, 32
    %v2519 = vpop.permute.xlu0 %2518
    %v2521 = vmul.f32 %v2504, %v2519
    %v2522 = vpack.c.bf16 %v2445, %v2445
    %v2524 = vshrl.u32 %v2522, 16
    %v2526 = vrot.slane %v2524, 2
    %2527 = vrot.lane.b32.xlu0 %v2526, 64
    %v2528 = vpop.permute.xlu0 %2527
    %v2530 = vsel %vm214, %v2528, 0
    %2532 = vmatprep.subr.bf16.mxu0 0
    %2533 = vmatpush1.bf16.msra.mxu0 %v388
    %2534 = vmatprep.subr.bf16.mxu0 0
    %2535 = vmatpush1.bf16.msra.mxu0 %v389
    %2536 = vmatprep.subr.bf16.mxu0 0
    %2537 = vmatpush1.bf16.msra.mxu0 0
    %2538 = vmatprep.subr.bf16.mxu0 0
    %2539 = vmatpush1.bf16.msra.mxu0 0
    %2540 = vmatprep.subr.bf16.mxu0 0
    %2541 = vmatpush1.bf16.msra.mxu0 0
    %2542 = vmatprep.subr.bf16.mxu0 0
    %2543 = vmatpush1.bf16.msra.mxu0 0
    %2544 = vmatprep.subr.bf16.mxu0 0
    %2545 = vmatpush1.bf16.msra.mxu0 0
    %2546 = vmatprep.subr.bf16.mxu0 0
    %2547 = vmatpush1.bf16.msra.mxu0 0
    %2548 = vmatprep.subr.bf16.mxu0 0
    %2549 = vmatpush1.bf16.msra.mxu0 0
    %2550 = vmatprep.subr.bf16.mxu0 0
    %2551 = vmatpush1.bf16.msra.mxu0 0
    %2552 = vmatprep.subr.bf16.mxu0 0
    %2553 = vmatpush1.bf16.msra.mxu0 0
    %2554 = vmatprep.subr.bf16.mxu0 0
    %2555 = vmatpush1.bf16.msra.mxu0 0
    %2556 = vmatprep.subr.bf16.mxu0 0
    %2557 = vmatpush1.bf16.msra.mxu0 0
    %2558 = vmatprep.subr.bf16.mxu0 0
    %2559 = vmatpush1.bf16.msra.mxu0 0
    %2560 = vmatprep.subr.bf16.mxu0 0
    %2561 = vmatpush1.bf16.msra.mxu0 0
    %2562 = vmatprep.subr.bf16.mxu0 0
    %2563 = vmatpush1.bf16.msra.mxu0 0
    %2564 = vmatprep.mubr.bf16.mxu0 0
    %2565 = vmatmul.mubr.bf16.gmra.mrb[0].mxu0 %v2530
    %v2566 = vpop.f32.mrb[0].mxu0
    %v2567 = vadd.f32 0.0, %v2566
    %v2568 = vpop.f32.mrb[0].mxu0
    %v2569 = vpop.f32.mrb[0].mxu0
    %v2570 = vpop.f32.mrb[0].mxu0
    %2571 = vdwg.mxu0
    %v2573 = vrot.slane %v2567, 2
    %v2575 = vadd.f32 %v473, %v2573
    %v2576 = vtanh.pop %v2575
    %v2577 = vmul.f32 %v2576, %v378
    %v2578 = vadd.f32 %v2577, %v379
    %v2580 = vrot.slane %v2439, 7
    %v2582 = vmul.f32 %v2578, %v2580
    %2584 = vrot.lane.b32.xlu0 %v2578, 32
    %v2585 = vpop.permute.xlu0 %2584
    %v2587 = vmul.f32 %v2578, %v2585
    %2589 = vrot.lane.b32.xlu0 %v2587, 32
    %v2590 = vpop.permute.xlu0 %2589
    %v2592 = vadd.f32 %v2582, %v2590
    %v2593 = vtanh.pop %v2592
    %2595 = vrot.lane.b32.xlu0 %v2593, 32
    %v2596 = vpop.permute.xlu0 %2595
    %v2598 = vmul.f32 %v2578, %v2596
    %2600 = vrot.lane.b32.xlu0 %v2445, 64
    %v2601 = vpop.permute.xlu0 %2600
    %v2604 = vrot.slane %v2521, 3
    %2605 = vrot.lane.b32.xlu0 %v2604, 96
    %v2606 = vpop.permute.xlu0 %2605
    %v2608 = vsel %vm214, %v2601, %v2606
    %v2609 = vpack.c.bf16 %v2608, %v2608
    %v2611 = vshrl.u32 %v2609, 16
    %v2613 = vrot.slane %v2611, 2
    %v2615 = vsel %vm633, %v2613, 0
    %2617 = vmatprep.subr.bf16.mxu0 0
    %2618 = vmatpush1.bf16.msra.mxu0 %v484
    %2619 = vmatprep.subr.bf16.mxu0 0
    %2620 = vmatpush1.bf16.msra.mxu0 %v485
    %2621 = vmatprep.subr.bf16.mxu0 0
    %2622 = vmatpush1.bf16.msra.mxu0 %v486
    %2623 = vmatprep.subr.bf16.mxu0 0
    %2624 = vmatpush1.bf16.msra.mxu0 %v487
    %2625 = vmatprep.subr.bf16.mxu0 0
    %2626 = vmatpush1.bf16.msra.mxu0 0
    %2627 = vmatprep.subr.bf16.mxu0 0
    %2628 = vmatpush1.bf16.msra.mxu0 0
    %2629 = vmatprep.subr.bf16.mxu0 0
    %2630 = vmatpush1.bf16.msra.mxu0 0
    %2631 = vmatprep.subr.bf16.mxu0 0
    %2632 = vmatpush1.bf16.msra.mxu0 0
    %2633 = vmatprep.subr.bf16.mxu0 0
    %2634 = vmatpush1.bf16.msra.mxu0 0
    %2635 = vmatprep.subr.bf16.mxu0 0
    %2636 = vmatpush1.bf16.msra.mxu0 0
    %2637 = vmatprep.subr.bf16.mxu0 0
    %2638 = vmatpush1.bf16.msra.mxu0 0
    %2639 = vmatprep.subr.bf16.mxu0 0
    %2640 = vmatpush1.bf16.msra.mxu0 0
    %2641 = vmatprep.subr.bf16.mxu0 0
    %2642 = vmatpush1.bf16.msra.mxu0 0
    %2643 = vmatprep.subr.bf16.mxu0 0
    %2644 = vmatpush1.bf16.msra.mxu0 0
    %2645 = vmatprep.subr.bf16.mxu0 0
    %2646 = vmatpush1.bf16.msra.mxu0 0
    %2647 = vmatprep.subr.bf16.mxu0 0
    %2648 = vmatpush1.bf16.msra.mxu0 0
    %2649 = vmatprep.mubr.bf16.mxu0 0
    %2650 = vmatmul.mubr.bf16.gmra.mrb[0].mxu0 %v2615
    %v2651 = vpop.f32.mrb[0].mxu0
    %v2652 = vadd.f32 %v488, %v2651
    %v2653 = vpop.f32.mrb[0].mxu0
    %v2654 = vpop.f32.mrb[0].mxu0
    %v2655 = vpop.f32.mrb[0].mxu0
    %2656 = vdwg.mxu0
    %v2657 = vtanh.pop %v2652
    %v2658 = vmul.f32 %v2657, %v378
    %v2659 = vadd.f32 %v2658, %v379
    %v2660 = vmul.f32 %v2659, %v2515
    %2662 = vrot.lane.b32.xlu0 %v2659, 32
    %v2663 = vpop.permute.xlu0 %2662
    %v2665 = vmul.f32 %v2659, %v2663
    %2667 = vrot.lane.b32.xlu0 %v2665, 32
    %v2668 = vpop.permute.xlu0 %2667
    %v2670 = vadd.f32 %v2660, %v2668
    %v2671 = vtanh.pop %v2670
    %2673 = vrot.lane.b32.xlu0 %v2671, 32
    %v2674 = vpop.permute.xlu0 %2673
    %v2676 = vmul.f32 %v2659, %v2674
    %v2677 = vpack.c.bf16 %v2598, %v2598
    %v2679 = vrot.slane %v2677, 3
    %2680 = vrot.lane.b32.xlu0 %v2679, 64
    %v2681 = vpop.permute.xlu0 %2680
    %v2683 = vsel %vm214, %v2681, 0
    %2685 = vmatprep.subr.bf16.mxu0 0
    %2686 = vmatpush1.bf16.msra.mxu0 %v388
    %2687 = vmatprep.subr.bf16.mxu0 0
    %2688 = vmatpush1.bf16.msra.mxu0 %v389
    %2689 = vmatprep.subr.bf16.mxu0 0
    %2690 = vmatpush1.bf16.msra.mxu0 0
    %2691 = vmatprep.subr.bf16.mxu0 0
    %2692 = vmatpush1.bf16.msra.mxu0 0
    %2693 = vmatprep.subr.bf16.mxu0 0
    %2694 = vmatpush1.bf16.msra.mxu0 0
    %2695 = vmatprep.subr.bf16.mxu0 0
    %2696 = vmatpush1.bf16.msra.mxu0 0
    %2697 = vmatprep.subr.bf16.mxu0 0
    %2698 = vmatpush1.bf16.msra.mxu0 0
    %2699 = vmatprep.subr.bf16.mxu0 0
    %2700 = vmatpush1.bf16.msra.mxu0 0
    %2701 = vmatprep.subr.bf16.mxu0 0
    %2702 = vmatpush1.bf16.msra.mxu0 0
    %2703 = vmatprep.subr.bf16.mxu0 0
    %2704 = vmatpush1.bf16.msra.mxu0 0
    %2705 = vmatprep.subr.bf16.mxu0 0
    %2706 = vmatpush1.bf16.msra.mxu0 0
    %2707 = vmatprep.subr.bf16.mxu0 0
    %2708 = vmatpush1.bf16.msra.mxu0 0
    %2709 = vmatprep.subr.bf16.mxu0 0
    %2710 = vmatpush1.bf16.msra.mxu0 0
    %2711 = vmatprep.subr.bf16.mxu0 0
    %2712 = vmatpush1.bf16.msra.mxu0 0
    %2713 = vmatprep.subr.bf16.mxu0 0
    %2714 = vmatpush1.bf16.msra.mxu0 0
    %2715 = vmatprep.subr.bf16.mxu0 0
    %2716 = vmatpush1.bf16.msra.mxu0 0
    %2717 = vmatprep.mubr.bf16.mxu0 0
    %2718 = vmatmul.mubr.bf16.gmra.mrb[0].mxu0 %v2683
    %v2719 = vpop.f32.mrb[0].mxu0
    %v2720 = vadd.f32 0.0, %v2719
    %v2721 = vpop.f32.mrb[0].mxu0
    %v2722 = vpop.f32.mrb[0].mxu0
    %v2723 = vpop.f32.mrb[0].mxu0
    %2724 = vdwg.mxu0
    %v2726 = vrot.slane %v2720, 1
    %v2728 = vadd.f32 %v473, %v2726
    %v2729 = vtanh.pop %v2728
    %v2730 = vmul.f32 %v2729, %v378
    %v2731 = vadd.f32 %v2730, %v379
    %v2733 = vrot.slane %v2592, 7
    %v2735 = vmul.f32 %v2731, %v2733
    %2737 = vrot.lane.b32.xlu0 %v2731, 32
    %v2738 = vpop.permute.xlu0 %2737
    %v2740 = vmul.f32 %v2731, %v2738
    %2742 = vrot.lane.b32.xlu0 %v2740, 32
    %v2743 = vpop.permute.xlu0 %2742
    %v2745 = vadd.f32 %v2735, %v2743
    %v2746 = vtanh.pop %v2745
    %2748 = vrot.lane.b32.xlu0 %v2746, 32
    %v2749 = vpop.permute.xlu0 %2748
    %v2751 = vmul.f32 %v2731, %v2749
    %2753 = vrot.lane.b32.xlu0 %v2598, 64
    %v2754 = vpop.permute.xlu0 %2753
    %v2757 = vrot.slane %v2676, 2
    %2758 = vrot.lane.b32.xlu0 %v2757, 96
    %v2759 = vpop.permute.xlu0 %2758
    %v2761 = vsel %vm214, %v2754, %v2759
    %v2762 = vpack.c.bf16 %v2761, %v2761
    %v2764 = vrot.slane %v2762, 3
    %v2766 = vsel %vm633, %v2764, 0
    %2768 = vmatprep.subr.bf16.mxu0 0
    %2769 = vmatpush1.bf16.msra.mxu0 %v484
    %2770 = vmatprep.subr.bf16.mxu0 0
    %2771 = vmatpush1.bf16.msra.mxu0 %v485
    %2772 = vmatprep.subr.bf16.mxu0 0
    %2773 = vmatpush1.bf16.msra.mxu0 %v486
    %2774 = vmatprep.subr.bf16.mxu0 0
    %2775 = vmatpush1.bf16.msra.mxu0 %v487
    %2776 = vmatprep.subr.bf16.mxu0 0
    %2777 = vmatpush1.bf16.msra.mxu0 0
    %2778 = vmatprep.subr.bf16.mxu0 0
    %2779 = vmatpush1.bf16.msra.mxu0 0
    %2780 = vmatprep.subr.bf16.mxu0 0
    %2781 = vmatpush1.bf16.msra.mxu0 0
    %2782 = vmatprep.subr.bf16.mxu0 0
    %2783 = vmatpush1.bf16.msra.mxu0 0
    %2784 = vmatprep.subr.bf16.mxu0 0
    %2785 = vmatpush1.bf16.msra.mxu0 0
    %2786 = vmatprep.subr.bf16.mxu0 0
    %2787 = vmatpush1.bf16.msra.mxu0 0
    %2788 = vmatprep.subr.bf16.mxu0 0
    %2789 = vmatpush1.bf16.msra.mxu0 0
    %2790 = vmatprep.subr.bf16.mxu0 0
    %2791 = vmatpush1.bf16.msra.mxu0 0
    %2792 = vmatprep.subr.bf16.mxu0 0
    %2793 = vmatpush1.bf16.msra.mxu0 0
    %2794 = vmatprep.subr.bf16.mxu0 0
    %2795 = vmatpush1.bf16.msra.mxu0 0
    %2796 = vmatprep.subr.bf16.mxu0 0
    %2797 = vmatpush1.bf16.msra.mxu0 0
    %2798 = vmatprep.subr.bf16.mxu0 0
    %2799 = vmatpush1.bf16.msra.mxu0 0
    %2800 = vmatprep.mubr.bf16.mxu0 0
    %2801 = vmatmul.mubr.bf16.gmra.mrb[0].mxu0 %v2766
    %v2802 = vpop.f32.mrb[0].mxu0
    %v2803 = vadd.f32 %v488, %v2802
    %v2804 = vpop.f32.mrb[0].mxu0
    %v2805 = vpop.f32.mrb[0].mxu0
    %v2806 = vpop.f32.mrb[0].mxu0
    %2807 = vdwg.mxu0
    %v2808 = vtanh.pop %v2803
    %v2809 = vmul.f32 %v2808, %v378
    %v2810 = vadd.f32 %v2809, %v379
    %v2811 = vmul.f32 %v2810, %v2670
    %2813 = vrot.lane.b32.xlu0 %v2810, 32
    %v2814 = vpop.permute.xlu0 %2813
    %v2816 = vmul.f32 %v2810, %v2814
    %2818 = vrot.lane.b32.xlu0 %v2816, 32
    %v2819 = vpop.permute.xlu0 %2818
    %v2821 = vadd.f32 %v2811, %v2819
    %v2822 = vtanh.pop %v2821
    %2824 = vrot.lane.b32.xlu0 %v2822, 32
    %v2825 = vpop.permute.xlu0 %2824
    %v2827 = vmul.f32 %v2810, %v2825
    %2829 = vrot.lane.b32.xlu0 %v2751, 64
    %v2830 = vpop.permute.xlu0 %2829
    %v2833 = vrot.slane %v2827, 1
    %2834 = vrot.lane.b32.xlu0 %v2833, 96
    %v2835 = vpop.permute.xlu0 %2834
    %v2837 = vsel %vm214, %v2830, %v2835
    %v2838 = vpack.c.bf16 %v2837, %v2837
    %v2840 = vshrl.u32 %v2838, 16
    %v2842 = vrot.slane %v2840, 3
    %v2844 = vsel %vm633, %v2842, 0
    %2846 = vmatprep.subr.bf16.mxu0 0
    %2847 = vmatpush1.bf16.msra.mxu0 %v484
    %2848 = vmatprep.subr.bf16.mxu0 0
    %2849 = vmatpush1.bf16.msra.mxu0 %v485
    %2850 = vmatprep.subr.bf16.mxu0 0
    %2851 = vmatpush1.bf16.msra.mxu0 %v486
    %2852 = vmatprep.subr.bf16.mxu0 0
    %2853 = vmatpush1.bf16.msra.mxu0 %v487
    %2854 = vmatprep.subr.bf16.mxu0 0
    %2855 = vmatpush1.bf16.msra.mxu0 0
    %2856 = vmatprep.subr.bf16.mxu0 0
    %2857 = vmatpush1.bf16.msra.mxu0 0
    %2858 = vmatprep.subr.bf16.mxu0 0
    %2859 = vmatpush1.bf16.msra.mxu0 0
    %2860 = vmatprep.subr.bf16.mxu0 0
    %2861 = vmatpush1.bf16.msra.mxu0 0
    %2862 = vmatprep.subr.bf16.mxu0 0
    %2863 = vmatpush1.bf16.msra.mxu0 0
    %2864 = vmatprep.subr.bf16.mxu0 0
    %2865 = vmatpush1.bf16.msra.mxu0 0
    %2866 = vmatprep.subr.bf16.mxu0 0
    %2867 = vmatpush1.bf16.msra.mxu0 0
    %2868 = vmatprep.subr.bf16.mxu0 0
    %2869 = vmatpush1.bf16.msra.mxu0 0
    %2870 = vmatprep.subr.bf16.mxu0 0
    %2871 = vmatpush1.bf16.msra.mxu0 0
    %2872 = vmatprep.subr.bf16.mxu0 0
    %2873 = vmatpush1.bf16.msra.mxu0 0
    %2874 = vmatprep.subr.bf16.mxu0 0
    %2875 = vmatpush1.bf16.msra.mxu0 0
    %2876 = vmatprep.subr.bf16.mxu0 0
    %2877 = vmatpush1.bf16.msra.mxu0 0
    %2878 = vmatprep.mubr.bf16.mxu0 0
    %2879 = vmatmul.mubr.bf16.gmra.mrb[0].mxu0 %v2844
    %v2880 = vpop.f32.mrb[0].mxu0
    %v2881 = vadd.f32 %v488, %v2880
    %v2882 = vpop.f32.mrb[0].mxu0
    %v2883 = vpop.f32.mrb[0].mxu0
    %v2884 = vpop.f32.mrb[0].mxu0
    %2885 = vdwg.mxu0
    %v2886 = vtanh.pop %v2881
    %v2887 = vmul.f32 %v2886, %v378
    %v2888 = vadd.f32 %v2887, %v379
    %v2889 = vmul.f32 %v2888, %v2821
    %2891 = vrot.lane.b32.xlu0 %v2888, 32
    %v2892 = vpop.permute.xlu0 %2891
    %v2894 = vmul.f32 %v2888, %v2892
    %2896 = vrot.lane.b32.xlu0 %v2894, 32
    %v2897 = vpop.permute.xlu0 %2896
    %v2899 = vadd.f32 %v2889, %v2897
    %v2900 = vtanh.pop %v2899
    %2902 = vrot.lane.b32.xlu0 %v2900, 32
    %v2903 = vpop.permute.xlu0 %2902
    %v2905 = vmul.f32 %v2888, %v2903
    %v2906 = vrot.slane %v849, 7
    %v2908 = vrot.slane %v1000, 6
    %v2910 = vrot.slane %v1155, 5
    %v2912 = vrot.slane %v1306, 4
    %v2914 = vrot.slane %v1461, 3
    %v2916 = vrot.slane %v1612, 2
    %v2918 = vrot.slane %v1764, 1
    %v2920 = vrot.slane %v2064, 7
    %v2922 = vrot.slane %v2215, 6
    %v2924 = vrot.slane %v2370, 5
    %v2926 = vrot.slane %v2521, 4
    %v2928 = vrot.slane %v2676, 3
    %v2930 = vrot.slane %v2827, 2
    %v2933 = vrot.slane %v2905, 1
    %vm2935 = vcmask 1040384
    %v2936 = vsel %vm2935, %v696, %v2906
    %vm2937 = vcmask 1041408
    %v2938 = vsel %vm2937, %v2936, %v2908
    %vm2939 = vcmask 1042432
    %v2940 = vsel %vm2939, %v2938, %v2910
    %v2941 = vsel %vm42, %v2940, %v2912
    %vm2942 = vcmask 1044480
    %v2943 = vsel %vm2942, %v2941, %v2914
    %vm2944 = vcmask 1045504
    %v2945 = vsel %vm2944, %v2943, %v2916
    %vm2946 = vcmask 1046528
    %v2947 = vsel %vm2946, %v2945, %v2918
    %v2948 = vsel %vm2935, %v1911, %v2920
    %v2949 = vsel %vm2937, %v2948, %v2922
    %v2950 = vsel %vm2939, %v2949, %v2924
    %v2951 = vsel %vm42, %v2950, %v2926
    %v2952 = vsel %vm2942, %v2951, %v2928
    %v2953 = vsel %vm2944, %v2952, %v2930
    %v2954 = vsel %vm2946, %v2953, %v2933
    %v2955 = vld [vmem:[#allocation2 + $0xc8] sm:$0xff]
    %v2956 = vld [vmem:[#allocation2 + $0xd0] sm:$0xff]
    %v2957 = vld [vmem:[#allocation2 + $0xd8] sm:$0xff]
    %v2958 = vld [vmem:[#allocation2 + $0xe0] sm:$0xff]
    %v2959 = vld [vmem:[#allocation2 + $0xe8] sm:$0x1]
    %v2960 = vlaneseq
    %v2961 = vshrl.u32 %v2960, 7
    %v2962 = vsub.s32 0, %v2961
    %v2963 = vrot.slane %v2959, %v2962
    %2966 = vrot.lane.b32.xlu0 %v2947, 64
    %v2967 = vpop.permute.xlu0 %2966
    %2968 = vrot.lane.b32.xlu0 %v2954, 64
    %v2969 = vpop.permute.xlu0 %2968
    %v2970 = vsel %vm214, %v2967, 0
    %v2972 = vsel %vm214, %v2969, 0
    %2974 = vmatprep.subr.mxu0 0.0
    %2975 = vmatpush1.msra.mxu0 %v2955
    %2976 = vmatprep.subr.mxu0 0.0
    %2977 = vmatpush1.msra.mxu0 %v2956
    %2978 = vmatprep.subr.mxu0 0.0
    %2979 = vmatpush1.msra.mxu0 %v2957
    %2980 = vmatprep.subr.mxu0 0.0
    %2981 = vmatpush1.msra.mxu0 %v2958
    %2982 = vmatprep.subr.mxu0 0.0
    %2983 = vmatpush1.msra.mxu0 0.0
    %2984 = vmatprep.subr.mxu0 0.0
    %2985 = vmatpush1.msra.mxu0 0.0
    %2986 = vmatprep.subr.mxu0 0.0
    %2987 = vmatpush1.msra.mxu0 0.0
    %2988 = vmatprep.subr.mxu0 0.0
    %2989 = vmatpush1.msra.mxu0 0.0
    %2990 = vmatprep.subr.mxu0 0.0
    %2991 = vmatpush1.msra.mxu0 0.0
    %2992 = vmatprep.subr.mxu0 0.0
    %2993 = vmatpush1.msra.mxu0 0.0
    %2994 = vmatprep.subr.mxu0 0.0
    %2995 = vmatpush1.msra.mxu0 0.0
    %2996 = vmatprep.subr.mxu0 0.0
    %2997 = vmatpush1.msra.mxu0 0.0
    %2998 = vmatprep.subr.mxu0 0.0
    %2999 = vmatpush1.msra.mxu0 0.0
    %3000 = vmatprep.subr.mxu0 0.0
    %3001 = vmatpush1.msra.mxu0 0.0
    %3002 = vmatprep.subr.mxu0 0.0
    %3003 = vmatpush1.msra.mxu0 0.0
    %3004 = vmatprep.subr.mxu0 0.0
    %3005 = vmatpush1.msra.mxu0 0.0
    %3006 = vmatprep.subr.mxu0 0.0
    %3007 = vmatpush1.msra.mxu0 0.0
    %3008 = vmatprep.subr.mxu0 0.0
    %3009 = vmatpush1.msra.mxu0 0.0
    %3010 = vmatprep.subr.mxu0 0.0
    %3011 = vmatpush1.msra.mxu0 0.0
    %3012 = vmatprep.subr.mxu0 0.0
    %3013 = vmatpush1.msra.mxu0 0.0
    %3014 = vmatprep.subr.mxu0 0.0
    %3015 = vmatpush1.msra.mxu0 0.0
    %3016 = vmatprep.subr.mxu0 0.0
    %3017 = vmatpush1.msra.mxu0 0.0
    %3018 = vmatprep.subr.mxu0 0.0
    %3019 = vmatpush1.msra.mxu0 0.0
    %3020 = vmatprep.subr.mxu0 0.0
    %3021 = vmatpush1.msra.mxu0 0.0
    %3022 = vmatprep.subr.mxu0 0.0
    %3023 = vmatpush1.msra.mxu0 0.0
    %3024 = vmatprep.subr.mxu0 0.0
    %3025 = vmatpush1.msra.mxu0 0.0
    %3026 = vmatprep.subr.mxu0 0.0
    %3027 = vmatpush1.msra.mxu0 0.0
    %3028 = vmatprep.subr.mxu0 0.0
    %3029 = vmatpush1.msra.mxu0 0.0
    %3030 = vmatprep.subr.mxu0 0.0
    %3031 = vmatpush1.msra.mxu0 0.0
    %3032 = vmatprep.subr.mxu0 0.0
    %3033 = vmatpush1.msra.mxu0 0.0
    %3034 = vmatprep.subr.mxu0 0.0
    %3035 = vmatpush1.msra.mxu0 0.0
    %3036 = vmatprep.subr.mxu0 0.0
    %3037 = vmatpush1.msra.mxu0 0.0
    %3038 = vmatprep.mubr.f32.mxu0 0.0
    %3039 = vmatmul.mubr.f32.gmra.mrb[0].mxu0 %v2970
    %v3040 = vpop.f32.mrb[0].mxu0
    %v3041 = vadd.f32 %v2963, %v3040
    %v3042 = vpop.f32.mrb[0].mxu0
    %3043 = vmatprep.mubr.f32.mxu0 0.0
    %3044 = vmatmul.mubr.f32.gmra.mrb[0].mxu0 %v2972
    %v3045 = vpop.f32.mrb[0].mxu0
    %v3046 = vadd.f32 %v2963, %v3045
    %v3047 = vpop.f32.mrb[0].mxu0
    %3048 = vdwg.mxu0
    %vm3049 = vcmask 23552
    %3050 = vst.msk [vmem:[%s3] sm:$0xff] %vm3049, %v3041
    %3051 = vst.msk [vmem:[%s3 + $0x8] sm:$0xff] %vm3049, %v3046
    // Predicated region
    $region18: #{tpu_custom_call.1} parent=1 // pred_check
      _
    $region19: #{tpu_custom_call.1} parent=1 // pred_check_branch
      %3053 = sbr.rel (0) target = $region21
    $region20: #{tpu_custom_call.1} parent=1 // pred_region
      _
    $region21: #{tpu_custom_call.1} parent=1 // pred_fallthru
      _
    // Predicated region
    $region22: #{tpu_custom_call.1} parent=1 // pred_check
      _
    $region23: #{tpu_custom_call.1} parent=1 // pred_check_branch
      %3055 = sbr.rel (0) target = $region25
    $region24: #{tpu_custom_call.1} parent=1 // pred_region
      _
    $region25: #{tpu_custom_call.1} parent=1 // pred_fallthru
      _
    %3056 = vsyncpa [#allocation3], 1

</llo_original>
